<compile_context>
chip_gen: v7x
topology: tpu7x:2x2x1
jax: 0.10.0
libtpu: 0.0.40
codegen_flags: <defaults>
</compile_context>

<pallas_src>
import jax
import jax.numpy as jnp
from jax import lax
from jax.experimental import pallas as pl
from jax.experimental.pallas import tpu as pltpu

# ---------------- small, module-consistent configuration --------------------
BATCH = 2
NODE_NUM = 16            # node_num       -> x is [B, 16, 16]
POS_EMBED_DIM = 16       # pos_embed_dim  -> forward_dim = 32
FORWARD_DIM = NODE_NUM + POS_EMBED_DIM
SIZES = (8, 4)           # model_config['sizes'], pooling=[True, True]
NHEAD = 4
HEAD_DIM = FORWARD_DIM // NHEAD
FFN_HIDDEN = 64          # transformer_hidden_size (small)
READOUT_HIDDEN = 64      # DecReadout hidden_dim (small)
FEAT_REDUCTION = 8       # DecReadout feature_reduction_dim (small)
LEAKY_SLOPE = 0.01       # nn.LeakyReLU default negative_slope
LN_EPS = 1e-5
LANES = 128


def _round8(n):
    return ((n + 7) // 8) * 8


# --------------------------- weight-slab layout -------------------------------
# All parameters live in one f32 [W_ROWS, 128] slab -> a single prologue DMA.
def _w_layout():
    off, r = {}, 0

    def add(name, rows):
        nonlocal r
        off[name] = r
        r += rows

    d = FORWARD_DIM
    for li in range(len(SIZES)):
        add(f"L{li}_wqkv", d)                      # [d, 3d]    cols 0:96
        add(f"L{li}_wo", d)                        # [d, d]
        add(f"L{li}_w1", d)                        # [d, FFN]
        add(f"L{li}_w2", FFN_HIDDEN)               # [FFN, d]
        add(f"L{li}_cent", d)                      # [d, K]
        add(f"L{li}_vec", 8)                       # bias / LN rows
    add("RO_drw", d)                               # [d, F]
    add("RO_fc1w", SIZES[-1] * FEAT_REDUCTION)     # [K*F, H]
    add("RO_fc2w", READOUT_HIDDEN)                 # [H, 32]
    add("RO_fc3w", 32)                             # [32, 2]
    add("RO_vec", 8)
    return off, _round8(r)


_W_OFF, _W_ROWS = _w_layout()

# rows inside a transformer layer's "vec" block
_VR_BQKV, _VR_BO, _VR_LN1G, _VR_LN1B, _VR_B1, _VR_B2, _VR_LN2G, _VR_LN2B = range(8)
# rows inside the readout "vec" block
_VR_DRB, _VR_FC1B, _VR_FC2B, _VR_FC3B = range(4)


def _out_layout(bsz):
    """Row offsets of each assignment matrix + logits in the output slab."""
    a_rows, r, n_in = [], 0, NODE_NUM
    for k in SIZES:
        a_rows.append(r)
        r += bsz * n_in
        n_in = k
    logit_row = r
    return a_rows, logit_row, _round8(logit_row + bsz)


# --------------------------- in-kernel helpers -------------------------------
_NN = (((1,), (0,)), ((), ()))     # a @ b
_NT = (((1,), (1,)), ((), ()))     # a @ b.T   (no transpose materialized)
_TN = (((0,), (0,)), ((), ()))     # a.T @ b   (no transpose materialized)


def _mm(a, b, dims=_NN):
    # bf16 operands on the MXU, f32 accumulation.
    return lax.dot_general(a.astype(jnp.bfloat16), b.astype(jnp.bfloat16),
                           dimension_numbers=dims,
                           preferred_element_type=jnp.float32)


def _layernorm(x, g, b):
    mu = jnp.mean(x, axis=-1, keepdims=True)
    var = jnp.mean(jnp.square(x - mu), axis=-1, keepdims=True)
    return (x - mu) * lax.rsqrt(var + LN_EPS) * g + b


def _softmax_attn(s):                      # internal to attention -> approx ok
    s = s - jnp.max(s, axis=-1, keepdims=True)
    e = jnp.exp(s)
    return e * pl.reciprocal(jnp.sum(e, axis=-1, keepdims=True), approx=True)


def _softmax_exact(s):                     # assignments are returned -> exact
    s = s - jnp.max(s, axis=-1, keepdims=True)
    e = jnp.exp(s)
    return e / jnp.sum(e, axis=-1, keepdims=True)


def _leaky(y):
    return jnp.where(y >= 0.0, y, LEAKY_SLOPE * y)


# ------------------------------ fused kernel --------------------------------
def _thc_kernel(x_ref, w_ref, out_ref):
    d = FORWARD_DIM
    bsz = x_ref.shape[0] // NODE_NUM
    a_rows, logit_row, _ = _out_layout(bsz)

    out_ref[...] = jnp.zeros_like(out_ref)            # deterministic padding

    x = x_ref[...]                                     # [bsz*N, d] f32 (folded batch)
    n = NODE_NUM

    for li, k_out in enumerate(SIZES):
        p = f"L{li}_"
        r = _W_OFF[p + "wqkv"]; wqkv = w_ref[r:r + d, 0:3 * d]
        r = _W_OFF[p + "wo"];   wo   = w_ref[r:r + d, 0:d]
        r = _W_OFF[p + "w1"];   w1   = w_ref[r:r + d, 0:FFN_HIDDEN]
        r = _W_OFF[p + "w2"];   w2   = w_ref[r:r + FFN_HIDDEN, 0:d]
        r = _W_OFF[p + "cent"]; cent = w_ref[r:r + d, 0:k_out]
        v = _W_OFF[p + "vec"]
        bqkv  = w_ref[v + _VR_BQKV:v + _VR_BQKV + 1, 0:3 * d]
        bo    = w_ref[v + _VR_BO:v + _VR_BO + 1, 0:d]
        ln1_g = w_ref[v + _VR_LN1G:v + _VR_LN1G + 1, 0:d]
        ln1_b = w_ref[v + _VR_LN1B:v + _VR_LN1B + 1, 0:d]
        b1    = w_ref[v + _VR_B1:v + _VR_B1 + 1, 0:FFN_HIDDEN]
        b2    = w_ref[v + _VR_B2:v + _VR_B2 + 1, 0:d]
        ln2_g = w_ref[v + _VR_LN2G:v + _VR_LN2G + 1, 0:d]
        ln2_b = w_ref[v + _VR_LN2B:v + _VR_LN2B + 1, 0:d]

        # ---- fused QKV projection for the whole folded batch: one matmul.
        qkv = _mm(x, wqkv) + bqkv                       # [bsz*n, 3d]

        # ---- per-(batch, head) attention on static lane slices (in-register).
        ctx_parts = []
        for b in range(bsz):
            r0, r1 = b * n, (b + 1) * n
            heads = []
            for h in range(NHEAD):
                c = h * HEAD_DIM
                qh = qkv[r0:r1, c:c + HEAD_DIM]          # 1/sqrt(dh) baked into Wq
                kh = qkv[r0:r1, d + c:d + c + HEAD_DIM]
                vh = qkv[r0:r1, 2 * d + c:2 * d + c + HEAD_DIM]
                s = _mm(qh, kh, _NT)                     # q @ k^T
                heads.append(_mm(_softmax_attn(s), vh))  # [n, dh]
            ctx_parts.append(jnp.concatenate(heads, axis=1))   # [n, d]
        ctx = jnp.concatenate(ctx_parts, axis=0)         # [bsz*n, d]

        # ---- fused multi-head output projection + post-norm transformer block.
        attn = _mm(ctx, wo) + bo
        x = _layernorm(x + attn, ln1_g, ln1_b)
        ff = jnp.maximum(_mm(x, w1) + b1, 0.0)
        ff = _mm(ff, w2) + b2
        x = _layernorm(x + ff, ln2_g, ln2_b)

        # ---- DEC pooling: A = softmax(x @ C^T), pooled = A^T @ x (per element).
        a = _softmax_exact(_mm(x, cent))                 # [bsz*n, k_out]
        out_ref[a_rows[li]:a_rows[li] + bsz * n, 0:k_out] = a
        pooled = [_mm(a[b * n:(b + 1) * n, :], x[b * n:(b + 1) * n, :], _TN)
                  for b in range(bsz)]
        x = jnp.concatenate(pooled, axis=0)              # [bsz*k_out, d]
        n = k_out

    # ---- DecReadout: dim-reduce -> flatten -> MLP -> 2 logits.
    r = _W_OFF["RO_drw"];  dr_w  = w_ref[r:r + d, 0:FEAT_REDUCTION]
    r = _W_OFF["RO_fc1w"]; fc1_w = w_ref[r:r + SIZES[-1] * FEAT_REDUCTION, 0:READOUT_HIDDEN]
    r = _W_OFF["RO_fc2w"]; fc2_w = w_ref[r:r + READOUT_HIDDEN, 0:32]
    r = _W_OFF["RO_fc3w"]; fc3_w = w_ref[r:r + 32, 0:2]
    v = _W_OFF["RO_vec"]
    dr_b  = w_ref[v + _VR_DRB:v + _VR_DRB + 1, 0:FEAT_REDUCTION]
    fc1_b = w_ref[v + _VR_FC1B:v + _VR_FC1B + 1, 0:READOUT_HIDDEN]
    fc2_b = w_ref[v + _VR_FC2B:v + _VR_FC2B + 1, 0:32]
    fc3_b = w_ref[v + _VR_FC3B:v + _VR_FC3B + 1, 0:2]

    hr = _leaky(_mm(x, dr_w) + dr_b)                     # [bsz*K, F]
    k_last = SIZES[-1]
    rows = []
    for b in range(bsz):                                 # flatten via lane concat
        hb = hr[b * k_last:(b + 1) * k_last, :]
        rows.append(jnp.concatenate([hb[k:k + 1, :] for k in range(k_last)], axis=1))
    hflat = jnp.concatenate(rows, axis=0)                # [bsz, K*F]
    y = _leaky(_mm(hflat, fc1_w) + fc1_b)                # one 32-deep matmul
    y = _leaky(_mm(y, fc2_w) + fc2_b)
    y = _mm(y, fc3_w) + fc3_b                            # [bsz, 2]
    out_ref[logit_row:logit_row + bsz, 0:2] = y


# ------------------------------- wrapper -------------------------------------
def thc_forward(params, x):
    bsz = x.shape[0]
    # pos_encoding == 'identity': concat learned node-identity embedding.
    pos = jnp.broadcast_to(params["node_identity"][None],
                           (bsz, NODE_NUM, POS_EMBED_DIM))
    x_cat = jnp.concatenate([x, pos], axis=-1).reshape(bsz * NODE_NUM, FORWARD_DIM)

    a_rows, logit_row, out_rows = _out_layout(bsz)
    out_slab = pl.pallas_call(
        _thc_kernel,
        out_shape=jax.ShapeDtypeStruct((out_rows, LANES), jnp.float32),
        in_specs=[pl.BlockSpec(memory_space=pltpu.MemorySpace.VMEM),
                  pl.BlockSpec(memory_space=pltpu.MemorySpace.VMEM)],
        out_specs=pl.BlockSpec(memory_space=pltpu.MemorySpace.VMEM),
    )(x_cat, params["slab"])

    assignments, n_in = [], NODE_NUM
    for li, k in enumerate(SIZES):
        blk = out_slab[a_rows[li]:a_rows[li] + bsz * n_in, 0:k]
        assignments.append(blk.reshape(bsz, n_in, k))
        n_in = k
    logits = out_slab[logit_row:logit_row + bsz, 0:2]
    return logits, assignments


# ------------------------------ parameter init -------------------------------
def init_params(key):
    keys = jax.random.split(key, 32)
    kit = iter(keys)
    d = FORWARD_DIM

    def dense(din, dout):
        w = jax.random.normal(next(kit), (din, dout), jnp.float32) / jnp.sqrt(float(din))
        b = jnp.zeros((dout,), jnp.float32)
        return w, b

    slab = jnp.zeros((_W_ROWS, LANES), jnp.float32)

    def put(row, arr):
        nonlocal slab
        slab = slab.at[row:row + arr.shape[0], 0:arr.shape[1]].set(arr)

    params = {}
    # nn.init.kaiming_normal_(node_identity): std = sqrt(2 / fan_in)
    params["node_identity"] = (
        jax.random.normal(next(kit), (NODE_NUM, POS_EMBED_DIM), jnp.float32)
        * jnp.sqrt(2.0 / POS_EMBED_DIM))

    scale = 1.0 / jnp.sqrt(float(HEAD_DIM))
    for li, k_out in enumerate(SIZES):
        p = f"L{li}_"
        wq, bq = dense(d, d)
        wk, bk = dense(d, d)
        wv, bv = dense(d, d)
        # packed QKV, 1/sqrt(head_dim) baked into the Q projection.
        wqkv = jnp.concatenate([wq * scale, wk, wv], axis=1)            # [d, 3d]
        bqkv = jnp.concatenate([bq * scale, bk, bv], axis=0)[None, :]   # [1, 3d]
        wo, bo = dense(d, d)
        w1, b1 = dense(d, FFN_HIDDEN)
        w2, b2 = dense(FFN_HIDDEN, d)
        # orthogonal cluster centers (model_config['orthogonal']=True), stored C^T.
        q_, _ = jnp.linalg.qr(jax.random.normal(next(kit), (d, k_out), jnp.float32))
        put(_W_OFF[p + "wqkv"], wqkv)
        put(_W_OFF[p + "wo"], wo)
        put(_W_OFF[p + "w1"], w1)
        put(_W_OFF[p + "w2"], w2)
        put(_W_OFF[p + "cent"], q_)
        v = _W_OFF[p + "vec"]
        put(v + _VR_BQKV, bqkv)
        put(v + _VR_BO, bo[None, :])
        put(v + _VR_LN1G, jnp.ones((1, d), jnp.float32))
        put(v + _VR_B1, b1[None, :])
        put(v + _VR_B2, b2[None, :])
        put(v + _VR_LN2G, jnp.ones((1, d), jnp.float32))
        # LN betas stay zero (slab is zero-initialized).

    dr_w, dr_b = dense(d, FEAT_REDUCTION)
    fc1_w, fc1_b = dense(SIZES[-1] * FEAT_REDUCTION, READOUT_HIDDEN)  # rows = k*F+f
    fc2_w, fc2_b = dense(READOUT_HIDDEN, 32)
    fc3_w, fc3_b = dense(32, 2)
    put(_W_OFF["RO_drw"], dr_w)
    put(_W_OFF["RO_fc1w"], fc1_w)
    put(_W_OFF["RO_fc2w"], fc2_w)
    put(_W_OFF["RO_fc3w"], fc3_w)
    v = _W_OFF["RO_vec"]
    put(v + _VR_DRB, dr_b[None, :])
    put(v + _VR_FC1B, fc1_b[None, :])
    put(v + _VR_FC2B, fc2_b[None, :])
    put(v + _VR_FC3B, fc3_b[None, :])

    params["slab"] = slab
    return params


# ------------------------------------ main ------------------------------------
if __name__ == "__main__":
    key = jax.random.PRNGKey(0)
    pkey, xkey = jax.random.split(key)
    params = init_params(pkey)
    x = jax.random.normal(xkey, (BATCH, NODE_NUM, NODE_NUM), jnp.float32)

    fwd = jax.jit(thc_forward)
    out, assignments = fwd(params, x)
    jax.block_until_ready(out)
    for a in assignments:
        jax.block_until_ready(a)

    assert out.shape == (BATCH, 2)
    assert assignments[0].shape == (BATCH, NODE_NUM, SIZES[0])
    assert assignments[1].shape == (BATCH, SIZES[0], SIZES[1])
    assert bool(jnp.all(jnp.isfinite(out)))
    print("KERNEL_OK")
</pallas_src>

<mosaic_0001>
module attributes {stable_mosaic.version = 11 : i64} {
  func.func @_thc_kernel(%arg0: memref<32x32xf32, #tpu.memory_space<vmem>>, %arg1: memref<568x128xf32, #tpu.memory_space<vmem>>, %arg2: memref<56x128xf32, #tpu.memory_space<vmem>>) attributes {dimension_semantics = [], scalar_prefetch = 0 : i64, scratch_operands = 0 : i64, tpu.core_type = #tpu.core_type<tc>} {
    %cst = arith.constant 0.000000e+00 : f32
    %0 = vector.broadcast %cst : f32 to vector<56x128xf32>
    %c0 = arith.constant 0 : index
    %c0_0 = arith.constant 0 : index
    %1 = vector.load %arg2[%c0, %c0_0] : memref<56x128xf32, #tpu.memory_space<vmem>>, vector<56x128xf32>
    tpu.vector_store %arg2[%c0, %c0_0], %0 {strides = array<i32>} : memref<56x128xf32, #tpu.memory_space<vmem>>, vector<56x128xf32>,
    %c0_1 = arith.constant 0 : index
    %c0_2 = arith.constant 0 : index
    %2 = vector.load %arg0[%c0_1, %c0_2] : memref<32x32xf32, #tpu.memory_space<vmem>>, vector<32x32xf32>
    %c0_3 = arith.constant 0 : index
    %c0_4 = arith.constant 0 : index
    %3 = vector.load %arg1[%c0_3, %c0_4] : memref<568x128xf32, #tpu.memory_space<vmem>>, vector<32x96xf32>
    %c32 = arith.constant 32 : index
    %c0_5 = arith.constant 0 : index
    %4 = vector.load %arg1[%c32, %c0_5] : memref<568x128xf32, #tpu.memory_space<vmem>>, vector<32x32xf32>
    %c64 = arith.constant 64 : index
    %c0_6 = arith.constant 0 : index
    %5 = vector.load %arg1[%c64, %c0_6] : memref<568x128xf32, #tpu.memory_space<vmem>>, vector<32x64xf32>
    %c96 = arith.constant 96 : index
    %c0_7 = arith.constant 0 : index
    %6 = vector.load %arg1[%c96, %c0_7] : memref<568x128xf32, #tpu.memory_space<vmem>>, vector<64x32xf32>
    %c160 = arith.constant 160 : index
    %c0_8 = arith.constant 0 : index
    %7 = vector.load %arg1[%c160, %c0_8] : memref<568x128xf32, #tpu.memory_space<vmem>>, vector<32x8xf32>
    %c192 = arith.constant 192 : index
    %c0_9 = arith.constant 0 : index
    %8 = vector.load %arg1[%c192, %c0_9] : memref<568x128xf32, #tpu.memory_space<vmem>>, vector<1x96xf32>
    %c193 = arith.constant 193 : index
    %c0_10 = arith.constant 0 : index
    %9 = vector.load %arg1[%c193, %c0_10] : memref<568x128xf32, #tpu.memory_space<vmem>>, vector<1x32xf32>
    %c194 = arith.constant 194 : index
    %c0_11 = arith.constant 0 : index
    %10 = vector.load %arg1[%c194, %c0_11] : memref<568x128xf32, #tpu.memory_space<vmem>>, vector<1x32xf32>
    %c195 = arith.constant 195 : index
    %c0_12 = arith.constant 0 : index
    %11 = vector.load %arg1[%c195, %c0_12] : memref<568x128xf32, #tpu.memory_space<vmem>>, vector<1x32xf32>
    %c196 = arith.constant 196 : index
    %c0_13 = arith.constant 0 : index
    %12 = vector.load %arg1[%c196, %c0_13] : memref<568x128xf32, #tpu.memory_space<vmem>>, vector<1x64xf32>
    %c197 = arith.constant 197 : index
    %c0_14 = arith.constant 0 : index
    %13 = vector.load %arg1[%c197, %c0_14] : memref<568x128xf32, #tpu.memory_space<vmem>>, vector<1x32xf32>
    %c198 = arith.constant 198 : index
    %c0_15 = arith.constant 0 : index
    %14 = vector.load %arg1[%c198, %c0_15] : memref<568x128xf32, #tpu.memory_space<vmem>>, vector<1x32xf32>
    %c199 = arith.constant 199 : index
    %c0_16 = arith.constant 0 : index
    %15 = vector.load %arg1[%c199, %c0_16] : memref<568x128xf32, #tpu.memory_space<vmem>>, vector<1x32xf32>
    %16 = arith.truncf %2 : vector<32x32xf32> to vector<32x32xbf16>
    %17 = arith.truncf %3 : vector<32x96xf32> to vector<32x96xbf16>
    %cst_17 = arith.constant dense<0.000000e+00> : vector<32x96xf32>
    %18 = tpu.matmul %16, %17, %cst_17 {dimension_numbers = #tpu.dot_dimension_numbers<[1], [0], [0], [1], [0, 0, 1, 1], [], []>} : vector<32x32xbf16>, vector<32x96xbf16>, vector<32x96xf32> -> vector<32x96xf32>
    %19 = vector.broadcast %8 : vector<1x96xf32> to vector<32x96xf32>
    %20 = arith.addf %18, %19 : vector<32x96xf32>
    %21 = vector.extract_strided_slice %20 {offsets = [0, 0], sizes = [16, 8], strides = [1, 1]} : vector<32x96xf32> to vector<16x8xf32>
    %22 = vector.extract_strided_slice %20 {offsets = [0, 32], sizes = [16, 8], strides = [1, 1]} : vector<32x96xf32> to vector<16x8xf32>
    %23 = vector.extract_strided_slice %20 {offsets = [0, 64], sizes = [16, 8], strides = [1, 1]} : vector<32x96xf32> to vector<16x8xf32>
    %24 = arith.truncf %21 : vector<16x8xf32> to vector<16x8xbf16>
    %25 = arith.truncf %22 : vector<16x8xf32> to vector<16x8xbf16>
    %cst_18 = arith.constant dense<0.000000e+00> : vector<16x16xf32>
    %26 = tpu.matmul %24, %25, %cst_18 {dimension_numbers = #tpu.dot_dimension_numbers<[1], [1], [0], [0], [0, 0, 1, 0], [], []>} : vector<16x8xbf16>, vector<16x8xbf16>, vector<16x16xf32> -> vector<16x16xf32>
    %cst_19 = arith.constant dense<0xFF800000> : vector<16xf32>
    %27 = vector.multi_reduction <maximumf>, %26, %cst_19 [1] : vector<16x16xf32> to vector<16xf32>
    %28 = vector.shape_cast %27 : vector<16xf32> to vector<16x1xf32>
    %29 = vector.broadcast %28 : vector<16x1xf32> to vector<16x16xf32>
    %30 = arith.subf %26, %29 : vector<16x16xf32>
    %31 = math.exp %30 : vector<16x16xf32>
    %cst_20 = arith.constant dense<0.000000e+00> : vector<16xf32>
    %32 = vector.multi_reduction <add>, %31, %cst_20 [1] : vector<16x16xf32> to vector<16xf32>
    %33 = vector.shape_cast %32 : vector<16xf32> to vector<16x1xf32>
    %34 = tpu.reciprocal %33 {approx = true} : vector<16x1xf32> -> vector<16x1xf32>
    %35 = vector.broadcast %34 : vector<16x1xf32> to vector<16x16xf32>
    %36 = arith.mulf %31, %35 : vector<16x16xf32>
    %37 = arith.truncf %36 : vector<16x16xf32> to vector<16x16xbf16>
    %38 = arith.truncf %23 : vector<16x8xf32> to vector<16x8xbf16>
    %cst_21 = arith.constant dense<0.000000e+00> : vector<16x8xf32>
    %39 = tpu.matmul %37, %38, %cst_21 {dimension_numbers = #tpu.dot_dimension_numbers<[1], [0], [0], [1], [0, 0, 1, 1], [], []>} : vector<16x16xbf16>, vector<16x8xbf16>, vector<16x8xf32> -> vector<16x8xf32>
    %40 = vector.extract_strided_slice %20 {offsets = [0, 8], sizes = [16, 8], strides = [1, 1]} : vector<32x96xf32> to vector<16x8xf32>
    %41 = vector.extract_strided_slice %20 {offsets = [0, 40], sizes = [16, 8], strides = [1, 1]} : vector<32x96xf32> to vector<16x8xf32>
    %42 = vector.extract_strided_slice %20 {offsets = [0, 72], sizes = [16, 8], strides = [1, 1]} : vector<32x96xf32> to vector<16x8xf32>
    %43 = arith.truncf %40 : vector<16x8xf32> to vector<16x8xbf16>
    %44 = arith.truncf %41 : vector<16x8xf32> to vector<16x8xbf16>
    %cst_22 = arith.constant dense<0.000000e+00> : vector<16x16xf32>
    %45 = tpu.matmul %43, %44, %cst_22 {dimension_numbers = #tpu.dot_dimension_numbers<[1], [1], [0], [0], [0, 0, 1, 0], [], []>} : vector<16x8xbf16>, vector<16x8xbf16>, vector<16x16xf32> -> vector<16x16xf32>
    %cst_23 = arith.constant dense<0xFF800000> : vector<16xf32>
    %46 = vector.multi_reduction <maximumf>, %45, %cst_23 [1] : vector<16x16xf32> to vector<16xf32>
    %47 = vector.shape_cast %46 : vector<16xf32> to vector<16x1xf32>
    %48 = vector.broadcast %47 : vector<16x1xf32> to vector<16x16xf32>
    %49 = arith.subf %45, %48 : vector<16x16xf32>
    %50 = math.exp %49 : vector<16x16xf32>
    %cst_24 = arith.constant dense<0.000000e+00> : vector<16xf32>
    %51 = vector.multi_reduction <add>, %50, %cst_24 [1] : vector<16x16xf32> to vector<16xf32>
    %52 = vector.shape_cast %51 : vector<16xf32> to vector<16x1xf32>
    %53 = tpu.reciprocal %52 {approx = true} : vector<16x1xf32> -> vector<16x1xf32>
    %54 = vector.broadcast %53 : vector<16x1xf32> to vector<16x16xf32>
    %55 = arith.mulf %50, %54 : vector<16x16xf32>
    %56 = arith.truncf %55 : vector<16x16xf32> to vector<16x16xbf16>
    %57 = arith.truncf %42 : vector<16x8xf32> to vector<16x8xbf16>
    %cst_25 = arith.constant dense<0.000000e+00> : vector<16x8xf32>
    %58 = tpu.matmul %56, %57, %cst_25 {dimension_numbers = #tpu.dot_dimension_numbers<[1], [0], [0], [1], [0, 0, 1, 1], [], []>} : vector<16x16xbf16>, vector<16x8xbf16>, vector<16x8xf32> -> vector<16x8xf32>
    %59 = vector.extract_strided_slice %20 {offsets = [0, 16], sizes = [16, 8], strides = [1, 1]} : vector<32x96xf32> to vector<16x8xf32>
    %60 = vector.extract_strided_slice %20 {offsets = [0, 48], sizes = [16, 8], strides = [1, 1]} : vector<32x96xf32> to vector<16x8xf32>
    %61 = vector.extract_strided_slice %20 {offsets = [0, 80], sizes = [16, 8], strides = [1, 1]} : vector<32x96xf32> to vector<16x8xf32>
    %62 = arith.truncf %59 : vector<16x8xf32> to vector<16x8xbf16>
    %63 = arith.truncf %60 : vector<16x8xf32> to vector<16x8xbf16>
    %cst_26 = arith.constant dense<0.000000e+00> : vector<16x16xf32>
    %64 = tpu.matmul %62, %63, %cst_26 {dimension_numbers = #tpu.dot_dimension_numbers<[1], [1], [0], [0], [0, 0, 1, 0], [], []>} : vector<16x8xbf16>, vector<16x8xbf16>, vector<16x16xf32> -> vector<16x16xf32>
    %cst_27 = arith.constant dense<0xFF800000> : vector<16xf32>
    %65 = vector.multi_reduction <maximumf>, %64, %cst_27 [1] : vector<16x16xf32> to vector<16xf32>
    %66 = vector.shape_cast %65 : vector<16xf32> to vector<16x1xf32>
    %67 = vector.broadcast %66 : vector<16x1xf32> to vector<16x16xf32>
    %68 = arith.subf %64, %67 : vector<16x16xf32>
    %69 = math.exp %68 : vector<16x16xf32>
    %cst_28 = arith.constant dense<0.000000e+00> : vector<16xf32>
    %70 = vector.multi_reduction <add>, %69, %cst_28 [1] : vector<16x16xf32> to vector<16xf32>
    %71 = vector.shape_cast %70 : vector<16xf32> to vector<16x1xf32>
    %72 = tpu.reciprocal %71 {approx = true} : vector<16x1xf32> -> vector<16x1xf32>
    %73 = vector.broadcast %72 : vector<16x1xf32> to vector<16x16xf32>
    %74 = arith.mulf %69, %73 : vector<16x16xf32>
    %75 = arith.truncf %74 : vector<16x16xf32> to vector<16x16xbf16>
    %76 = arith.truncf %61 : vector<16x8xf32> to vector<16x8xbf16>
    %cst_29 = arith.constant dense<0.000000e+00> : vector<16x8xf32>
    %77 = tpu.matmul %75, %76, %cst_29 {dimension_numbers = #tpu.dot_dimension_numbers<[1], [0], [0], [1], [0, 0, 1, 1], [], []>} : vector<16x16xbf16>, vector<16x8xbf16>, vector<16x8xf32> -> vector<16x8xf32>
    %78 = vector.extract_strided_slice %20 {offsets = [0, 24], sizes = [16, 8], strides = [1, 1]} : vector<32x96xf32> to vector<16x8xf32>
    %79 = vector.extract_strided_slice %20 {offsets = [0, 56], sizes = [16, 8], strides = [1, 1]} : vector<32x96xf32> to vector<16x8xf32>
    %80 = vector.extract_strided_slice %20 {offsets = [0, 88], sizes = [16, 8], strides = [1, 1]} : vector<32x96xf32> to vector<16x8xf32>
    %81 = arith.truncf %78 : vector<16x8xf32> to vector<16x8xbf16>
    %82 = arith.truncf %79 : vector<16x8xf32> to vector<16x8xbf16>
    %cst_30 = arith.constant dense<0.000000e+00> : vector<16x16xf32>
    %83 = tpu.matmul %81, %82, %cst_30 {dimension_numbers = #tpu.dot_dimension_numbers<[1], [1], [0], [0], [0, 0, 1, 0], [], []>} : vector<16x8xbf16>, vector<16x8xbf16>, vector<16x16xf32> -> vector<16x16xf32>
    %cst_31 = arith.constant dense<0xFF800000> : vector<16xf32>
    %84 = vector.multi_reduction <maximumf>, %83, %cst_31 [1] : vector<16x16xf32> to vector<16xf32>
    %85 = vector.shape_cast %84 : vector<16xf32> to vector<16x1xf32>
    %86 = vector.broadcast %85 : vector<16x1xf32> to vector<16x16xf32>
    %87 = arith.subf %83, %86 : vector<16x16xf32>
    %88 = math.exp %87 : vector<16x16xf32>
    %cst_32 = arith.constant dense<0.000000e+00> : vector<16xf32>
    %89 = vector.multi_reduction <add>, %88, %cst_32 [1] : vector<16x16xf32> to vector<16xf32>
    %90 = vector.shape_cast %89 : vector<16xf32> to vector<16x1xf32>
    %91 = tpu.reciprocal %90 {approx = true} : vector<16x1xf32> -> vector<16x1xf32>
    %92 = vector.broadcast %91 : vector<16x1xf32> to vector<16x16xf32>
    %93 = arith.mulf %88, %92 : vector<16x16xf32>
    %94 = arith.truncf %93 : vector<16x16xf32> to vector<16x16xbf16>
    %95 = arith.truncf %80 : vector<16x8xf32> to vector<16x8xbf16>
    %cst_33 = arith.constant dense<0.000000e+00> : vector<16x8xf32>
    %96 = tpu.matmul %94, %95, %cst_33 {dimension_numbers = #tpu.dot_dimension_numbers<[1], [0], [0], [1], [0, 0, 1, 1], [], []>} : vector<16x16xbf16>, vector<16x8xbf16>, vector<16x8xf32> -> vector<16x8xf32>
    %97 = tpu.concatenate %39, %58, %77, %96 in 1 : vector<16x8xf32>, vector<16x8xf32>, vector<16x8xf32>, vector<16x8xf32> -> vector<16x32xf32>
    %98 = vector.extract_strided_slice %20 {offsets = [16, 0], sizes = [16, 8], strides = [1, 1]} : vector<32x96xf32> to vector<16x8xf32>
    %99 = vector.extract_strided_slice %20 {offsets = [16, 32], sizes = [16, 8], strides = [1, 1]} : vector<32x96xf32> to vector<16x8xf32>
    %100 = vector.extract_strided_slice %20 {offsets = [16, 64], sizes = [16, 8], strides = [1, 1]} : vector<32x96xf32> to vector<16x8xf32>
    %101 = arith.truncf %98 : vector<16x8xf32> to vector<16x8xbf16>
    %102 = arith.truncf %99 : vector<16x8xf32> to vector<16x8xbf16>
    %cst_34 = arith.constant dense<0.000000e+00> : vector<16x16xf32>
    %103 = tpu.matmul %101, %102, %cst_34 {dimension_numbers = #tpu.dot_dimension_numbers<[1], [1], [0], [0], [0, 0, 1, 0], [], []>} : vector<16x8xbf16>, vector<16x8xbf16>, vector<16x16xf32> -> vector<16x16xf32>
    %cst_35 = arith.constant dense<0xFF800000> : vector<16xf32>
    %104 = vector.multi_reduction <maximumf>, %103, %cst_35 [1] : vector<16x16xf32> to vector<16xf32>
    %105 = vector.shape_cast %104 : vector<16xf32> to vector<16x1xf32>
    %106 = vector.broadcast %105 : vector<16x1xf32> to vector<16x16xf32>
    %107 = arith.subf %103, %106 : vector<16x16xf32>
    %108 = math.exp %107 : vector<16x16xf32>
    %cst_36 = arith.constant dense<0.000000e+00> : vector<16xf32>
    %109 = vector.multi_reduction <add>, %108, %cst_36 [1] : vector<16x16xf32> to vector<16xf32>
    %110 = vector.shape_cast %109 : vector<16xf32> to vector<16x1xf32>
    %111 = tpu.reciprocal %110 {approx = true} : vector<16x1xf32> -> vector<16x1xf32>
    %112 = vector.broadcast %111 : vector<16x1xf32> to vector<16x16xf32>
    %113 = arith.mulf %108, %112 : vector<16x16xf32>
    %114 = arith.truncf %113 : vector<16x16xf32> to vector<16x16xbf16>
    %115 = arith.truncf %100 : vector<16x8xf32> to vector<16x8xbf16>
    %cst_37 = arith.constant dense<0.000000e+00> : vector<16x8xf32>
    %116 = tpu.matmul %114, %115, %cst_37 {dimension_numbers = #tpu.dot_dimension_numbers<[1], [0], [0], [1], [0, 0, 1, 1], [], []>} : vector<16x16xbf16>, vector<16x8xbf16>, vector<16x8xf32> -> vector<16x8xf32>
    %117 = vector.extract_strided_slice %20 {offsets = [16, 8], sizes = [16, 8], strides = [1, 1]} : vector<32x96xf32> to vector<16x8xf32>
    %118 = vector.extract_strided_slice %20 {offsets = [16, 40], sizes = [16, 8], strides = [1, 1]} : vector<32x96xf32> to vector<16x8xf32>
    %119 = vector.extract_strided_slice %20 {offsets = [16, 72], sizes = [16, 8], strides = [1, 1]} : vector<32x96xf32> to vector<16x8xf32>
    %120 = arith.truncf %117 : vector<16x8xf32> to vector<16x8xbf16>
    %121 = arith.truncf %118 : vector<16x8xf32> to vector<16x8xbf16>
    %cst_38 = arith.constant dense<0.000000e+00> : vector<16x16xf32>
    %122 = tpu.matmul %120, %121, %cst_38 {dimension_numbers = #tpu.dot_dimension_numbers<[1], [1], [0], [0], [0, 0, 1, 0], [], []>} : vector<16x8xbf16>, vector<16x8xbf16>, vector<16x16xf32> -> vector<16x16xf32>
    %cst_39 = arith.constant dense<0xFF800000> : vector<16xf32>
    %123 = vector.multi_reduction <maximumf>, %122, %cst_39 [1] : vector<16x16xf32> to vector<16xf32>
    %124 = vector.shape_cast %123 : vector<16xf32> to vector<16x1xf32>
    %125 = vector.broadcast %124 : vector<16x1xf32> to vector<16x16xf32>
    %126 = arith.subf %122, %125 : vector<16x16xf32>
    %127 = math.exp %126 : vector<16x16xf32>
    %cst_40 = arith.constant dense<0.000000e+00> : vector<16xf32>
    %128 = vector.multi_reduction <add>, %127, %cst_40 [1] : vector<16x16xf32> to vector<16xf32>
    %129 = vector.shape_cast %128 : vector<16xf32> to vector<16x1xf32>
    %130 = tpu.reciprocal %129 {approx = true} : vector<16x1xf32> -> vector<16x1xf32>
    %131 = vector.broadcast %130 : vector<16x1xf32> to vector<16x16xf32>
    %132 = arith.mulf %127, %131 : vector<16x16xf32>
    %133 = arith.truncf %132 : vector<16x16xf32> to vector<16x16xbf16>
    %134 = arith.truncf %119 : vector<16x8xf32> to vector<16x8xbf16>
    %cst_41 = arith.constant dense<0.000000e+00> : vector<16x8xf32>
    %135 = tpu.matmul %133, %134, %cst_41 {dimension_numbers = #tpu.dot_dimension_numbers<[1], [0], [0], [1], [0, 0, 1, 1], [], []>} : vector<16x16xbf16>, vector<16x8xbf16>, vector<16x8xf32> -> vector<16x8xf32>
    %136 = vector.extract_strided_slice %20 {offsets = [16, 16], sizes = [16, 8], strides = [1, 1]} : vector<32x96xf32> to vector<16x8xf32>
    %137 = vector.extract_strided_slice %20 {offsets = [16, 48], sizes = [16, 8], strides = [1, 1]} : vector<32x96xf32> to vector<16x8xf32>
    %138 = vector.extract_strided_slice %20 {offsets = [16, 80], sizes = [16, 8], strides = [1, 1]} : vector<32x96xf32> to vector<16x8xf32>
    %139 = arith.truncf %136 : vector<16x8xf32> to vector<16x8xbf16>
    %140 = arith.truncf %137 : vector<16x8xf32> to vector<16x8xbf16>
    %cst_42 = arith.constant dense<0.000000e+00> : vector<16x16xf32>
    %141 = tpu.matmul %139, %140, %cst_42 {dimension_numbers = #tpu.dot_dimension_numbers<[1], [1], [0], [0], [0, 0, 1, 0], [], []>} : vector<16x8xbf16>, vector<16x8xbf16>, vector<16x16xf32> -> vector<16x16xf32>
    %cst_43 = arith.constant dense<0xFF800000> : vector<16xf32>
    %142 = vector.multi_reduction <maximumf>, %141, %cst_43 [1] : vector<16x16xf32> to vector<16xf32>
    %143 = vector.shape_cast %142 : vector<16xf32> to vector<16x1xf32>
    %144 = vector.broadcast %143 : vector<16x1xf32> to vector<16x16xf32>
    %145 = arith.subf %141, %144 : vector<16x16xf32>
    %146 = math.exp %145 : vector<16x16xf32>
    %cst_44 = arith.constant dense<0.000000e+00> : vector<16xf32>
    %147 = vector.multi_reduction <add>, %146, %cst_44 [1] : vector<16x16xf32> to vector<16xf32>
    %148 = vector.shape_cast %147 : vector<16xf32> to vector<16x1xf32>
    %149 = tpu.reciprocal %148 {approx = true} : vector<16x1xf32> -> vector<16x1xf32>
    %150 = vector.broadcast %149 : vector<16x1xf32> to vector<16x16xf32>
    %151 = arith.mulf %146, %150 : vector<16x16xf32>
    %152 = arith.truncf %151 : vector<16x16xf32> to vector<16x16xbf16>
    %153 = arith.truncf %138 : vector<16x8xf32> to vector<16x8xbf16>
    %cst_45 = arith.constant dense<0.000000e+00> : vector<16x8xf32>
    %154 = tpu.matmul %152, %153, %cst_45 {dimension_numbers = #tpu.dot_dimension_numbers<[1], [0], [0], [1], [0, 0, 1, 1], [], []>} : vector<16x16xbf16>, vector<16x8xbf16>, vector<16x8xf32> -> vector<16x8xf32>
    %155 = vector.extract_strided_slice %20 {offsets = [16, 24], sizes = [16, 8], strides = [1, 1]} : vector<32x96xf32> to vector<16x8xf32>
    %156 = vector.extract_strided_slice %20 {offsets = [16, 56], sizes = [16, 8], strides = [1, 1]} : vector<32x96xf32> to vector<16x8xf32>
    %157 = vector.extract_strided_slice %20 {offsets = [16, 88], sizes = [16, 8], strides = [1, 1]} : vector<32x96xf32> to vector<16x8xf32>
    %158 = arith.truncf %155 : vector<16x8xf32> to vector<16x8xbf16>
    %159 = arith.truncf %156 : vector<16x8xf32> to vector<16x8xbf16>
    %cst_46 = arith.constant dense<0.000000e+00> : vector<16x16xf32>
    %160 = tpu.matmul %158, %159, %cst_46 {dimension_numbers = #tpu.dot_dimension_numbers<[1], [1], [0], [0], [0, 0, 1, 0], [], []>} : vector<16x8xbf16>, vector<16x8xbf16>, vector<16x16xf32> -> vector<16x16xf32>
    %cst_47 = arith.constant dense<0xFF800000> : vector<16xf32>
    %161 = vector.multi_reduction <maximumf>, %160, %cst_47 [1] : vector<16x16xf32> to vector<16xf32>
    %162 = vector.shape_cast %161 : vector<16xf32> to vector<16x1xf32>
    %163 = vector.broadcast %162 : vector<16x1xf32> to vector<16x16xf32>
    %164 = arith.subf %160, %163 : vector<16x16xf32>
    %165 = math.exp %164 : vector<16x16xf32>
    %cst_48 = arith.constant dense<0.000000e+00> : vector<16xf32>
    %166 = vector.multi_reduction <add>, %165, %cst_48 [1] : vector<16x16xf32> to vector<16xf32>
    %167 = vector.shape_cast %166 : vector<16xf32> to vector<16x1xf32>
    %168 = tpu.reciprocal %167 {approx = true} : vector<16x1xf32> -> vector<16x1xf32>
    %169 = vector.broadcast %168 : vector<16x1xf32> to vector<16x16xf32>
    %170 = arith.mulf %165, %169 : vector<16x16xf32>
    %171 = arith.truncf %170 : vector<16x16xf32> to vector<16x16xbf16>
    %172 = arith.truncf %157 : vector<16x8xf32> to vector<16x8xbf16>
    %cst_49 = arith.constant dense<0.000000e+00> : vector<16x8xf32>
    %173 = tpu.matmul %171, %172, %cst_49 {dimension_numbers = #tpu.dot_dimension_numbers<[1], [0], [0], [1], [0, 0, 1, 1], [], []>} : vector<16x16xbf16>, vector<16x8xbf16>, vector<16x8xf32> -> vector<16x8xf32>
    %174 = tpu.concatenate %116, %135, %154, %173 in 1 : vector<16x8xf32>, vector<16x8xf32>, vector<16x8xf32>, vector<16x8xf32> -> vector<16x32xf32>
    %175 = tpu.concatenate %97, %174 in 0 : vector<16x32xf32>, vector<16x32xf32> -> vector<32x32xf32>
    %176 = arith.truncf %175 : vector<32x32xf32> to vector<32x32xbf16>
    %177 = arith.truncf %4 : vector<32x32xf32> to vector<32x32xbf16>
    %cst_50 = arith.constant dense<0.000000e+00> : vector<32x32xf32>
    %178 = tpu.matmul %176, %177, %cst_50 {dimension_numbers = #tpu.dot_dimension_numbers<[1], [0], [0], [1], [0, 0, 1, 1], [], []>} : vector<32x32xbf16>, vector<32x32xbf16>, vector<32x32xf32> -> vector<32x32xf32>
    %179 = vector.broadcast %9 : vector<1x32xf32> to vector<32x32xf32>
    %180 = arith.addf %178, %179 : vector<32x32xf32>
    %181 = arith.addf %2, %180 : vector<32x32xf32>
    %cst_51 = arith.constant dense<0.000000e+00> : vector<32xf32>
    %182 = vector.multi_reduction <add>, %181, %cst_51 [1] : vector<32x32xf32> to vector<32xf32>
    %183 = vector.shape_cast %182 : vector<32xf32> to vector<32x1xf32>
    %cst_52 = arith.constant 3.200000e+01 : f32
    %184 = vector.broadcast %cst_52 : f32 to vector<32x1xf32>
    %185 = arith.divf %183, %184 : vector<32x1xf32>
    %186 = vector.broadcast %185 : vector<32x1xf32> to vector<32x32xf32>
    %187 = arith.subf %181, %186 : vector<32x32xf32>
    %188 = arith.mulf %187, %187 : vector<32x32xf32>
    %cst_53 = arith.constant dense<0.000000e+00> : vector<32xf32>
    %189 = vector.multi_reduction <add>, %188, %cst_53 [1] : vector<32x32xf32> to vector<32xf32>
    %190 = vector.shape_cast %189 : vector<32xf32> to vector<32x1xf32>
    %cst_54 = arith.constant 3.200000e+01 : f32
    %191 = vector.broadcast %cst_54 : f32 to vector<32x1xf32>
    %192 = arith.divf %190, %191 : vector<32x1xf32>
    %193 = vector.broadcast %185 : vector<32x1xf32> to vector<32x32xf32>
    %194 = arith.subf %181, %193 : vector<32x32xf32>
    %cst_55 = arith.constant 9.99999974E-6 : f32
    %195 = vector.broadcast %cst_55 : f32 to vector<32x1xf32>
    %196 = arith.addf %192, %195 : vector<32x1xf32>
    %197 = math.rsqrt %196 : vector<32x1xf32>
    %198 = vector.broadcast %197 : vector<32x1xf32> to vector<32x32xf32>
    %199 = arith.mulf %194, %198 : vector<32x32xf32>
    %200 = vector.broadcast %10 : vector<1x32xf32> to vector<32x32xf32>
    %201 = arith.mulf %199, %200 : vector<32x32xf32>
    %202 = vector.broadcast %11 : vector<1x32xf32> to vector<32x32xf32>
    %203 = arith.addf %201, %202 : vector<32x32xf32>
    %204 = arith.truncf %203 : vector<32x32xf32> to vector<32x32xbf16>
    %205 = arith.truncf %5 : vector<32x64xf32> to vector<32x64xbf16>
    %cst_56 = arith.constant dense<0.000000e+00> : vector<32x64xf32>
    %206 = tpu.matmul %204, %205, %cst_56 {dimension_numbers = #tpu.dot_dimension_numbers<[1], [0], [0], [1], [0, 0, 1, 1], [], []>} : vector<32x32xbf16>, vector<32x64xbf16>, vector<32x64xf32> -> vector<32x64xf32>
    %207 = vector.broadcast %12 : vector<1x64xf32> to vector<32x64xf32>
    %208 = arith.addf %206, %207 : vector<32x64xf32>
    %cst_57 = arith.constant 0.000000e+00 : f32
    %209 = vector.broadcast %cst_57 : f32 to vector<32x64xf32>
    %210 = arith.maximumf %208, %209 : vector<32x64xf32>
    %211 = arith.truncf %210 : vector<32x64xf32> to vector<32x64xbf16>
    %212 = arith.truncf %6 : vector<64x32xf32> to vector<64x32xbf16>
    %cst_58 = arith.constant dense<0.000000e+00> : vector<32x32xf32>
    %213 = tpu.matmul %211, %212, %cst_58 {dimension_numbers = #tpu.dot_dimension_numbers<[1], [0], [0], [1], [0, 0, 1, 1], [], []>} : vector<32x64xbf16>, vector<64x32xbf16>, vector<32x32xf32> -> vector<32x32xf32>
    %214 = vector.broadcast %13 : vector<1x32xf32> to vector<32x32xf32>
    %215 = arith.addf %213, %214 : vector<32x32xf32>
    %216 = arith.addf %203, %215 : vector<32x32xf32>
    %cst_59 = arith.constant dense<0.000000e+00> : vector<32xf32>
    %217 = vector.multi_reduction <add>, %216, %cst_59 [1] : vector<32x32xf32> to vector<32xf32>
    %218 = vector.shape_cast %217 : vector<32xf32> to vector<32x1xf32>
    %cst_60 = arith.constant 3.200000e+01 : f32
    %219 = vector.broadcast %cst_60 : f32 to vector<32x1xf32>
    %220 = arith.divf %218, %219 : vector<32x1xf32>
    %221 = vector.broadcast %220 : vector<32x1xf32> to vector<32x32xf32>
    %222 = arith.subf %216, %221 : vector<32x32xf32>
    %223 = arith.mulf %222, %222 : vector<32x32xf32>
    %cst_61 = arith.constant dense<0.000000e+00> : vector<32xf32>
    %224 = vector.multi_reduction <add>, %223, %cst_61 [1] : vector<32x32xf32> to vector<32xf32>
    %225 = vector.shape_cast %224 : vector<32xf32> to vector<32x1xf32>
    %cst_62 = arith.constant 3.200000e+01 : f32
    %226 = vector.broadcast %cst_62 : f32 to vector<32x1xf32>
    %227 = arith.divf %225, %226 : vector<32x1xf32>
    %228 = vector.broadcast %220 : vector<32x1xf32> to vector<32x32xf32>
    %229 = arith.subf %216, %228 : vector<32x32xf32>
    %cst_63 = arith.constant 9.99999974E-6 : f32
    %230 = vector.broadcast %cst_63 : f32 to vector<32x1xf32>
    %231 = arith.addf %227, %230 : vector<32x1xf32>
    %232 = math.rsqrt %231 : vector<32x1xf32>
    %233 = vector.broadcast %232 : vector<32x1xf32> to vector<32x32xf32>
    %234 = arith.mulf %229, %233 : vector<32x32xf32>
    %235 = vector.broadcast %14 : vector<1x32xf32> to vector<32x32xf32>
    %236 = arith.mulf %234, %235 : vector<32x32xf32>
    %237 = vector.broadcast %15 : vector<1x32xf32> to vector<32x32xf32>
    %238 = arith.addf %236, %237 : vector<32x32xf32>
    %239 = arith.truncf %238 : vector<32x32xf32> to vector<32x32xbf16>
    %240 = arith.truncf %7 : vector<32x8xf32> to vector<32x8xbf16>
    %cst_64 = arith.constant dense<0.000000e+00> : vector<32x8xf32>
    %241 = tpu.matmul %239, %240, %cst_64 {dimension_numbers = #tpu.dot_dimension_numbers<[1], [0], [0], [1], [0, 0, 1, 1], [], []>} : vector<32x32xbf16>, vector<32x8xbf16>, vector<32x8xf32> -> vector<32x8xf32>
    %cst_65 = arith.constant dense<0xFF800000> : vector<32xf32>
    %242 = vector.multi_reduction <maximumf>, %241, %cst_65 [1] : vector<32x8xf32> to vector<32xf32>
    %243 = vector.shape_cast %242 : vector<32xf32> to vector<32x1xf32>
    %244 = vector.broadcast %243 : vector<32x1xf32> to vector<32x8xf32>
    %245 = arith.subf %241, %244 : vector<32x8xf32>
    %246 = math.exp %245 : vector<32x8xf32>
    %cst_66 = arith.constant dense<0.000000e+00> : vector<32xf32>
    %247 = vector.multi_reduction <add>, %246, %cst_66 [1] : vector<32x8xf32> to vector<32xf32>
    %248 = vector.shape_cast %247 : vector<32xf32> to vector<32x1xf32>
    %249 = vector.broadcast %248 : vector<32x1xf32> to vector<32x8xf32>
    %250 = arith.divf %246, %249 : vector<32x8xf32>
    %c0_67 = arith.constant 0 : index
    %c0_68 = arith.constant 0 : index
    %251 = vector.load %arg2[%c0_67, %c0_68] : memref<56x128xf32, #tpu.memory_space<vmem>>, vector<32x8xf32>
    tpu.vector_store %arg2[%c0_67, %c0_68], %250 {strides = array<i32>} : memref<56x128xf32, #tpu.memory_space<vmem>>, vector<32x8xf32>,
    %252 = vector.extract_strided_slice %250 {offsets = [0, 0], sizes = [16, 8], strides = [1, 1]} : vector<32x8xf32> to vector<16x8xf32>
    %253 = vector.extract_strided_slice %238 {offsets = [0, 0], sizes = [16, 32], strides = [1, 1]} : vector<32x32xf32> to vector<16x32xf32>
    %254 = arith.truncf %252 : vector<16x8xf32> to vector<16x8xbf16>
    %255 = arith.truncf %253 : vector<16x32xf32> to vector<16x32xbf16>
    %cst_69 = arith.constant dense<0.000000e+00> : vector<8x32xf32>
    %256 = tpu.matmul %254, %255, %cst_69 {dimension_numbers = #tpu.dot_dimension_numbers<[0], [0], [1], [1], [0, 1, 1, 1], [], []>} : vector<16x8xbf16>, vector<16x32xbf16>, vector<8x32xf32> -> vector<8x32xf32>
    %257 = vector.extract_strided_slice %250 {offsets = [16, 0], sizes = [16, 8], strides = [1, 1]} : vector<32x8xf32> to vector<16x8xf32>
    %258 = vector.extract_strided_slice %238 {offsets = [16, 0], sizes = [16, 32], strides = [1, 1]} : vector<32x32xf32> to vector<16x32xf32>
    %259 = arith.truncf %257 : vector<16x8xf32> to vector<16x8xbf16>
    %260 = arith.truncf %258 : vector<16x32xf32> to vector<16x32xbf16>
    %cst_70 = arith.constant dense<0.000000e+00> : vector<8x32xf32>
    %261 = tpu.matmul %259, %260, %cst_70 {dimension_numbers = #tpu.dot_dimension_numbers<[0], [0], [1], [1], [0, 1, 1, 1], [], []>} : vector<16x8xbf16>, vector<16x32xbf16>, vector<8x32xf32> -> vector<8x32xf32>
    %262 = tpu.concatenate %256, %261 in 0 : vector<8x32xf32>, vector<8x32xf32> -> vector<16x32xf32>
    %c200 = arith.constant 200 : index
    %c0_71 = arith.constant 0 : index
    %263 = vector.load %arg1[%c200, %c0_71] : memref<568x128xf32, #tpu.memory_space<vmem>>, vector<32x96xf32>
    %c232 = arith.constant 232 : index
    %c0_72 = arith.constant 0 : index
    %264 = vector.load %arg1[%c232, %c0_72] : memref<568x128xf32, #tpu.memory_space<vmem>>, vector<32x32xf32>
    %c264 = arith.constant 264 : index
    %c0_73 = arith.constant 0 : index
    %265 = vector.load %arg1[%c264, %c0_73] : memref<568x128xf32, #tpu.memory_space<vmem>>, vector<32x64xf32>
    %c296 = arith.constant 296 : index
    %c0_74 = arith.constant 0 : index
    %266 = vector.load %arg1[%c296, %c0_74] : memref<568x128xf32, #tpu.memory_space<vmem>>, vector<64x32xf32>
    %c360 = arith.constant 360 : index
    %c0_75 = arith.constant 0 : index
    %267 = vector.load %arg1[%c360, %c0_75] : memref<568x128xf32, #tpu.memory_space<vmem>>, vector<32x4xf32>
    %c392 = arith.constant 392 : index
    %c0_76 = arith.constant 0 : index
    %268 = vector.load %arg1[%c392, %c0_76] : memref<568x128xf32, #tpu.memory_space<vmem>>, vector<1x96xf32>
    %c393 = arith.constant 393 : index
    %c0_77 = arith.constant 0 : index
    %269 = vector.load %arg1[%c393, %c0_77] : memref<568x128xf32, #tpu.memory_space<vmem>>, vector<1x32xf32>
    %c394 = arith.constant 394 : index
    %c0_78 = arith.constant 0 : index
    %270 = vector.load %arg1[%c394, %c0_78] : memref<568x128xf32, #tpu.memory_space<vmem>>, vector<1x32xf32>
    %c395 = arith.constant 395 : index
    %c0_79 = arith.constant 0 : index
    %271 = vector.load %arg1[%c395, %c0_79] : memref<568x128xf32, #tpu.memory_space<vmem>>, vector<1x32xf32>
    %c396 = arith.constant 396 : index
    %c0_80 = arith.constant 0 : index
    %272 = vector.load %arg1[%c396, %c0_80] : memref<568x128xf32, #tpu.memory_space<vmem>>, vector<1x64xf32>
    %c397 = arith.constant 397 : index
    %c0_81 = arith.constant 0 : index
    %273 = vector.load %arg1[%c397, %c0_81] : memref<568x128xf32, #tpu.memory_space<vmem>>, vector<1x32xf32>
    %c398 = arith.constant 398 : index
    %c0_82 = arith.constant 0 : index
    %274 = vector.load %arg1[%c398, %c0_82] : memref<568x128xf32, #tpu.memory_space<vmem>>, vector<1x32xf32>
    %c399 = arith.constant 399 : index
    %c0_83 = arith.constant 0 : index
    %275 = vector.load %arg1[%c399, %c0_83] : memref<568x128xf32, #tpu.memory_space<vmem>>, vector<1x32xf32>
    %276 = arith.truncf %262 : vector<16x32xf32> to vector<16x32xbf16>
    %277 = arith.truncf %263 : vector<32x96xf32> to vector<32x96xbf16>
    %cst_84 = arith.constant dense<0.000000e+00> : vector<16x96xf32>
    %278 = tpu.matmul %276, %277, %cst_84 {dimension_numbers = #tpu.dot_dimension_numbers<[1], [0], [0], [1], [0, 0, 1, 1], [], []>} : vector<16x32xbf16>, vector<32x96xbf16>, vector<16x96xf32> -> vector<16x96xf32>
    %279 = vector.broadcast %268 : vector<1x96xf32> to vector<16x96xf32>
    %280 = arith.addf %278, %279 : vector<16x96xf32>
    %281 = vector.extract_strided_slice %280 {offsets = [0, 0], sizes = [8, 8], strides = [1, 1]} : vector<16x96xf32> to vector<8x8xf32>
    %282 = vector.extract_strided_slice %280 {offsets = [0, 32], sizes = [8, 8], strides = [1, 1]} : vector<16x96xf32> to vector<8x8xf32>
    %283 = vector.extract_strided_slice %280 {offsets = [0, 64], sizes = [8, 8], strides = [1, 1]} : vector<16x96xf32> to vector<8x8xf32>
    %284 = arith.truncf %281 : vector<8x8xf32> to vector<8x8xbf16>
    %285 = arith.truncf %282 : vector<8x8xf32> to vector<8x8xbf16>
    %cst_85 = arith.constant dense<0.000000e+00> : vector<8x8xf32>
    %286 = tpu.matmul %284, %285, %cst_85 {dimension_numbers = #tpu.dot_dimension_numbers<[1], [1], [0], [0], [0, 0, 1, 0], [], []>} : vector<8x8xbf16>, vector<8x8xbf16>, vector<8x8xf32> -> vector<8x8xf32>
    %cst_86 = arith.constant dense<0xFF800000> : vector<8xf32>
    %287 = vector.multi_reduction <maximumf>, %286, %cst_86 [1] : vector<8x8xf32> to vector<8xf32>
    %288 = vector.shape_cast %287 : vector<8xf32> to vector<8x1xf32>
    %289 = vector.broadcast %288 : vector<8x1xf32> to vector<8x8xf32>
    %290 = arith.subf %286, %289 : vector<8x8xf32>
    %291 = math.exp %290 : vector<8x8xf32>
    %cst_87 = arith.constant dense<0.000000e+00> : vector<8xf32>
    %292 = vector.multi_reduction <add>, %291, %cst_87 [1] : vector<8x8xf32> to vector<8xf32>
    %293 = vector.shape_cast %292 : vector<8xf32> to vector<8x1xf32>
    %294 = tpu.reciprocal %293 {approx = true} : vector<8x1xf32> -> vector<8x1xf32>
    %295 = vector.broadcast %294 : vector<8x1xf32> to vector<8x8xf32>
    %296 = arith.mulf %291, %295 : vector<8x8xf32>
    %297 = arith.truncf %296 : vector<8x8xf32> to vector<8x8xbf16>
    %298 = arith.truncf %283 : vector<8x8xf32> to vector<8x8xbf16>
    %cst_88 = arith.constant dense<0.000000e+00> : vector<8x8xf32>
    %299 = tpu.matmul %297, %298, %cst_88 {dimension_numbers = #tpu.dot_dimension_numbers<[1], [0], [0], [1], [0, 0, 1, 1], [], []>} : vector<8x8xbf16>, vector<8x8xbf16>, vector<8x8xf32> -> vector<8x8xf32>
    %300 = vector.extract_strided_slice %280 {offsets = [0, 8], sizes = [8, 8], strides = [1, 1]} : vector<16x96xf32> to vector<8x8xf32>
    %301 = vector.extract_strided_slice %280 {offsets = [0, 40], sizes = [8, 8], strides = [1, 1]} : vector<16x96xf32> to vector<8x8xf32>
    %302 = vector.extract_strided_slice %280 {offsets = [0, 72], sizes = [8, 8], strides = [1, 1]} : vector<16x96xf32> to vector<8x8xf32>
    %303 = arith.truncf %300 : vector<8x8xf32> to vector<8x8xbf16>
    %304 = arith.truncf %301 : vector<8x8xf32> to vector<8x8xbf16>
    %cst_89 = arith.constant dense<0.000000e+00> : vector<8x8xf32>
    %305 = tpu.matmul %303, %304, %cst_89 {dimension_numbers = #tpu.dot_dimension_numbers<[1], [1], [0], [0], [0, 0, 1, 0], [], []>} : vector<8x8xbf16>, vector<8x8xbf16>, vector<8x8xf32> -> vector<8x8xf32>
    %cst_90 = arith.constant dense<0xFF800000> : vector<8xf32>
    %306 = vector.multi_reduction <maximumf>, %305, %cst_90 [1] : vector<8x8xf32> to vector<8xf32>
    %307 = vector.shape_cast %306 : vector<8xf32> to vector<8x1xf32>
    %308 = vector.broadcast %307 : vector<8x1xf32> to vector<8x8xf32>
    %309 = arith.subf %305, %308 : vector<8x8xf32>
    %310 = math.exp %309 : vector<8x8xf32>
    %cst_91 = arith.constant dense<0.000000e+00> : vector<8xf32>
    %311 = vector.multi_reduction <add>, %310, %cst_91 [1] : vector<8x8xf32> to vector<8xf32>
    %312 = vector.shape_cast %311 : vector<8xf32> to vector<8x1xf32>
    %313 = tpu.reciprocal %312 {approx = true} : vector<8x1xf32> -> vector<8x1xf32>
    %314 = vector.broadcast %313 : vector<8x1xf32> to vector<8x8xf32>
    %315 = arith.mulf %310, %314 : vector<8x8xf32>
    %316 = arith.truncf %315 : vector<8x8xf32> to vector<8x8xbf16>
    %317 = arith.truncf %302 : vector<8x8xf32> to vector<8x8xbf16>
    %cst_92 = arith.constant dense<0.000000e+00> : vector<8x8xf32>
    %318 = tpu.matmul %316, %317, %cst_92 {dimension_numbers = #tpu.dot_dimension_numbers<[1], [0], [0], [1], [0, 0, 1, 1], [], []>} : vector<8x8xbf16>, vector<8x8xbf16>, vector<8x8xf32> -> vector<8x8xf32>
    %319 = vector.extract_strided_slice %280 {offsets = [0, 16], sizes = [8, 8], strides = [1, 1]} : vector<16x96xf32> to vector<8x8xf32>
    %320 = vector.extract_strided_slice %280 {offsets = [0, 48], sizes = [8, 8], strides = [1, 1]} : vector<16x96xf32> to vector<8x8xf32>
    %321 = vector.extract_strided_slice %280 {offsets = [0, 80], sizes = [8, 8], strides = [1, 1]} : vector<16x96xf32> to vector<8x8xf32>
    %322 = arith.truncf %319 : vector<8x8xf32> to vector<8x8xbf16>
    %323 = arith.truncf %320 : vector<8x8xf32> to vector<8x8xbf16>
    %cst_93 = arith.constant dense<0.000000e+00> : vector<8x8xf32>
    %324 = tpu.matmul %322, %323, %cst_93 {dimension_numbers = #tpu.dot_dimension_numbers<[1], [1], [0], [0], [0, 0, 1, 0], [], []>} : vector<8x8xbf16>, vector<8x8xbf16>, vector<8x8xf32> -> vector<8x8xf32>
    %cst_94 = arith.constant dense<0xFF800000> : vector<8xf32>
    %325 = vector.multi_reduction <maximumf>, %324, %cst_94 [1] : vector<8x8xf32> to vector<8xf32>
    %326 = vector.shape_cast %325 : vector<8xf32> to vector<8x1xf32>
    %327 = vector.broadcast %326 : vector<8x1xf32> to vector<8x8xf32>
    %328 = arith.subf %324, %327 : vector<8x8xf32>
    %329 = math.exp %328 : vector<8x8xf32>
    %cst_95 = arith.constant dense<0.000000e+00> : vector<8xf32>
    %330 = vector.multi_reduction <add>, %329, %cst_95 [1] : vector<8x8xf32> to vector<8xf32>
    %331 = vector.shape_cast %330 : vector<8xf32> to vector<8x1xf32>
    %332 = tpu.reciprocal %331 {approx = true} : vector<8x1xf32> -> vector<8x1xf32>
    %333 = vector.broadcast %332 : vector<8x1xf32> to vector<8x8xf32>
    %334 = arith.mulf %329, %333 : vector<8x8xf32>
    %335 = arith.truncf %334 : vector<8x8xf32> to vector<8x8xbf16>
    %336 = arith.truncf %321 : vector<8x8xf32> to vector<8x8xbf16>
    %cst_96 = arith.constant dense<0.000000e+00> : vector<8x8xf32>
    %337 = tpu.matmul %335, %336, %cst_96 {dimension_numbers = #tpu.dot_dimension_numbers<[1], [0], [0], [1], [0, 0, 1, 1], [], []>} : vector<8x8xbf16>, vector<8x8xbf16>, vector<8x8xf32> -> vector<8x8xf32>
    %338 = vector.extract_strided_slice %280 {offsets = [0, 24], sizes = [8, 8], strides = [1, 1]} : vector<16x96xf32> to vector<8x8xf32>
    %339 = vector.extract_strided_slice %280 {offsets = [0, 56], sizes = [8, 8], strides = [1, 1]} : vector<16x96xf32> to vector<8x8xf32>
    %340 = vector.extract_strided_slice %280 {offsets = [0, 88], sizes = [8, 8], strides = [1, 1]} : vector<16x96xf32> to vector<8x8xf32>
    %341 = arith.truncf %338 : vector<8x8xf32> to vector<8x8xbf16>
    %342 = arith.truncf %339 : vector<8x8xf32> to vector<8x8xbf16>
    %cst_97 = arith.constant dense<0.000000e+00> : vector<8x8xf32>
    %343 = tpu.matmul %341, %342, %cst_97 {dimension_numbers = #tpu.dot_dimension_numbers<[1], [1], [0], [0], [0, 0, 1, 0], [], []>} : vector<8x8xbf16>, vector<8x8xbf16>, vector<8x8xf32> -> vector<8x8xf32>
    %cst_98 = arith.constant dense<0xFF800000> : vector<8xf32>
    %344 = vector.multi_reduction <maximumf>, %343, %cst_98 [1] : vector<8x8xf32> to vector<8xf32>
    %345 = vector.shape_cast %344 : vector<8xf32> to vector<8x1xf32>
    %346 = vector.broadcast %345 : vector<8x1xf32> to vector<8x8xf32>
    %347 = arith.subf %343, %346 : vector<8x8xf32>
    %348 = math.exp %347 : vector<8x8xf32>
    %cst_99 = arith.constant dense<0.000000e+00> : vector<8xf32>
    %349 = vector.multi_reduction <add>, %348, %cst_99 [1] : vector<8x8xf32> to vector<8xf32>
    %350 = vector.shape_cast %349 : vector<8xf32> to vector<8x1xf32>
    %351 = tpu.reciprocal %350 {approx = true} : vector<8x1xf32> -> vector<8x1xf32>
    %352 = vector.broadcast %351 : vector<8x1xf32> to vector<8x8xf32>
    %353 = arith.mulf %348, %352 : vector<8x8xf32>
    %354 = arith.truncf %353 : vector<8x8xf32> to vector<8x8xbf16>
    %355 = arith.truncf %340 : vector<8x8xf32> to vector<8x8xbf16>
    %cst_100 = arith.constant dense<0.000000e+00> : vector<8x8xf32>
    %356 = tpu.matmul %354, %355, %cst_100 {dimension_numbers = #tpu.dot_dimension_numbers<[1], [0], [0], [1], [0, 0, 1, 1], [], []>} : vector<8x8xbf16>, vector<8x8xbf16>, vector<8x8xf32> -> vector<8x8xf32>
    %357 = tpu.concatenate %299, %318, %337, %356 in 1 : vector<8x8xf32>, vector<8x8xf32>, vector<8x8xf32>, vector<8x8xf32> -> vector<8x32xf32>
    %358 = vector.extract_strided_slice %280 {offsets = [8, 0], sizes = [8, 8], strides = [1, 1]} : vector<16x96xf32> to vector<8x8xf32>
    %359 = vector.extract_strided_slice %280 {offsets = [8, 32], sizes = [8, 8], strides = [1, 1]} : vector<16x96xf32> to vector<8x8xf32>
    %360 = vector.extract_strided_slice %280 {offsets = [8, 64], sizes = [8, 8], strides = [1, 1]} : vector<16x96xf32> to vector<8x8xf32>
    %361 = arith.truncf %358 : vector<8x8xf32> to vector<8x8xbf16>
    %362 = arith.truncf %359 : vector<8x8xf32> to vector<8x8xbf16>
    %cst_101 = arith.constant dense<0.000000e+00> : vector<8x8xf32>
    %363 = tpu.matmul %361, %362, %cst_101 {dimension_numbers = #tpu.dot_dimension_numbers<[1], [1], [0], [0], [0, 0, 1, 0], [], []>} : vector<8x8xbf16>, vector<8x8xbf16>, vector<8x8xf32> -> vector<8x8xf32>
    %cst_102 = arith.constant dense<0xFF800000> : vector<8xf32>
    %364 = vector.multi_reduction <maximumf>, %363, %cst_102 [1] : vector<8x8xf32> to vector<8xf32>
    %365 = vector.shape_cast %364 : vector<8xf32> to vector<8x1xf32>
    %366 = vector.broadcast %365 : vector<8x1xf32> to vector<8x8xf32>
    %367 = arith.subf %363, %366 : vector<8x8xf32>
    %368 = math.exp %367 : vector<8x8xf32>
    %cst_103 = arith.constant dense<0.000000e+00> : vector<8xf32>
    %369 = vector.multi_reduction <add>, %368, %cst_103 [1] : vector<8x8xf32> to vector<8xf32>
    %370 = vector.shape_cast %369 : vector<8xf32> to vector<8x1xf32>
    %371 = tpu.reciprocal %370 {approx = true} : vector<8x1xf32> -> vector<8x1xf32>
    %372 = vector.broadcast %371 : vector<8x1xf32> to vector<8x8xf32>
    %373 = arith.mulf %368, %372 : vector<8x8xf32>
    %374 = arith.truncf %373 : vector<8x8xf32> to vector<8x8xbf16>
    %375 = arith.truncf %360 : vector<8x8xf32> to vector<8x8xbf16>
    %cst_104 = arith.constant dense<0.000000e+00> : vector<8x8xf32>
    %376 = tpu.matmul %374, %375, %cst_104 {dimension_numbers = #tpu.dot_dimension_numbers<[1], [0], [0], [1], [0, 0, 1, 1], [], []>} : vector<8x8xbf16>, vector<8x8xbf16>, vector<8x8xf32> -> vector<8x8xf32>
    %377 = vector.extract_strided_slice %280 {offsets = [8, 8], sizes = [8, 8], strides = [1, 1]} : vector<16x96xf32> to vector<8x8xf32>
    %378 = vector.extract_strided_slice %280 {offsets = [8, 40], sizes = [8, 8], strides = [1, 1]} : vector<16x96xf32> to vector<8x8xf32>
    %379 = vector.extract_strided_slice %280 {offsets = [8, 72], sizes = [8, 8], strides = [1, 1]} : vector<16x96xf32> to vector<8x8xf32>
    %380 = arith.truncf %377 : vector<8x8xf32> to vector<8x8xbf16>
    %381 = arith.truncf %378 : vector<8x8xf32> to vector<8x8xbf16>
    %cst_105 = arith.constant dense<0.000000e+00> : vector<8x8xf32>
    %382 = tpu.matmul %380, %381, %cst_105 {dimension_numbers = #tpu.dot_dimension_numbers<[1], [1], [0], [0], [0, 0, 1, 0], [], []>} : vector<8x8xbf16>, vector<8x8xbf16>, vector<8x8xf32> -> vector<8x8xf32>
    %cst_106 = arith.constant dense<0xFF800000> : vector<8xf32>
    %383 = vector.multi_reduction <maximumf>, %382, %cst_106 [1] : vector<8x8xf32> to vector<8xf32>
    %384 = vector.shape_cast %383 : vector<8xf32> to vector<8x1xf32>
    %385 = vector.broadcast %384 : vector<8x1xf32> to vector<8x8xf32>
    %386 = arith.subf %382, %385 : vector<8x8xf32>
    %387 = math.exp %386 : vector<8x8xf32>
    %cst_107 = arith.constant dense<0.000000e+00> : vector<8xf32>
    %388 = vector.multi_reduction <add>, %387, %cst_107 [1] : vector<8x8xf32> to vector<8xf32>
    %389 = vector.shape_cast %388 : vector<8xf32> to vector<8x1xf32>
    %390 = tpu.reciprocal %389 {approx = true} : vector<8x1xf32> -> vector<8x1xf32>
    %391 = vector.broadcast %390 : vector<8x1xf32> to vector<8x8xf32>
    %392 = arith.mulf %387, %391 : vector<8x8xf32>
    %393 = arith.truncf %392 : vector<8x8xf32> to vector<8x8xbf16>
    %394 = arith.truncf %379 : vector<8x8xf32> to vector<8x8xbf16>
    %cst_108 = arith.constant dense<0.000000e+00> : vector<8x8xf32>
    %395 = tpu.matmul %393, %394, %cst_108 {dimension_numbers = #tpu.dot_dimension_numbers<[1], [0], [0], [1], [0, 0, 1, 1], [], []>} : vector<8x8xbf16>, vector<8x8xbf16>, vector<8x8xf32> -> vector<8x8xf32>
    %396 = vector.extract_strided_slice %280 {offsets = [8, 16], sizes = [8, 8], strides = [1, 1]} : vector<16x96xf32> to vector<8x8xf32>
    %397 = vector.extract_strided_slice %280 {offsets = [8, 48], sizes = [8, 8], strides = [1, 1]} : vector<16x96xf32> to vector<8x8xf32>
    %398 = vector.extract_strided_slice %280 {offsets = [8, 80], sizes = [8, 8], strides = [1, 1]} : vector<16x96xf32> to vector<8x8xf32>
    %399 = arith.truncf %396 : vector<8x8xf32> to vector<8x8xbf16>
    %400 = arith.truncf %397 : vector<8x8xf32> to vector<8x8xbf16>
    %cst_109 = arith.constant dense<0.000000e+00> : vector<8x8xf32>
    %401 = tpu.matmul %399, %400, %cst_109 {dimension_numbers = #tpu.dot_dimension_numbers<[1], [1], [0], [0], [0, 0, 1, 0], [], []>} : vector<8x8xbf16>, vector<8x8xbf16>, vector<8x8xf32> -> vector<8x8xf32>
    %cst_110 = arith.constant dense<0xFF800000> : vector<8xf32>
    %402 = vector.multi_reduction <maximumf>, %401, %cst_110 [1] : vector<8x8xf32> to vector<8xf32>
    %403 = vector.shape_cast %402 : vector<8xf32> to vector<8x1xf32>
    %404 = vector.broadcast %403 : vector<8x1xf32> to vector<8x8xf32>
    %405 = arith.subf %401, %404 : vector<8x8xf32>
    %406 = math.exp %405 : vector<8x8xf32>
    %cst_111 = arith.constant dense<0.000000e+00> : vector<8xf32>
    %407 = vector.multi_reduction <add>, %406, %cst_111 [1] : vector<8x8xf32> to vector<8xf32>
    %408 = vector.shape_cast %407 : vector<8xf32> to vector<8x1xf32>
    %409 = tpu.reciprocal %408 {approx = true} : vector<8x1xf32> -> vector<8x1xf32>
    %410 = vector.broadcast %409 : vector<8x1xf32> to vector<8x8xf32>
    %411 = arith.mulf %406, %410 : vector<8x8xf32>
    %412 = arith.truncf %411 : vector<8x8xf32> to vector<8x8xbf16>
    %413 = arith.truncf %398 : vector<8x8xf32> to vector<8x8xbf16>
    %cst_112 = arith.constant dense<0.000000e+00> : vector<8x8xf32>
    %414 = tpu.matmul %412, %413, %cst_112 {dimension_numbers = #tpu.dot_dimension_numbers<[1], [0], [0], [1], [0, 0, 1, 1], [], []>} : vector<8x8xbf16>, vector<8x8xbf16>, vector<8x8xf32> -> vector<8x8xf32>
    %415 = vector.extract_strided_slice %280 {offsets = [8, 24], sizes = [8, 8], strides = [1, 1]} : vector<16x96xf32> to vector<8x8xf32>
    %416 = vector.extract_strided_slice %280 {offsets = [8, 56], sizes = [8, 8], strides = [1, 1]} : vector<16x96xf32> to vector<8x8xf32>
    %417 = vector.extract_strided_slice %280 {offsets = [8, 88], sizes = [8, 8], strides = [1, 1]} : vector<16x96xf32> to vector<8x8xf32>
    %418 = arith.truncf %415 : vector<8x8xf32> to vector<8x8xbf16>
    %419 = arith.truncf %416 : vector<8x8xf32> to vector<8x8xbf16>
    %cst_113 = arith.constant dense<0.000000e+00> : vector<8x8xf32>
    %420 = tpu.matmul %418, %419, %cst_113 {dimension_numbers = #tpu.dot_dimension_numbers<[1], [1], [0], [0], [0, 0, 1, 0], [], []>} : vector<8x8xbf16>, vector<8x8xbf16>, vector<8x8xf32> -> vector<8x8xf32>
    %cst_114 = arith.constant dense<0xFF800000> : vector<8xf32>
    %421 = vector.multi_reduction <maximumf>, %420, %cst_114 [1] : vector<8x8xf32> to vector<8xf32>
    %422 = vector.shape_cast %421 : vector<8xf32> to vector<8x1xf32>
    %423 = vector.broadcast %422 : vector<8x1xf32> to vector<8x8xf32>
    %424 = arith.subf %420, %423 : vector<8x8xf32>
    %425 = math.exp %424 : vector<8x8xf32>
    %cst_115 = arith.constant dense<0.000000e+00> : vector<8xf32>
    %426 = vector.multi_reduction <add>, %425, %cst_115 [1] : vector<8x8xf32> to vector<8xf32>
    %427 = vector.shape_cast %426 : vector<8xf32> to vector<8x1xf32>
    %428 = tpu.reciprocal %427 {approx = true} : vector<8x1xf32> -> vector<8x1xf32>
    %429 = vector.broadcast %428 : vector<8x1xf32> to vector<8x8xf32>
    %430 = arith.mulf %425, %429 : vector<8x8xf32>
    %431 = arith.truncf %430 : vector<8x8xf32> to vector<8x8xbf16>
    %432 = arith.truncf %417 : vector<8x8xf32> to vector<8x8xbf16>
    %cst_116 = arith.constant dense<0.000000e+00> : vector<8x8xf32>
    %433 = tpu.matmul %431, %432, %cst_116 {dimension_numbers = #tpu.dot_dimension_numbers<[1], [0], [0], [1], [0, 0, 1, 1], [], []>} : vector<8x8xbf16>, vector<8x8xbf16>, vector<8x8xf32> -> vector<8x8xf32>
    %434 = tpu.concatenate %376, %395, %414, %433 in 1 : vector<8x8xf32>, vector<8x8xf32>, vector<8x8xf32>, vector<8x8xf32> -> vector<8x32xf32>
    %435 = tpu.concatenate %357, %434 in 0 : vector<8x32xf32>, vector<8x32xf32> -> vector<16x32xf32>
    %436 = arith.truncf %435 : vector<16x32xf32> to vector<16x32xbf16>
    %437 = arith.truncf %264 : vector<32x32xf32> to vector<32x32xbf16>
    %cst_117 = arith.constant dense<0.000000e+00> : vector<16x32xf32>
    %438 = tpu.matmul %436, %437, %cst_117 {dimension_numbers = #tpu.dot_dimension_numbers<[1], [0], [0], [1], [0, 0, 1, 1], [], []>} : vector<16x32xbf16>, vector<32x32xbf16>, vector<16x32xf32> -> vector<16x32xf32>
    %439 = vector.broadcast %269 : vector<1x32xf32> to vector<16x32xf32>
    %440 = arith.addf %438, %439 : vector<16x32xf32>
    %441 = arith.addf %262, %440 : vector<16x32xf32>
    %cst_118 = arith.constant dense<0.000000e+00> : vector<16xf32>
    %442 = vector.multi_reduction <add>, %441, %cst_118 [1] : vector<16x32xf32> to vector<16xf32>
    %443 = vector.shape_cast %442 : vector<16xf32> to vector<16x1xf32>
    %cst_119 = arith.constant 3.200000e+01 : f32
    %444 = vector.broadcast %cst_119 : f32 to vector<16x1xf32>
    %445 = arith.divf %443, %444 : vector<16x1xf32>
    %446 = vector.broadcast %445 : vector<16x1xf32> to vector<16x32xf32>
    %447 = arith.subf %441, %446 : vector<16x32xf32>
    %448 = arith.mulf %447, %447 : vector<16x32xf32>
    %cst_120 = arith.constant dense<0.000000e+00> : vector<16xf32>
    %449 = vector.multi_reduction <add>, %448, %cst_120 [1] : vector<16x32xf32> to vector<16xf32>
    %450 = vector.shape_cast %449 : vector<16xf32> to vector<16x1xf32>
    %cst_121 = arith.constant 3.200000e+01 : f32
    %451 = vector.broadcast %cst_121 : f32 to vector<16x1xf32>
    %452 = arith.divf %450, %451 : vector<16x1xf32>
    %453 = vector.broadcast %445 : vector<16x1xf32> to vector<16x32xf32>
    %454 = arith.subf %441, %453 : vector<16x32xf32>
    %cst_122 = arith.constant 9.99999974E-6 : f32
    %455 = vector.broadcast %cst_122 : f32 to vector<16x1xf32>
    %456 = arith.addf %452, %455 : vector<16x1xf32>
    %457 = math.rsqrt %456 : vector<16x1xf32>
    %458 = vector.broadcast %457 : vector<16x1xf32> to vector<16x32xf32>
    %459 = arith.mulf %454, %458 : vector<16x32xf32>
    %460 = vector.broadcast %270 : vector<1x32xf32> to vector<16x32xf32>
    %461 = arith.mulf %459, %460 : vector<16x32xf32>
    %462 = vector.broadcast %271 : vector<1x32xf32> to vector<16x32xf32>
    %463 = arith.addf %461, %462 : vector<16x32xf32>
    %464 = arith.truncf %463 : vector<16x32xf32> to vector<16x32xbf16>
    %465 = arith.truncf %265 : vector<32x64xf32> to vector<32x64xbf16>
    %cst_123 = arith.constant dense<0.000000e+00> : vector<16x64xf32>
    %466 = tpu.matmul %464, %465, %cst_123 {dimension_numbers = #tpu.dot_dimension_numbers<[1], [0], [0], [1], [0, 0, 1, 1], [], []>} : vector<16x32xbf16>, vector<32x64xbf16>, vector<16x64xf32> -> vector<16x64xf32>
    %467 = vector.broadcast %272 : vector<1x64xf32> to vector<16x64xf32>
    %468 = arith.addf %466, %467 : vector<16x64xf32>
    %cst_124 = arith.constant 0.000000e+00 : f32
    %469 = vector.broadcast %cst_124 : f32 to vector<16x64xf32>
    %470 = arith.maximumf %468, %469 : vector<16x64xf32>
    %471 = arith.truncf %470 : vector<16x64xf32> to vector<16x64xbf16>
    %472 = arith.truncf %266 : vector<64x32xf32> to vector<64x32xbf16>
    %cst_125 = arith.constant dense<0.000000e+00> : vector<16x32xf32>
    %473 = tpu.matmul %471, %472, %cst_125 {dimension_numbers = #tpu.dot_dimension_numbers<[1], [0], [0], [1], [0, 0, 1, 1], [], []>} : vector<16x64xbf16>, vector<64x32xbf16>, vector<16x32xf32> -> vector<16x32xf32>
    %474 = vector.broadcast %273 : vector<1x32xf32> to vector<16x32xf32>
    %475 = arith.addf %473, %474 : vector<16x32xf32>
    %476 = arith.addf %463, %475 : vector<16x32xf32>
    %cst_126 = arith.constant dense<0.000000e+00> : vector<16xf32>
    %477 = vector.multi_reduction <add>, %476, %cst_126 [1] : vector<16x32xf32> to vector<16xf32>
    %478 = vector.shape_cast %477 : vector<16xf32> to vector<16x1xf32>
    %cst_127 = arith.constant 3.200000e+01 : f32
    %479 = vector.broadcast %cst_127 : f32 to vector<16x1xf32>
    %480 = arith.divf %478, %479 : vector<16x1xf32>
    %481 = vector.broadcast %480 : vector<16x1xf32> to vector<16x32xf32>
    %482 = arith.subf %476, %481 : vector<16x32xf32>
    %483 = arith.mulf %482, %482 : vector<16x32xf32>
    %cst_128 = arith.constant dense<0.000000e+00> : vector<16xf32>
    %484 = vector.multi_reduction <add>, %483, %cst_128 [1] : vector<16x32xf32> to vector<16xf32>
    %485 = vector.shape_cast %484 : vector<16xf32> to vector<16x1xf32>
    %cst_129 = arith.constant 3.200000e+01 : f32
    %486 = vector.broadcast %cst_129 : f32 to vector<16x1xf32>
    %487 = arith.divf %485, %486 : vector<16x1xf32>
    %488 = vector.broadcast %480 : vector<16x1xf32> to vector<16x32xf32>
    %489 = arith.subf %476, %488 : vector<16x32xf32>
    %cst_130 = arith.constant 9.99999974E-6 : f32
    %490 = vector.broadcast %cst_130 : f32 to vector<16x1xf32>
    %491 = arith.addf %487, %490 : vector<16x1xf32>
    %492 = math.rsqrt %491 : vector<16x1xf32>
    %493 = vector.broadcast %492 : vector<16x1xf32> to vector<16x32xf32>
    %494 = arith.mulf %489, %493 : vector<16x32xf32>
    %495 = vector.broadcast %274 : vector<1x32xf32> to vector<16x32xf32>
    %496 = arith.mulf %494, %495 : vector<16x32xf32>
    %497 = vector.broadcast %275 : vector<1x32xf32> to vector<16x32xf32>
    %498 = arith.addf %496, %497 : vector<16x32xf32>
    %499 = arith.truncf %498 : vector<16x32xf32> to vector<16x32xbf16>
    %500 = arith.truncf %267 : vector<32x4xf32> to vector<32x4xbf16>
    %cst_131 = arith.constant dense<0.000000e+00> : vector<16x4xf32>
    %501 = tpu.matmul %499, %500, %cst_131 {dimension_numbers = #tpu.dot_dimension_numbers<[1], [0], [0], [1], [0, 0, 1, 1], [], []>} : vector<16x32xbf16>, vector<32x4xbf16>, vector<16x4xf32> -> vector<16x4xf32>
    %cst_132 = arith.constant dense<0xFF800000> : vector<16xf32>
    %502 = vector.multi_reduction <maximumf>, %501, %cst_132 [1] : vector<16x4xf32> to vector<16xf32>
    %503 = vector.shape_cast %502 : vector<16xf32> to vector<16x1xf32>
    %504 = vector.broadcast %503 : vector<16x1xf32> to vector<16x4xf32>
    %505 = arith.subf %501, %504 : vector<16x4xf32>
    %506 = math.exp %505 : vector<16x4xf32>
    %cst_133 = arith.constant dense<0.000000e+00> : vector<16xf32>
    %507 = vector.multi_reduction <add>, %506, %cst_133 [1] : vector<16x4xf32> to vector<16xf32>
    %508 = vector.shape_cast %507 : vector<16xf32> to vector<16x1xf32>
    %509 = vector.broadcast %508 : vector<16x1xf32> to vector<16x4xf32>
    %510 = arith.divf %506, %509 : vector<16x4xf32>
    %c32_134 = arith.constant 32 : index
    %c0_135 = arith.constant 0 : index
    %511 = vector.load %arg2[%c32_134, %c0_135] : memref<56x128xf32, #tpu.memory_space<vmem>>, vector<16x4xf32>
    tpu.vector_store %arg2[%c32_134, %c0_135], %510 {strides = array<i32>} : memref<56x128xf32, #tpu.memory_space<vmem>>, vector<16x4xf32>,
    %512 = vector.extract_strided_slice %510 {offsets = [0, 0], sizes = [8, 4], strides = [1, 1]} : vector<16x4xf32> to vector<8x4xf32>
    %513 = vector.extract_strided_slice %498 {offsets = [0, 0], sizes = [8, 32], strides = [1, 1]} : vector<16x32xf32> to vector<8x32xf32>
    %514 = arith.truncf %512 : vector<8x4xf32> to vector<8x4xbf16>
    %515 = arith.truncf %513 : vector<8x32xf32> to vector<8x32xbf16>
    %cst_136 = arith.constant dense<0.000000e+00> : vector<4x32xf32>
    %516 = tpu.matmul %514, %515, %cst_136 {dimension_numbers = #tpu.dot_dimension_numbers<[0], [0], [1], [1], [0, 1, 1, 1], [], []>} : vector<8x4xbf16>, vector<8x32xbf16>, vector<4x32xf32> -> vector<4x32xf32>
    %517 = vector.extract_strided_slice %510 {offsets = [8, 0], sizes = [8, 4], strides = [1, 1]} : vector<16x4xf32> to vector<8x4xf32>
    %518 = vector.extract_strided_slice %498 {offsets = [8, 0], sizes = [8, 32], strides = [1, 1]} : vector<16x32xf32> to vector<8x32xf32>
    %519 = arith.truncf %517 : vector<8x4xf32> to vector<8x4xbf16>
    %520 = arith.truncf %518 : vector<8x32xf32> to vector<8x32xbf16>
    %cst_137 = arith.constant dense<0.000000e+00> : vector<4x32xf32>
    %521 = tpu.matmul %519, %520, %cst_137 {dimension_numbers = #tpu.dot_dimension_numbers<[0], [0], [1], [1], [0, 1, 1, 1], [], []>} : vector<8x4xbf16>, vector<8x32xbf16>, vector<4x32xf32> -> vector<4x32xf32>
    %522 = tpu.concatenate %516, %521 in 0 : vector<4x32xf32>, vector<4x32xf32> -> vector<8x32xf32>
    %c400 = arith.constant 400 : index
    %c0_138 = arith.constant 0 : index
    %523 = vector.load %arg1[%c400, %c0_138] : memref<568x128xf32, #tpu.memory_space<vmem>>, vector<32x8xf32>
    %c432 = arith.constant 432 : index
    %c0_139 = arith.constant 0 : index
    %524 = vector.load %arg1[%c432, %c0_139] : memref<568x128xf32, #tpu.memory_space<vmem>>, vector<32x64xf32>
    %c464 = arith.constant 464 : index
    %c0_140 = arith.constant 0 : index
    %525 = vector.load %arg1[%c464, %c0_140] : memref<568x128xf32, #tpu.memory_space<vmem>>, vector<64x32xf32>
    %c528 = arith.constant 528 : index
    %c0_141 = arith.constant 0 : index
    %526 = vector.load %arg1[%c528, %c0_141] : memref<568x128xf32, #tpu.memory_space<vmem>>, vector<32x2xf32>
    %c560 = arith.constant 560 : index
    %c0_142 = arith.constant 0 : index
    %527 = vector.load %arg1[%c560, %c0_142] : memref<568x128xf32, #tpu.memory_space<vmem>>, vector<1x8xf32>
    %c561 = arith.constant 561 : index
    %c0_143 = arith.constant 0 : index
    %528 = vector.load %arg1[%c561, %c0_143] : memref<568x128xf32, #tpu.memory_space<vmem>>, vector<1x64xf32>
    %c562 = arith.constant 562 : index
    %c0_144 = arith.constant 0 : index
    %529 = vector.load %arg1[%c562, %c0_144] : memref<568x128xf32, #tpu.memory_space<vmem>>, vector<1x32xf32>
    %c563 = arith.constant 563 : index
    %c0_145 = arith.constant 0 : index
    %530 = vector.load %arg1[%c563, %c0_145] : memref<568x128xf32, #tpu.memory_space<vmem>>, vector<1x2xf32>
    %531 = arith.truncf %522 : vector<8x32xf32> to vector<8x32xbf16>
    %532 = arith.truncf %523 : vector<32x8xf32> to vector<32x8xbf16>
    %cst_146 = arith.constant dense<0.000000e+00> : vector<8x8xf32>
    %533 = tpu.matmul %531, %532, %cst_146 {dimension_numbers = #tpu.dot_dimension_numbers<[1], [0], [0], [1], [0, 0, 1, 1], [], []>} : vector<8x32xbf16>, vector<32x8xbf16>, vector<8x8xf32> -> vector<8x8xf32>
    %534 = vector.broadcast %527 : vector<1x8xf32> to vector<8x8xf32>
    %535 = arith.addf %533, %534 : vector<8x8xf32>
    %cst_147 = arith.constant 0.000000e+00 : f32
    %536 = vector.broadcast %cst_147 : f32 to vector<8x8xf32>
    %537 = arith.cmpf oge, %535, %536 : vector<8x8xf32>
    %cst_148 = arith.constant 0.00999999977 : f32
    %538 = vector.broadcast %cst_148 : f32 to vector<8x8xf32>
    %539 = arith.mulf %538, %535 : vector<8x8xf32>
    %540 = arith.select %537, %535, %539 : vector<8x8xi1>, vector<8x8xf32>
    %541 = vector.extract_strided_slice %540 {offsets = [0, 0], sizes = [4, 8], strides = [1, 1]} : vector<8x8xf32> to vector<4x8xf32>
    %542 = vector.extract_strided_slice %541 {offsets = [0, 0], sizes = [1, 8], strides = [1, 1]} : vector<4x8xf32> to vector<1x8xf32>
    %543 = vector.extract_strided_slice %541 {offsets = [1, 0], sizes = [1, 8], strides = [1, 1]} : vector<4x8xf32> to vector<1x8xf32>
    %544 = vector.extract_strided_slice %541 {offsets = [2, 0], sizes = [1, 8], strides = [1, 1]} : vector<4x8xf32> to vector<1x8xf32>
    %545 = vector.extract_strided_slice %541 {offsets = [3, 0], sizes = [1, 8], strides = [1, 1]} : vector<4x8xf32> to vector<1x8xf32>
    %546 = tpu.concatenate %542, %543, %544, %545 in 1 : vector<1x8xf32>, vector<1x8xf32>, vector<1x8xf32>, vector<1x8xf32> -> vector<1x32xf32>
    %547 = vector.extract_strided_slice %540 {offsets = [4, 0], sizes = [4, 8], strides = [1, 1]} : vector<8x8xf32> to vector<4x8xf32>
    %548 = vector.extract_strided_slice %547 {offsets = [0, 0], sizes = [1, 8], strides = [1, 1]} : vector<4x8xf32> to vector<1x8xf32>
    %549 = vector.extract_strided_slice %547 {offsets = [1, 0], sizes = [1, 8], strides = [1, 1]} : vector<4x8xf32> to vector<1x8xf32>
    %550 = vector.extract_strided_slice %547 {offsets = [2, 0], sizes = [1, 8], strides = [1, 1]} : vector<4x8xf32> to vector<1x8xf32>
    %551 = vector.extract_strided_slice %547 {offsets = [3, 0], sizes = [1, 8], strides = [1, 1]} : vector<4x8xf32> to vector<1x8xf32>
    %552 = tpu.concatenate %548, %549, %550, %551 in 1 : vector<1x8xf32>, vector<1x8xf32>, vector<1x8xf32>, vector<1x8xf32> -> vector<1x32xf32>
    %553 = tpu.concatenate %546, %552 in 0 : vector<1x32xf32>, vector<1x32xf32> -> vector<2x32xf32>
    %554 = arith.truncf %553 : vector<2x32xf32> to vector<2x32xbf16>
    %555 = arith.truncf %524 : vector<32x64xf32> to vector<32x64xbf16>
    %cst_149 = arith.constant dense<0.000000e+00> : vector<2x64xf32>
    %556 = tpu.matmul %554, %555, %cst_149 {dimension_numbers = #tpu.dot_dimension_numbers<[1], [0], [0], [1], [0, 0, 1, 1], [], []>} : vector<2x32xbf16>, vector<32x64xbf16>, vector<2x64xf32> -> vector<2x64xf32>
    %557 = vector.broadcast %528 : vector<1x64xf32> to vector<2x64xf32>
    %558 = arith.addf %556, %557 : vector<2x64xf32>
    %cst_150 = arith.constant 0.000000e+00 : f32
    %559 = vector.broadcast %cst_150 : f32 to vector<2x64xf32>
    %560 = arith.cmpf oge, %558, %559 : vector<2x64xf32>
    %cst_151 = arith.constant 0.00999999977 : f32
    %561 = vector.broadcast %cst_151 : f32 to vector<2x64xf32>
    %562 = arith.mulf %561, %558 : vector<2x64xf32>
    %563 = arith.select %560, %558, %562 : vector<2x64xi1>, vector<2x64xf32>
    %564 = arith.truncf %563 : vector<2x64xf32> to vector<2x64xbf16>
    %565 = arith.truncf %525 : vector<64x32xf32> to vector<64x32xbf16>
    %cst_152 = arith.constant dense<0.000000e+00> : vector<2x32xf32>
    %566 = tpu.matmul %564, %565, %cst_152 {dimension_numbers = #tpu.dot_dimension_numbers<[1], [0], [0], [1], [0, 0, 1, 1], [], []>} : vector<2x64xbf16>, vector<64x32xbf16>, vector<2x32xf32> -> vector<2x32xf32>
    %567 = vector.broadcast %529 : vector<1x32xf32> to vector<2x32xf32>
    %568 = arith.addf %566, %567 : vector<2x32xf32>
    %cst_153 = arith.constant 0.000000e+00 : f32
    %569 = vector.broadcast %cst_153 : f32 to vector<2x32xf32>
    %570 = arith.cmpf oge, %568, %569 : vector<2x32xf32>
    %cst_154 = arith.constant 0.00999999977 : f32
    %571 = vector.broadcast %cst_154 : f32 to vector<2x32xf32>
    %572 = arith.mulf %571, %568 : vector<2x32xf32>
    %573 = arith.select %570, %568, %572 : vector<2x32xi1>, vector<2x32xf32>
    %574 = arith.truncf %573 : vector<2x32xf32> to vector<2x32xbf16>
    %575 = arith.truncf %526 : vector<32x2xf32> to vector<32x2xbf16>
    %cst_155 = arith.constant dense<0.000000e+00> : vector<2x2xf32>
    %576 = tpu.matmul %574, %575, %cst_155 {dimension_numbers = #tpu.dot_dimension_numbers<[1], [0], [0], [1], [0, 0, 1, 1], [], []>} : vector<2x32xbf16>, vector<32x2xbf16>, vector<2x2xf32> -> vector<2x2xf32>
    %577 = vector.broadcast %530 : vector<1x2xf32> to vector<2x2xf32>
    %578 = arith.addf %576, %577 : vector<2x2xf32>
    %c48 = arith.constant 48 : index
    %c0_156 = arith.constant 0 : index
    %579 = vector.load %arg2[%c48, %c0_156] : memref<56x128xf32, #tpu.memory_space<vmem>>, vector<2x2xf32>
    tpu.vector_store %arg2[%c48, %c0_156], %578 {strides = array<i32>} : memref<56x128xf32, #tpu.memory_space<vmem>>, vector<2x2xf32>,
    return
  }
}

</mosaic_0001>

<llo_original>
// kernel: thc_forward.1
$region0: #{thc_forward.1}
  #allocation0 [shape = 'u32[]', space=smem, size = 0x4, offset = 0x4, fixed_abs, tag = 'smem constant byte address 0x4 - core index']
  #allocation1 [shape = 'u32[144,128]{1,0:T(1,128)}', space=vmem, size = 0x12000, scoped, tag = 'internal scratch']
  %s0 = inlined_call_operand.vmem [shape: f32[32,32], index: 0, kind: input, shape index: {}]
  %s1 = inlined_call_operand.hbm [shape: f32[568,128], index: 1, kind: input, shape index: {}]
  %s2 = inlined_call_operand.vmem [shape: f32[56,128], index: 2, kind: output, shape index: {}]
  %s3 = sld [smem:[#allocation0]]
  $region22: #{thc_forward.1} parent=0
    _
  %s5 = ssub.s32 1, %s3
  %s6 = scalar_select 0, %s5, %s3
  $region1: #{thc_forward.1} parent=0
    #allocation2 [shape = 'u8[290816]{0}', space=vmem, size = 0x47000, scoped, tag = 'input window, operand 1, single buffered']
    #allocation3 [shape = 's32[1]{0}', space=sflag, size = 0x4, scoped, tag = 'scoped memory for thc_forward.1']
    %7 = vsyncpa [#allocation3], 0
    // Predicated region
    $region2: #{thc_forward.1} parent=1 // pred_check
      _
    $region3: #{thc_forward.1} parent=1 // pred_check_branch
      %9 = sbr.rel (0) target = $region5
    $region4: #{thc_forward.1} parent=1 // pred_region
      _
    $region5: #{thc_forward.1} parent=1 // pred_fallthru
      _
    // Predicated region
    $region6: #{thc_forward.1} parent=1 // pred_check
      _
    $region7: #{thc_forward.1} parent=1 // pred_check_branch
      %11 = sbr.rel (0) target = $region9
    $region8: #{thc_forward.1} parent=1 // pred_region
      %s13 = ssub.s32 9088, 9088
      %14 = vsyncadd [#allocation3], %s13
      %s15 = sshll.u32 [#allocation2], 4
      %s16 = int_to_ptr.vmem [resolvable:$true] %s15
      %21 = dma.hbm_to_vmem [thread:$0]  %s1, 9088, %s16, [#allocation3], 128, 128, 8
    $region9: #{thc_forward.1} parent=1 // pred_fallthru
      _
    // Predicated region
    $region10: #{thc_forward.1} parent=1 // pred_check
      _
    $region11: #{thc_forward.1} parent=1 // pred_check_branch
      %23 = sbr.rel (0) target = $region13
    $region12: #{thc_forward.1} parent=1 // pred_region
      %24 = dma.done [#allocation3], 9088
    $region13: #{thc_forward.1} parent=1 // pred_fallthru
      _
    %26 = vst [vmem:[%s2] sm:$0xff] 0.0
    %27 = vst [vmem:[%s2 + $0x8] sm:$0xff] 0.0
    %28 = vst [vmem:[%s2 + $0x10] sm:$0xff] 0.0
    %29 = vst [vmem:[%s2 + $0x18] sm:$0xff] 0.0
    %30 = vst [vmem:[%s2 + $0x20] sm:$0xff] 0.0
    %31 = vst [vmem:[%s2 + $0x28] sm:$0xff] 0.0
    %32 = vst [vmem:[%s2 + $0x30] sm:$0xff] 0.0
    %v33 = vld [vmem:[%s0] sm:$0xff]
    %v34 = vld [vmem:[%s0 + $0x8] sm:$0xff]
    %v35 = vld [vmem:[%s0 + $0x10] sm:$0xff]
    %v36 = vld [vmem:[%s0 + $0x18] sm:$0xff]
    %v37 = vld [vmem:[#allocation2] sm:$0xff]
    %v38 = vld [vmem:[#allocation2 + $0x8] sm:$0xff]
    %v39 = vld [vmem:[#allocation2 + $0x10] sm:$0xff]
    %v40 = vld [vmem:[#allocation2 + $0x18] sm:$0xff]
    %v41 = vld [vmem:[#allocation2 + $0x20] sm:$0xff]
    %v42 = vld [vmem:[#allocation2 + $0x28] sm:$0xff]
    %v43 = vld [vmem:[#allocation2 + $0x30] sm:$0xff]
    %v44 = vld [vmem:[#allocation2 + $0x38] sm:$0xff]
    %v45 = vld [vmem:[#allocation2 + $0x40] sm:$0xff]
    %v46 = vld [vmem:[#allocation2 + $0x48] sm:$0xff]
    %v47 = vld [vmem:[#allocation2 + $0x50] sm:$0xff]
    %v48 = vld [vmem:[#allocation2 + $0x58] sm:$0xff]
    %v49 = vld [vmem:[#allocation2 + $0x60] sm:$0xff]
    %v50 = vld [vmem:[#allocation2 + $0x68] sm:$0xff]
    %v51 = vld [vmem:[#allocation2 + $0x70] sm:$0xff]
    %v52 = vld [vmem:[#allocation2 + $0x78] sm:$0xff]
    %v53 = vld [vmem:[#allocation2 + $0x80] sm:$0xff]
    %v54 = vld [vmem:[#allocation2 + $0x88] sm:$0xff]
    %v55 = vld [vmem:[#allocation2 + $0x90] sm:$0xff]
    %v56 = vld [vmem:[#allocation2 + $0x98] sm:$0xff]
    %v57 = vld [vmem:[#allocation2 + $0xa0] sm:$0xff]
    %v58 = vld [vmem:[#allocation2 + $0xa8] sm:$0xff]
    %v59 = vld [vmem:[#allocation2 + $0xb0] sm:$0xff]
    %v60 = vld [vmem:[#allocation2 + $0xb8] sm:$0xff]
    %v61 = vld [vmem:[#allocation2 + $0xc0] sm:$0x1]
    %v62 = vld [vmem:[#allocation2 + $0xc1] sm:$0x1]
    %v63 = vld [vmem:[#allocation2 + $0xc2] sm:$0x1]
    %v64 = vld [vmem:[#allocation2 + $0xc3] sm:$0x1]
    %v65 = vld [vmem:[#allocation2 + $0xc4] sm:$0x1]
    %v66 = vld [vmem:[#allocation2 + $0xc5] sm:$0x1]
    %v67 = vld [vmem:[#allocation2 + $0xc6] sm:$0x1]
    %v68 = vld [vmem:[#allocation2 + $0xc7] sm:$0x1]
    %v69 = vpack.c.bf16 %v34, %v33
    %v70 = vpack.c.bf16 %v36, %v35
    %v71 = vpack.c.bf16 %v38, %v37
    %v72 = vpack.c.bf16 %v40, %v39
    %v73 = vlaneseq
    %v74 = vshrl.u32 %v73, 7
    %v75 = vsub.s32 0, %v74
    %v76 = vrot.slane %v61, %v75
    %vm77 = vcmask 261120
    %v79 = vsel %vm77, %v69, 0
    %v82 = vsel %vm77, %v70, 0
    %84 = vmatprep.subr.bf16.mxu0 0
    %85 = vmatpush1.bf16.msra.mxu0 %v71
    %86 = vmatprep.subr.bf16.mxu0 0
    %87 = vmatpush1.bf16.msra.mxu0 %v72
    %88 = vmatprep.subr.bf16.mxu0 0
    %89 = vmatpush1.bf16.msra.mxu0 0
    %90 = vmatprep.subr.bf16.mxu0 0
    %91 = vmatpush1.bf16.msra.mxu0 0
    %92 = vmatprep.subr.bf16.mxu0 0
    %93 = vmatpush1.bf16.msra.mxu0 0
    %94 = vmatprep.subr.bf16.mxu0 0
    %95 = vmatpush1.bf16.msra.mxu0 0
    %96 = vmatprep.subr.bf16.mxu0 0
    %97 = vmatpush1.bf16.msra.mxu0 0
    %98 = vmatprep.subr.bf16.mxu0 0
    %99 = vmatpush1.bf16.msra.mxu0 0
    %100 = vmatprep.subr.bf16.mxu0 0
    %101 = vmatpush1.bf16.msra.mxu0 0
    %102 = vmatprep.subr.bf16.mxu0 0
    %103 = vmatpush1.bf16.msra.mxu0 0
    %104 = vmatprep.subr.bf16.mxu0 0
    %105 = vmatpush1.bf16.msra.mxu0 0
    %106 = vmatprep.subr.bf16.mxu0 0
    %107 = vmatpush1.bf16.msra.mxu0 0
    %108 = vmatprep.subr.bf16.mxu0 0
    %109 = vmatpush1.bf16.msra.mxu0 0
    %110 = vmatprep.subr.bf16.mxu0 0
    %111 = vmatpush1.bf16.msra.mxu0 0
    %112 = vmatprep.subr.bf16.mxu0 0
    %113 = vmatpush1.bf16.msra.mxu0 0
    %114 = vmatprep.subr.bf16.mxu0 0
    %115 = vmatpush1.bf16.msra.mxu0 0
    %116 = vmatprep.mubr.bf16.mxu0 0
    %117 = vmatmul.mubr.bf16.gmra.mrb[0].mxu0 %v79
    %v118 = vpop.f32.mrb[0].mxu0
    %v119 = vadd.f32 %v76, %v118
    %v120 = vpop.f32.mrb[0].mxu0
    %v121 = vpop.f32.mrb[0].mxu0
    %v122 = vadd.f32 %v76, %v121
    %v123 = vpop.f32.mrb[0].mxu0
    %124 = vmatprep.mubr.bf16.mxu0 0
    %125 = vmatmul.mubr.bf16.gmra.mrb[0].mxu0 %v82
    %v126 = vpop.f32.mrb[0].mxu0
    %v127 = vadd.f32 %v76, %v126
    %v128 = vpop.f32.mrb[0].mxu0
    %v129 = vpop.f32.mrb[0].mxu0
    %v130 = vadd.f32 %v76, %v129
    %v131 = vpop.f32.mrb[0].mxu0
    %132 = vdwg.mxu0
    %v133 = vpack.c.bf16 %v122, %v119
    %135 = vrot.lane.b32.xlu0 %v133, 96
    %v136 = vpop.permute.xlu0 %135
    %vm137 = vcmask 64512
    %v139 = vsel %vm137, %v133, 0
    %v142 = vsel %vm137, %v136, 0
    %144 = vmatprep.subr.bf16.mxu0 0
    %145 = vmatpush1.bf16.xpose.msra.mxu0 %v142
    %146 = vmatprep.subr.bf16.mxu0 0
    %147 = vmatpush1.bf16.xpose.msra.mxu0 0
    %148 = vmatprep.subr.bf16.mxu0 0
    %149 = vmatpush1.bf16.xpose.msra.mxu0 0
    %150 = vmatprep.subr.bf16.mxu0 0
    %151 = vmatpush1.bf16.xpose.msra.mxu0 0
    %152 = vmatprep.subr.bf16.mxu0 0
    %153 = vmatpush1.bf16.xpose.msra.mxu0 0
    %154 = vmatprep.subr.bf16.mxu0 0
    %155 = vmatpush1.bf16.xpose.msra.mxu0 0
    %156 = vmatprep.subr.bf16.mxu0 0
    %157 = vmatpush1.bf16.xpose.msra.mxu0 0
    %158 = vmatprep.subr.bf16.mxu0 0
    %159 = vmatpush1.bf16.xpose.msra.mxu0 0
    %160 = vmatprep.subr.bf16.mxu0 0
    %161 = vmatpush1.bf16.xpose.msra.mxu0 0
    %162 = vmatprep.subr.bf16.mxu0 0
    %163 = vmatpush1.bf16.xpose.msra.mxu0 0
    %164 = vmatprep.subr.bf16.mxu0 0
    %165 = vmatpush1.bf16.xpose.msra.mxu0 0
    %166 = vmatprep.subr.bf16.mxu0 0
    %167 = vmatpush1.bf16.xpose.msra.mxu0 0
    %168 = vmatprep.subr.bf16.mxu0 0
    %169 = vmatpush1.bf16.xpose.msra.mxu0 0
    %170 = vmatprep.subr.bf16.mxu0 0
    %171 = vmatpush1.bf16.xpose.msra.mxu0 0
    %172 = vmatprep.subr.bf16.mxu0 0
    %173 = vmatpush1.bf16.xpose.msra.mxu0 0
    %174 = vmatprep.subr.bf16.mxu0 0
    %175 = vmatpush1.bf16.xpose.msra.mxu0 0
    %176 = vmatprep.mubr.bf16.mxu0 0
    %177 = vmatmul.mubr.bf16.gmra.mrb[0].mxu0 %v139
    %v178 = vpop.f32.mrb[0].mxu0
    %v179 = vadd.f32 0.0, %v178
    %v180 = vpop.f32.mrb[0].mxu0
    %v181 = vpop.f32.mrb[0].mxu0
    %v182 = vadd.f32 0.0, %v181
    %v183 = vpop.f32.mrb[0].mxu0
    %184 = vdwg.mxu0
    %vm185 = vcmask 130048
    %v186 = vsel %vm185, %v179, -inf
    %187 = vmax.xlane.f32.xlu0 %v186
    %v188 = vpop.xlane.xlu0 %187
    %v189 = vsel %vm185, %v182, -inf
    %190 = vmax.xlane.f32.xlu0 %v189
    %v191 = vpop.xlane.xlu0 %190
    %v192 = vsub.f32 %v179, %v188
    %v193 = vsub.f32 %v182, %v191
    %v194 = vmul.f32 %v192, 1.442695
    %v195 = vpow.pop %v194
    %v196 = vmul.f32 %v193, 1.442695
    %v197 = vpow.pop %v196
    %v198 = vsel %vm185, %v195, 0.0
    %199 = vadd.xlane.f32.xlu0 %v198
    %v200 = vpop.xlane.xlu0 %199
    %v201 = vsel %vm185, %v197, 0.0
    %202 = vadd.xlane.f32.xlu0 %v201
    %v203 = vpop.xlane.xlu0 %202
    %v204 = vrcp.pop %v200
    %v205 = vrcp.pop %v203
    %v206 = vmul.f32 %v195, %v204
    %v207 = vmul.f32 %v197, %v205
    %v208 = vpack.c.bf16 %v207, %v206
    %209 = vrot.lane.b32.xlu0 %v133, 64
    %v210 = vpop.permute.xlu0 %209
    %v213 = vsel %vm185, %v208, 0
    %215 = vmatprep.subr.bf16.mxu0 0
    %216 = vmatpush1.bf16.msra.mxu0 %v210
    %217 = vmatprep.subr.bf16.mxu0 0
    %218 = vmatpush1.bf16.msra.mxu0 0
    %219 = vmatprep.subr.bf16.mxu0 0
    %220 = vmatpush1.bf16.msra.mxu0 0
    %221 = vmatprep.subr.bf16.mxu0 0
    %222 = vmatpush1.bf16.msra.mxu0 0
    %223 = vmatprep.subr.bf16.mxu0 0
    %224 = vmatpush1.bf16.msra.mxu0 0
    %225 = vmatprep.subr.bf16.mxu0 0
    %226 = vmatpush1.bf16.msra.mxu0 0
    %227 = vmatprep.subr.bf16.mxu0 0
    %228 = vmatpush1.bf16.msra.mxu0 0
    %229 = vmatprep.subr.bf16.mxu0 0
    %230 = vmatpush1.bf16.msra.mxu0 0
    %231 = vmatprep.subr.bf16.mxu0 0
    %232 = vmatpush1.bf16.msra.mxu0 0
    %233 = vmatprep.subr.bf16.mxu0 0
    %234 = vmatpush1.bf16.msra.mxu0 0
    %235 = vmatprep.subr.bf16.mxu0 0
    %236 = vmatpush1.bf16.msra.mxu0 0
    %237 = vmatprep.subr.bf16.mxu0 0
    %238 = vmatpush1.bf16.msra.mxu0 0
    %239 = vmatprep.subr.bf16.mxu0 0
    %240 = vmatpush1.bf16.msra.mxu0 0
    %241 = vmatprep.subr.bf16.mxu0 0
    %242 = vmatpush1.bf16.msra.mxu0 0
    %243 = vmatprep.subr.bf16.mxu0 0
    %244 = vmatpush1.bf16.msra.mxu0 0
    %245 = vmatprep.subr.bf16.mxu0 0
    %246 = vmatpush1.bf16.msra.mxu0 0
    %247 = vmatprep.mubr.bf16.mxu0 0
    %248 = vmatmul.mubr.bf16.gmra.mrb[0].mxu0 %v213
    %v249 = vpop.f32.mrb[0].mxu0
    %v250 = vadd.f32 0.0, %v249
    %v251 = vpop.f32.mrb[0].mxu0
    %v252 = vpop.f32.mrb[0].mxu0
    %v253 = vadd.f32 0.0, %v252
    %v254 = vpop.f32.mrb[0].mxu0
    %255 = vdwg.mxu0
    %256 = vrot.lane.b32.xlu0 %v133, 120
    %v257 = vpop.permute.xlu0 %256
    %258 = vrot.lane.b32.xlu0 %v133, 88
    %v259 = vpop.permute.xlu0 %258
    %v261 = vsel %vm137, %v257, 0
    %v264 = vsel %vm137, %v259, 0
    %266 = vmatprep.subr.bf16.mxu0 0
    %267 = vmatpush1.bf16.xpose.msra.mxu0 %v264
    %268 = vmatprep.subr.bf16.mxu0 0
    %269 = vmatpush1.bf16.xpose.msra.mxu0 0
    %270 = vmatprep.subr.bf16.mxu0 0
    %271 = vmatpush1.bf16.xpose.msra.mxu0 0
    %272 = vmatprep.subr.bf16.mxu0 0
    %273 = vmatpush1.bf16.xpose.msra.mxu0 0
    %274 = vmatprep.subr.bf16.mxu0 0
    %275 = vmatpush1.bf16.xpose.msra.mxu0 0
    %276 = vmatprep.subr.bf16.mxu0 0
    %277 = vmatpush1.bf16.xpose.msra.mxu0 0
    %278 = vmatprep.subr.bf16.mxu0 0
    %279 = vmatpush1.bf16.xpose.msra.mxu0 0
    %280 = vmatprep.subr.bf16.mxu0 0
    %281 = vmatpush1.bf16.xpose.msra.mxu0 0
    %282 = vmatprep.subr.bf16.mxu0 0
    %283 = vmatpush1.bf16.xpose.msra.mxu0 0
    %284 = vmatprep.subr.bf16.mxu0 0
    %285 = vmatpush1.bf16.xpose.msra.mxu0 0
    %286 = vmatprep.subr.bf16.mxu0 0
    %287 = vmatpush1.bf16.xpose.msra.mxu0 0
    %288 = vmatprep.subr.bf16.mxu0 0
    %289 = vmatpush1.bf16.xpose.msra.mxu0 0
    %290 = vmatprep.subr.bf16.mxu0 0
    %291 = vmatpush1.bf16.xpose.msra.mxu0 0
    %292 = vmatprep.subr.bf16.mxu0 0
    %293 = vmatpush1.bf16.xpose.msra.mxu0 0
    %294 = vmatprep.subr.bf16.mxu0 0
    %295 = vmatpush1.bf16.xpose.msra.mxu0 0
    %296 = vmatprep.subr.bf16.mxu0 0
    %297 = vmatpush1.bf16.xpose.msra.mxu0 0
    %298 = vmatprep.mubr.bf16.mxu0 0
    %299 = vmatmul.mubr.bf16.gmra.mrb[0].mxu0 %v261
    %v300 = vpop.f32.mrb[0].mxu0
    %v301 = vadd.f32 0.0, %v300
    %v302 = vpop.f32.mrb[0].mxu0
    %v303 = vpop.f32.mrb[0].mxu0
    %v304 = vadd.f32 0.0, %v303
    %v305 = vpop.f32.mrb[0].mxu0
    %306 = vdwg.mxu0
    %v307 = vsel %vm185, %v301, -inf
    %308 = vmax.xlane.f32.xlu0 %v307
    %v309 = vpop.xlane.xlu0 %308
    %v310 = vsel %vm185, %v304, -inf
    %311 = vmax.xlane.f32.xlu0 %v310
    %v312 = vpop.xlane.xlu0 %311
    %v313 = vsub.f32 %v301, %v309
    %v314 = vsub.f32 %v304, %v312
    %v315 = vmul.f32 %v313, 1.442695
    %v316 = vpow.pop %v315
    %v317 = vmul.f32 %v314, 1.442695
    %v318 = vpow.pop %v317
    %v319 = vsel %vm185, %v316, 0.0
    %320 = vadd.xlane.f32.xlu0 %v319
    %v321 = vpop.xlane.xlu0 %320
    %v322 = vsel %vm185, %v318, 0.0
    %323 = vadd.xlane.f32.xlu0 %v322
    %v324 = vpop.xlane.xlu0 %323
    %v325 = vrcp.pop %v321
    %v326 = vrcp.pop %v324
    %v327 = vmul.f32 %v316, %v325
    %v328 = vmul.f32 %v318, %v326
    %v329 = vpack.c.bf16 %v328, %v327
    %330 = vrot.lane.b32.xlu0 %v133, 56
    %v331 = vpop.permute.xlu0 %330
    %v334 = vsel %vm185, %v329, 0
    %336 = vmatprep.subr.bf16.mxu0 0
    %337 = vmatpush1.bf16.msra.mxu0 %v331
    %338 = vmatprep.subr.bf16.mxu0 0
    %339 = vmatpush1.bf16.msra.mxu0 0
    %340 = vmatprep.subr.bf16.mxu0 0
    %341 = vmatpush1.bf16.msra.mxu0 0
    %342 = vmatprep.subr.bf16.mxu0 0
    %343 = vmatpush1.bf16.msra.mxu0 0
    %344 = vmatprep.subr.bf16.mxu0 0
    %345 = vmatpush1.bf16.msra.mxu0 0
    %346 = vmatprep.subr.bf16.mxu0 0
    %347 = vmatpush1.bf16.msra.mxu0 0
    %348 = vmatprep.subr.bf16.mxu0 0
    %349 = vmatpush1.bf16.msra.mxu0 0
    %350 = vmatprep.subr.bf16.mxu0 0
    %351 = vmatpush1.bf16.msra.mxu0 0
    %352 = vmatprep.subr.bf16.mxu0 0
    %353 = vmatpush1.bf16.msra.mxu0 0
    %354 = vmatprep.subr.bf16.mxu0 0
    %355 = vmatpush1.bf16.msra.mxu0 0
    %356 = vmatprep.subr.bf16.mxu0 0
    %357 = vmatpush1.bf16.msra.mxu0 0
    %358 = vmatprep.subr.bf16.mxu0 0
    %359 = vmatpush1.bf16.msra.mxu0 0
    %360 = vmatprep.subr.bf16.mxu0 0
    %361 = vmatpush1.bf16.msra.mxu0 0
    %362 = vmatprep.subr.bf16.mxu0 0
    %363 = vmatpush1.bf16.msra.mxu0 0
    %364 = vmatprep.subr.bf16.mxu0 0
    %365 = vmatpush1.bf16.msra.mxu0 0
    %366 = vmatprep.subr.bf16.mxu0 0
    %367 = vmatpush1.bf16.msra.mxu0 0
    %368 = vmatprep.mubr.bf16.mxu0 0
    %369 = vmatmul.mubr.bf16.gmra.mrb[0].mxu0 %v334
    %v370 = vpop.f32.mrb[0].mxu0
    %v371 = vadd.f32 0.0, %v370
    %v372 = vpop.f32.mrb[0].mxu0
    %v373 = vpop.f32.mrb[0].mxu0
    %v374 = vadd.f32 0.0, %v373
    %v375 = vpop.f32.mrb[0].mxu0
    %376 = vdwg.mxu0
    %377 = vrot.lane.b32.xlu0 %v133, 112
    %v378 = vpop.permute.xlu0 %377
    %379 = vrot.lane.b32.xlu0 %v133, 80
    %v380 = vpop.permute.xlu0 %379
    %v382 = vsel %vm137, %v378, 0
    %v385 = vsel %vm137, %v380, 0
    %387 = vmatprep.subr.bf16.mxu0 0
    %388 = vmatpush1.bf16.xpose.msra.mxu0 %v385
    %389 = vmatprep.subr.bf16.mxu0 0
    %390 = vmatpush1.bf16.xpose.msra.mxu0 0
    %391 = vmatprep.subr.bf16.mxu0 0
    %392 = vmatpush1.bf16.xpose.msra.mxu0 0
    %393 = vmatprep.subr.bf16.mxu0 0
    %394 = vmatpush1.bf16.xpose.msra.mxu0 0
    %395 = vmatprep.subr.bf16.mxu0 0
    %396 = vmatpush1.bf16.xpose.msra.mxu0 0
    %397 = vmatprep.subr.bf16.mxu0 0
    %398 = vmatpush1.bf16.xpose.msra.mxu0 0
    %399 = vmatprep.subr.bf16.mxu0 0
    %400 = vmatpush1.bf16.xpose.msra.mxu0 0
    %401 = vmatprep.subr.bf16.mxu0 0
    %402 = vmatpush1.bf16.xpose.msra.mxu0 0
    %403 = vmatprep.subr.bf16.mxu0 0
    %404 = vmatpush1.bf16.xpose.msra.mxu0 0
    %405 = vmatprep.subr.bf16.mxu0 0
    %406 = vmatpush1.bf16.xpose.msra.mxu0 0
    %407 = vmatprep.subr.bf16.mxu0 0
    %408 = vmatpush1.bf16.xpose.msra.mxu0 0
    %409 = vmatprep.subr.bf16.mxu0 0
    %410 = vmatpush1.bf16.xpose.msra.mxu0 0
    %411 = vmatprep.subr.bf16.mxu0 0
    %412 = vmatpush1.bf16.xpose.msra.mxu0 0
    %413 = vmatprep.subr.bf16.mxu0 0
    %414 = vmatpush1.bf16.xpose.msra.mxu0 0
    %415 = vmatprep.subr.bf16.mxu0 0
    %416 = vmatpush1.bf16.xpose.msra.mxu0 0
    %417 = vmatprep.subr.bf16.mxu0 0
    %418 = vmatpush1.bf16.xpose.msra.mxu0 0
    %419 = vmatprep.mubr.bf16.mxu0 0
    %420 = vmatmul.mubr.bf16.gmra.mrb[0].mxu0 %v382
    %v421 = vpop.f32.mrb[0].mxu0
    %v422 = vadd.f32 0.0, %v421
    %v423 = vpop.f32.mrb[0].mxu0
    %v424 = vpop.f32.mrb[0].mxu0
    %v425 = vadd.f32 0.0, %v424
    %v426 = vpop.f32.mrb[0].mxu0
    %427 = vdwg.mxu0
    %v428 = vsel %vm185, %v422, -inf
    %429 = vmax.xlane.f32.xlu0 %v428
    %v430 = vpop.xlane.xlu0 %429
    %v431 = vsel %vm185, %v425, -inf
    %432 = vmax.xlane.f32.xlu0 %v431
    %v433 = vpop.xlane.xlu0 %432
    %v434 = vsub.f32 %v422, %v430
    %v435 = vsub.f32 %v425, %v433
    %v436 = vmul.f32 %v434, 1.442695
    %v437 = vpow.pop %v436
    %v438 = vmul.f32 %v435, 1.442695
    %v439 = vpow.pop %v438
    %v440 = vsel %vm185, %v437, 0.0
    %441 = vadd.xlane.f32.xlu0 %v440
    %v442 = vpop.xlane.xlu0 %441
    %v443 = vsel %vm185, %v439, 0.0
    %444 = vadd.xlane.f32.xlu0 %v443
    %v445 = vpop.xlane.xlu0 %444
    %v446 = vrcp.pop %v442
    %v447 = vrcp.pop %v445
    %v448 = vmul.f32 %v437, %v446
    %v449 = vmul.f32 %v439, %v447
    %v450 = vpack.c.bf16 %v449, %v448
    %451 = vrot.lane.b32.xlu0 %v133, 48
    %v452 = vpop.permute.xlu0 %451
    %v455 = vsel %vm185, %v450, 0
    %457 = vmatprep.subr.bf16.mxu0 0
    %458 = vmatpush1.bf16.msra.mxu0 %v452
    %459 = vmatprep.subr.bf16.mxu0 0
    %460 = vmatpush1.bf16.msra.mxu0 0
    %461 = vmatprep.subr.bf16.mxu0 0
    %462 = vmatpush1.bf16.msra.mxu0 0
    %463 = vmatprep.subr.bf16.mxu0 0
    %464 = vmatpush1.bf16.msra.mxu0 0
    %465 = vmatprep.subr.bf16.mxu0 0
    %466 = vmatpush1.bf16.msra.mxu0 0
    %467 = vmatprep.subr.bf16.mxu0 0
    %468 = vmatpush1.bf16.msra.mxu0 0
    %469 = vmatprep.subr.bf16.mxu0 0
    %470 = vmatpush1.bf16.msra.mxu0 0
    %471 = vmatprep.subr.bf16.mxu0 0
    %472 = vmatpush1.bf16.msra.mxu0 0
    %473 = vmatprep.subr.bf16.mxu0 0
    %474 = vmatpush1.bf16.msra.mxu0 0
    %475 = vmatprep.subr.bf16.mxu0 0
    %476 = vmatpush1.bf16.msra.mxu0 0
    %477 = vmatprep.subr.bf16.mxu0 0
    %478 = vmatpush1.bf16.msra.mxu0 0
    %479 = vmatprep.subr.bf16.mxu0 0
    %480 = vmatpush1.bf16.msra.mxu0 0
    %481 = vmatprep.subr.bf16.mxu0 0
    %482 = vmatpush1.bf16.msra.mxu0 0
    %483 = vmatprep.subr.bf16.mxu0 0
    %484 = vmatpush1.bf16.msra.mxu0 0
    %485 = vmatprep.subr.bf16.mxu0 0
    %486 = vmatpush1.bf16.msra.mxu0 0
    %487 = vmatprep.subr.bf16.mxu0 0
    %488 = vmatpush1.bf16.msra.mxu0 0
    %489 = vmatprep.mubr.bf16.mxu0 0
    %490 = vmatmul.mubr.bf16.gmra.mrb[0].mxu0 %v455
    %v491 = vpop.f32.mrb[0].mxu0
    %v492 = vadd.f32 0.0, %v491
    %v493 = vpop.f32.mrb[0].mxu0
    %v494 = vpop.f32.mrb[0].mxu0
    %v495 = vadd.f32 0.0, %v494
    %v496 = vpop.f32.mrb[0].mxu0
    %497 = vdwg.mxu0
    %498 = vrot.lane.b32.xlu0 %v133, 104
    %v499 = vpop.permute.xlu0 %498
    %500 = vrot.lane.b32.xlu0 %v133, 72
    %v501 = vpop.permute.xlu0 %500
    %v503 = vsel %vm137, %v499, 0
    %v506 = vsel %vm137, %v501, 0
    %508 = vmatprep.subr.bf16.mxu0 0
    %509 = vmatpush1.bf16.xpose.msra.mxu0 %v506
    %510 = vmatprep.subr.bf16.mxu0 0
    %511 = vmatpush1.bf16.xpose.msra.mxu0 0
    %512 = vmatprep.subr.bf16.mxu0 0
    %513 = vmatpush1.bf16.xpose.msra.mxu0 0
    %514 = vmatprep.subr.bf16.mxu0 0
    %515 = vmatpush1.bf16.xpose.msra.mxu0 0
    %516 = vmatprep.subr.bf16.mxu0 0
    %517 = vmatpush1.bf16.xpose.msra.mxu0 0
    %518 = vmatprep.subr.bf16.mxu0 0
    %519 = vmatpush1.bf16.xpose.msra.mxu0 0
    %520 = vmatprep.subr.bf16.mxu0 0
    %521 = vmatpush1.bf16.xpose.msra.mxu0 0
    %522 = vmatprep.subr.bf16.mxu0 0
    %523 = vmatpush1.bf16.xpose.msra.mxu0 0
    %524 = vmatprep.subr.bf16.mxu0 0
    %525 = vmatpush1.bf16.xpose.msra.mxu0 0
    %526 = vmatprep.subr.bf16.mxu0 0
    %527 = vmatpush1.bf16.xpose.msra.mxu0 0
    %528 = vmatprep.subr.bf16.mxu0 0
    %529 = vmatpush1.bf16.xpose.msra.mxu0 0
    %530 = vmatprep.subr.bf16.mxu0 0
    %531 = vmatpush1.bf16.xpose.msra.mxu0 0
    %532 = vmatprep.subr.bf16.mxu0 0
    %533 = vmatpush1.bf16.xpose.msra.mxu0 0
    %534 = vmatprep.subr.bf16.mxu0 0
    %535 = vmatpush1.bf16.xpose.msra.mxu0 0
    %536 = vmatprep.subr.bf16.mxu0 0
    %537 = vmatpush1.bf16.xpose.msra.mxu0 0
    %538 = vmatprep.subr.bf16.mxu0 0
    %539 = vmatpush1.bf16.xpose.msra.mxu0 0
    %540 = vmatprep.mubr.bf16.mxu0 0
    %541 = vmatmul.mubr.bf16.gmra.mrb[0].mxu0 %v503
    %v542 = vpop.f32.mrb[0].mxu0
    %v543 = vadd.f32 0.0, %v542
    %v544 = vpop.f32.mrb[0].mxu0
    %v545 = vpop.f32.mrb[0].mxu0
    %v546 = vadd.f32 0.0, %v545
    %v547 = vpop.f32.mrb[0].mxu0
    %548 = vdwg.mxu0
    %v549 = vsel %vm185, %v543, -inf
    %550 = vmax.xlane.f32.xlu0 %v549
    %v551 = vpop.xlane.xlu0 %550
    %v552 = vsel %vm185, %v546, -inf
    %553 = vmax.xlane.f32.xlu0 %v552
    %v554 = vpop.xlane.xlu0 %553
    %v555 = vsub.f32 %v543, %v551
    %v556 = vsub.f32 %v546, %v554
    %v557 = vmul.f32 %v555, 1.442695
    %v558 = vpow.pop %v557
    %v559 = vmul.f32 %v556, 1.442695
    %v560 = vpow.pop %v559
    %v561 = vsel %vm185, %v558, 0.0
    %562 = vadd.xlane.f32.xlu0 %v561
    %v563 = vpop.xlane.xlu0 %562
    %v564 = vsel %vm185, %v560, 0.0
    %565 = vadd.xlane.f32.xlu0 %v564
    %v566 = vpop.xlane.xlu0 %565
    %v567 = vrcp.pop %v563
    %v568 = vrcp.pop %v566
    %v569 = vmul.f32 %v558, %v567
    %v570 = vmul.f32 %v560, %v568
    %v571 = vpack.c.bf16 %v570, %v569
    %572 = vrot.lane.b32.xlu0 %v133, 40
    %v573 = vpop.permute.xlu0 %572
    %v576 = vsel %vm185, %v571, 0
    %578 = vmatprep.subr.bf16.mxu0 0
    %579 = vmatpush1.bf16.msra.mxu0 %v573
    %580 = vmatprep.subr.bf16.mxu0 0
    %581 = vmatpush1.bf16.msra.mxu0 0
    %582 = vmatprep.subr.bf16.mxu0 0
    %583 = vmatpush1.bf16.msra.mxu0 0
    %584 = vmatprep.subr.bf16.mxu0 0
    %585 = vmatpush1.bf16.msra.mxu0 0
    %586 = vmatprep.subr.bf16.mxu0 0
    %587 = vmatpush1.bf16.msra.mxu0 0
    %588 = vmatprep.subr.bf16.mxu0 0
    %589 = vmatpush1.bf16.msra.mxu0 0
    %590 = vmatprep.subr.bf16.mxu0 0
    %591 = vmatpush1.bf16.msra.mxu0 0
    %592 = vmatprep.subr.bf16.mxu0 0
    %593 = vmatpush1.bf16.msra.mxu0 0
    %594 = vmatprep.subr.bf16.mxu0 0
    %595 = vmatpush1.bf16.msra.mxu0 0
    %596 = vmatprep.subr.bf16.mxu0 0
    %597 = vmatpush1.bf16.msra.mxu0 0
    %598 = vmatprep.subr.bf16.mxu0 0
    %599 = vmatpush1.bf16.msra.mxu0 0
    %600 = vmatprep.subr.bf16.mxu0 0
    %601 = vmatpush1.bf16.msra.mxu0 0
    %602 = vmatprep.subr.bf16.mxu0 0
    %603 = vmatpush1.bf16.msra.mxu0 0
    %604 = vmatprep.subr.bf16.mxu0 0
    %605 = vmatpush1.bf16.msra.mxu0 0
    %606 = vmatprep.subr.bf16.mxu0 0
    %607 = vmatpush1.bf16.msra.mxu0 0
    %608 = vmatprep.subr.bf16.mxu0 0
    %609 = vmatpush1.bf16.msra.mxu0 0
    %610 = vmatprep.mubr.bf16.mxu0 0
    %611 = vmatmul.mubr.bf16.gmra.mrb[0].mxu0 %v576
    %v612 = vpop.f32.mrb[0].mxu0
    %v613 = vadd.f32 0.0, %v612
    %v614 = vpop.f32.mrb[0].mxu0
    %v615 = vpop.f32.mrb[0].mxu0
    %v616 = vadd.f32 0.0, %v615
    %v617 = vpop.f32.mrb[0].mxu0
    %618 = vdwg.mxu0
    %621 = vrot.lane.b32.xlu0 %v371, 8
    %v622 = vpop.permute.xlu0 %621
    %623 = vrot.lane.b32.xlu0 %v374, 8
    %v624 = vpop.permute.xlu0 %623
    %629 = vrot.lane.b32.xlu0 %v492, 16
    %v630 = vpop.permute.xlu0 %629
    %631 = vrot.lane.b32.xlu0 %v495, 16
    %v632 = vpop.permute.xlu0 %631
    %637 = vrot.lane.b32.xlu0 %v613, 24
    %v638 = vpop.permute.xlu0 %637
    %639 = vrot.lane.b32.xlu0 %v616, 24
    %v640 = vpop.permute.xlu0 %639
    %v643 = vsel %vm137, %v250, %v622
    %v644 = vsel %vm137, %v253, %v624
    %v645 = vsel %vm185, %v643, %v630
    %v646 = vsel %vm185, %v644, %v632
    %vm647 = vcmask 195584
    %v648 = vsel %vm647, %v645, %v638
    %v649 = vsel %vm647, %v646, %v640
    %v650 = vpack.c.bf16 %v130, %v127
    %652 = vrot.lane.b32.xlu0 %v650, 96
    %v653 = vpop.permute.xlu0 %652
    %v655 = vsel %vm137, %v650, 0
    %v658 = vsel %vm137, %v653, 0
    %660 = vmatprep.subr.bf16.mxu0 0
    %661 = vmatpush1.bf16.xpose.msra.mxu0 %v658
    %662 = vmatprep.subr.bf16.mxu0 0
    %663 = vmatpush1.bf16.xpose.msra.mxu0 0
    %664 = vmatprep.subr.bf16.mxu0 0
    %665 = vmatpush1.bf16.xpose.msra.mxu0 0
    %666 = vmatprep.subr.bf16.mxu0 0
    %667 = vmatpush1.bf16.xpose.msra.mxu0 0
    %668 = vmatprep.subr.bf16.mxu0 0
    %669 = vmatpush1.bf16.xpose.msra.mxu0 0
    %670 = vmatprep.subr.bf16.mxu0 0
    %671 = vmatpush1.bf16.xpose.msra.mxu0 0
    %672 = vmatprep.subr.bf16.mxu0 0
    %673 = vmatpush1.bf16.xpose.msra.mxu0 0
    %674 = vmatprep.subr.bf16.mxu0 0
    %675 = vmatpush1.bf16.xpose.msra.mxu0 0
    %676 = vmatprep.subr.bf16.mxu0 0
    %677 = vmatpush1.bf16.xpose.msra.mxu0 0
    %678 = vmatprep.subr.bf16.mxu0 0
    %679 = vmatpush1.bf16.xpose.msra.mxu0 0
    %680 = vmatprep.subr.bf16.mxu0 0
    %681 = vmatpush1.bf16.xpose.msra.mxu0 0
    %682 = vmatprep.subr.bf16.mxu0 0
    %683 = vmatpush1.bf16.xpose.msra.mxu0 0
    %684 = vmatprep.subr.bf16.mxu0 0
    %685 = vmatpush1.bf16.xpose.msra.mxu0 0
    %686 = vmatprep.subr.bf16.mxu0 0
    %687 = vmatpush1.bf16.xpose.msra.mxu0 0
    %688 = vmatprep.subr.bf16.mxu0 0
    %689 = vmatpush1.bf16.xpose.msra.mxu0 0
    %690 = vmatprep.subr.bf16.mxu0 0
    %691 = vmatpush1.bf16.xpose.msra.mxu0 0
    %692 = vmatprep.mubr.bf16.mxu0 0
    %693 = vmatmul.mubr.bf16.gmra.mrb[0].mxu0 %v655
    %v694 = vpop.f32.mrb[0].mxu0
    %v695 = vadd.f32 0.0, %v694
    %v696 = vpop.f32.mrb[0].mxu0
    %v697 = vpop.f32.mrb[0].mxu0
    %v698 = vadd.f32 0.0, %v697
    %v699 = vpop.f32.mrb[0].mxu0
    %700 = vdwg.mxu0
    %v701 = vsel %vm185, %v695, -inf
    %702 = vmax.xlane.f32.xlu0 %v701
    %v703 = vpop.xlane.xlu0 %702
    %v704 = vsel %vm185, %v698, -inf
    %705 = vmax.xlane.f32.xlu0 %v704
    %v706 = vpop.xlane.xlu0 %705
    %v707 = vsub.f32 %v695, %v703
    %v708 = vsub.f32 %v698, %v706
    %v709 = vmul.f32 %v707, 1.442695
    %v710 = vpow.pop %v709
    %v711 = vmul.f32 %v708, 1.442695
    %v712 = vpow.pop %v711
    %v713 = vsel %vm185, %v710, 0.0
    %714 = vadd.xlane.f32.xlu0 %v713
    %v715 = vpop.xlane.xlu0 %714
    %v716 = vsel %vm185, %v712, 0.0
    %717 = vadd.xlane.f32.xlu0 %v716
    %v718 = vpop.xlane.xlu0 %717
    %v719 = vrcp.pop %v715
    %v720 = vrcp.pop %v718
    %v721 = vmul.f32 %v710, %v719
    %v722 = vmul.f32 %v712, %v720
    %v723 = vpack.c.bf16 %v722, %v721
    %724 = vrot.lane.b32.xlu0 %v650, 64
    %v725 = vpop.permute.xlu0 %724
    %v728 = vsel %vm185, %v723, 0
    %730 = vmatprep.subr.bf16.mxu0 0
    %731 = vmatpush1.bf16.msra.mxu0 %v725
    %732 = vmatprep.subr.bf16.mxu0 0
    %733 = vmatpush1.bf16.msra.mxu0 0
    %734 = vmatprep.subr.bf16.mxu0 0
    %735 = vmatpush1.bf16.msra.mxu0 0
    %736 = vmatprep.subr.bf16.mxu0 0
    %737 = vmatpush1.bf16.msra.mxu0 0
    %738 = vmatprep.subr.bf16.mxu0 0
    %739 = vmatpush1.bf16.msra.mxu0 0
    %740 = vmatprep.subr.bf16.mxu0 0
    %741 = vmatpush1.bf16.msra.mxu0 0
    %742 = vmatprep.subr.bf16.mxu0 0
    %743 = vmatpush1.bf16.msra.mxu0 0
    %744 = vmatprep.subr.bf16.mxu0 0
    %745 = vmatpush1.bf16.msra.mxu0 0
    %746 = vmatprep.subr.bf16.mxu0 0
    %747 = vmatpush1.bf16.msra.mxu0 0
    %748 = vmatprep.subr.bf16.mxu0 0
    %749 = vmatpush1.bf16.msra.mxu0 0
    %750 = vmatprep.subr.bf16.mxu0 0
    %751 = vmatpush1.bf16.msra.mxu0 0
    %752 = vmatprep.subr.bf16.mxu0 0
    %753 = vmatpush1.bf16.msra.mxu0 0
    %754 = vmatprep.subr.bf16.mxu0 0
    %755 = vmatpush1.bf16.msra.mxu0 0
    %756 = vmatprep.subr.bf16.mxu0 0
    %757 = vmatpush1.bf16.msra.mxu0 0
    %758 = vmatprep.subr.bf16.mxu0 0
    %759 = vmatpush1.bf16.msra.mxu0 0
    %760 = vmatprep.subr.bf16.mxu0 0
    %761 = vmatpush1.bf16.msra.mxu0 0
    %762 = vmatprep.mubr.bf16.mxu0 0
    %763 = vmatmul.mubr.bf16.gmra.mrb[0].mxu0 %v728
    %v764 = vpop.f32.mrb[0].mxu0
    %v765 = vadd.f32 0.0, %v764
    %v766 = vpop.f32.mrb[0].mxu0
    %v767 = vpop.f32.mrb[0].mxu0
    %v768 = vadd.f32 0.0, %v767
    %v769 = vpop.f32.mrb[0].mxu0
    %770 = vdwg.mxu0
    %771 = vrot.lane.b32.xlu0 %v650, 120
    %v772 = vpop.permute.xlu0 %771
    %773 = vrot.lane.b32.xlu0 %v650, 88
    %v774 = vpop.permute.xlu0 %773
    %v776 = vsel %vm137, %v772, 0
    %v779 = vsel %vm137, %v774, 0
    %781 = vmatprep.subr.bf16.mxu0 0
    %782 = vmatpush1.bf16.xpose.msra.mxu0 %v779
    %783 = vmatprep.subr.bf16.mxu0 0
    %784 = vmatpush1.bf16.xpose.msra.mxu0 0
    %785 = vmatprep.subr.bf16.mxu0 0
    %786 = vmatpush1.bf16.xpose.msra.mxu0 0
    %787 = vmatprep.subr.bf16.mxu0 0
    %788 = vmatpush1.bf16.xpose.msra.mxu0 0
    %789 = vmatprep.subr.bf16.mxu0 0
    %790 = vmatpush1.bf16.xpose.msra.mxu0 0
    %791 = vmatprep.subr.bf16.mxu0 0
    %792 = vmatpush1.bf16.xpose.msra.mxu0 0
    %793 = vmatprep.subr.bf16.mxu0 0
    %794 = vmatpush1.bf16.xpose.msra.mxu0 0
    %795 = vmatprep.subr.bf16.mxu0 0
    %796 = vmatpush1.bf16.xpose.msra.mxu0 0
    %797 = vmatprep.subr.bf16.mxu0 0
    %798 = vmatpush1.bf16.xpose.msra.mxu0 0
    %799 = vmatprep.subr.bf16.mxu0 0
    %800 = vmatpush1.bf16.xpose.msra.mxu0 0
    %801 = vmatprep.subr.bf16.mxu0 0
    %802 = vmatpush1.bf16.xpose.msra.mxu0 0
    %803 = vmatprep.subr.bf16.mxu0 0
    %804 = vmatpush1.bf16.xpose.msra.mxu0 0
    %805 = vmatprep.subr.bf16.mxu0 0
    %806 = vmatpush1.bf16.xpose.msra.mxu0 0
    %807 = vmatprep.subr.bf16.mxu0 0
    %808 = vmatpush1.bf16.xpose.msra.mxu0 0
    %809 = vmatprep.subr.bf16.mxu0 0
    %810 = vmatpush1.bf16.xpose.msra.mxu0 0
    %811 = vmatprep.subr.bf16.mxu0 0
    %812 = vmatpush1.bf16.xpose.msra.mxu0 0
    %813 = vmatprep.mubr.bf16.mxu0 0
    %814 = vmatmul.mubr.bf16.gmra.mrb[0].mxu0 %v776
    %v815 = vpop.f32.mrb[0].mxu0
    %v816 = vadd.f32 0.0, %v815
    %v817 = vpop.f32.mrb[0].mxu0
    %v818 = vpop.f32.mrb[0].mxu0
    %v819 = vadd.f32 0.0, %v818
    %v820 = vpop.f32.mrb[0].mxu0
    %821 = vdwg.mxu0
    %v822 = vsel %vm185, %v816, -inf
    %823 = vmax.xlane.f32.xlu0 %v822
    %v824 = vpop.xlane.xlu0 %823
    %v825 = vsel %vm185, %v819, -inf
    %826 = vmax.xlane.f32.xlu0 %v825
    %v827 = vpop.xlane.xlu0 %826
    %v828 = vsub.f32 %v816, %v824
    %v829 = vsub.f32 %v819, %v827
    %v830 = vmul.f32 %v828, 1.442695
    %v831 = vpow.pop %v830
    %v832 = vmul.f32 %v829, 1.442695
    %v833 = vpow.pop %v832
    %v834 = vsel %vm185, %v831, 0.0
    %835 = vadd.xlane.f32.xlu0 %v834
    %v836 = vpop.xlane.xlu0 %835
    %v837 = vsel %vm185, %v833, 0.0
    %838 = vadd.xlane.f32.xlu0 %v837
    %v839 = vpop.xlane.xlu0 %838
    %v840 = vrcp.pop %v836
    %v841 = vrcp.pop %v839
    %v842 = vmul.f32 %v831, %v840
    %v843 = vmul.f32 %v833, %v841
    %v844 = vpack.c.bf16 %v843, %v842
    %845 = vrot.lane.b32.xlu0 %v650, 56
    %v846 = vpop.permute.xlu0 %845
    %v849 = vsel %vm185, %v844, 0
    %851 = vmatprep.subr.bf16.mxu0 0
    %852 = vmatpush1.bf16.msra.mxu0 %v846
    %853 = vmatprep.subr.bf16.mxu0 0
    %854 = vmatpush1.bf16.msra.mxu0 0
    %855 = vmatprep.subr.bf16.mxu0 0
    %856 = vmatpush1.bf16.msra.mxu0 0
    %857 = vmatprep.subr.bf16.mxu0 0
    %858 = vmatpush1.bf16.msra.mxu0 0
    %859 = vmatprep.subr.bf16.mxu0 0
    %860 = vmatpush1.bf16.msra.mxu0 0
    %861 = vmatprep.subr.bf16.mxu0 0
    %862 = vmatpush1.bf16.msra.mxu0 0
    %863 = vmatprep.subr.bf16.mxu0 0
    %864 = vmatpush1.bf16.msra.mxu0 0
    %865 = vmatprep.subr.bf16.mxu0 0
    %866 = vmatpush1.bf16.msra.mxu0 0
    %867 = vmatprep.subr.bf16.mxu0 0
    %868 = vmatpush1.bf16.msra.mxu0 0
    %869 = vmatprep.subr.bf16.mxu0 0
    %870 = vmatpush1.bf16.msra.mxu0 0
    %871 = vmatprep.subr.bf16.mxu0 0
    %872 = vmatpush1.bf16.msra.mxu0 0
    %873 = vmatprep.subr.bf16.mxu0 0
    %874 = vmatpush1.bf16.msra.mxu0 0
    %875 = vmatprep.subr.bf16.mxu0 0
    %876 = vmatpush1.bf16.msra.mxu0 0
    %877 = vmatprep.subr.bf16.mxu0 0
    %878 = vmatpush1.bf16.msra.mxu0 0
    %879 = vmatprep.subr.bf16.mxu0 0
    %880 = vmatpush1.bf16.msra.mxu0 0
    %881 = vmatprep.subr.bf16.mxu0 0
    %882 = vmatpush1.bf16.msra.mxu0 0
    %883 = vmatprep.mubr.bf16.mxu0 0
    %884 = vmatmul.mubr.bf16.gmra.mrb[0].mxu0 %v849
    %v885 = vpop.f32.mrb[0].mxu0
    %v886 = vadd.f32 0.0, %v885
    %v887 = vpop.f32.mrb[0].mxu0
    %v888 = vpop.f32.mrb[0].mxu0
    %v889 = vadd.f32 0.0, %v888
    %v890 = vpop.f32.mrb[0].mxu0
    %891 = vdwg.mxu0
    %892 = vrot.lane.b32.xlu0 %v650, 112
    %v893 = vpop.permute.xlu0 %892
    %894 = vrot.lane.b32.xlu0 %v650, 80
    %v895 = vpop.permute.xlu0 %894
    %v897 = vsel %vm137, %v893, 0
    %v900 = vsel %vm137, %v895, 0
    %902 = vmatprep.subr.bf16.mxu0 0
    %903 = vmatpush1.bf16.xpose.msra.mxu0 %v900
    %904 = vmatprep.subr.bf16.mxu0 0
    %905 = vmatpush1.bf16.xpose.msra.mxu0 0
    %906 = vmatprep.subr.bf16.mxu0 0
    %907 = vmatpush1.bf16.xpose.msra.mxu0 0
    %908 = vmatprep.subr.bf16.mxu0 0
    %909 = vmatpush1.bf16.xpose.msra.mxu0 0
    %910 = vmatprep.subr.bf16.mxu0 0
    %911 = vmatpush1.bf16.xpose.msra.mxu0 0
    %912 = vmatprep.subr.bf16.mxu0 0
    %913 = vmatpush1.bf16.xpose.msra.mxu0 0
    %914 = vmatprep.subr.bf16.mxu0 0
    %915 = vmatpush1.bf16.xpose.msra.mxu0 0
    %916 = vmatprep.subr.bf16.mxu0 0
    %917 = vmatpush1.bf16.xpose.msra.mxu0 0
    %918 = vmatprep.subr.bf16.mxu0 0
    %919 = vmatpush1.bf16.xpose.msra.mxu0 0
    %920 = vmatprep.subr.bf16.mxu0 0
    %921 = vmatpush1.bf16.xpose.msra.mxu0 0
    %922 = vmatprep.subr.bf16.mxu0 0
    %923 = vmatpush1.bf16.xpose.msra.mxu0 0
    %924 = vmatprep.subr.bf16.mxu0 0
    %925 = vmatpush1.bf16.xpose.msra.mxu0 0
    %926 = vmatprep.subr.bf16.mxu0 0
    %927 = vmatpush1.bf16.xpose.msra.mxu0 0
    %928 = vmatprep.subr.bf16.mxu0 0
    %929 = vmatpush1.bf16.xpose.msra.mxu0 0
    %930 = vmatprep.subr.bf16.mxu0 0
    %931 = vmatpush1.bf16.xpose.msra.mxu0 0
    %932 = vmatprep.subr.bf16.mxu0 0
    %933 = vmatpush1.bf16.xpose.msra.mxu0 0
    %934 = vmatprep.mubr.bf16.mxu0 0
    %935 = vmatmul.mubr.bf16.gmra.mrb[0].mxu0 %v897
    %v936 = vpop.f32.mrb[0].mxu0
    %v937 = vadd.f32 0.0, %v936
    %v938 = vpop.f32.mrb[0].mxu0
    %v939 = vpop.f32.mrb[0].mxu0
    %v940 = vadd.f32 0.0, %v939
    %v941 = vpop.f32.mrb[0].mxu0
    %942 = vdwg.mxu0
    %v943 = vsel %vm185, %v937, -inf
    %944 = vmax.xlane.f32.xlu0 %v943
    %v945 = vpop.xlane.xlu0 %944
    %v946 = vsel %vm185, %v940, -inf
    %947 = vmax.xlane.f32.xlu0 %v946
    %v948 = vpop.xlane.xlu0 %947
    %v949 = vsub.f32 %v937, %v945
    %v950 = vsub.f32 %v940, %v948
    %v951 = vmul.f32 %v949, 1.442695
    %v952 = vpow.pop %v951
    %v953 = vmul.f32 %v950, 1.442695
    %v954 = vpow.pop %v953
    %v955 = vsel %vm185, %v952, 0.0
    %956 = vadd.xlane.f32.xlu0 %v955
    %v957 = vpop.xlane.xlu0 %956
    %v958 = vsel %vm185, %v954, 0.0
    %959 = vadd.xlane.f32.xlu0 %v958
    %v960 = vpop.xlane.xlu0 %959
    %v961 = vrcp.pop %v957
    %v962 = vrcp.pop %v960
    %v963 = vmul.f32 %v952, %v961
    %v964 = vmul.f32 %v954, %v962
    %v965 = vpack.c.bf16 %v964, %v963
    %966 = vrot.lane.b32.xlu0 %v650, 48
    %v967 = vpop.permute.xlu0 %966
    %v970 = vsel %vm185, %v965, 0
    %972 = vmatprep.subr.bf16.mxu0 0
    %973 = vmatpush1.bf16.msra.mxu0 %v967
    %974 = vmatprep.subr.bf16.mxu0 0
    %975 = vmatpush1.bf16.msra.mxu0 0
    %976 = vmatprep.subr.bf16.mxu0 0
    %977 = vmatpush1.bf16.msra.mxu0 0
    %978 = vmatprep.subr.bf16.mxu0 0
    %979 = vmatpush1.bf16.msra.mxu0 0
    %980 = vmatprep.subr.bf16.mxu0 0
    %981 = vmatpush1.bf16.msra.mxu0 0
    %982 = vmatprep.subr.bf16.mxu0 0
    %983 = vmatpush1.bf16.msra.mxu0 0
    %984 = vmatprep.subr.bf16.mxu0 0
    %985 = vmatpush1.bf16.msra.mxu0 0
    %986 = vmatprep.subr.bf16.mxu0 0
    %987 = vmatpush1.bf16.msra.mxu0 0
    %988 = vmatprep.subr.bf16.mxu0 0
    %989 = vmatpush1.bf16.msra.mxu0 0
    %990 = vmatprep.subr.bf16.mxu0 0
    %991 = vmatpush1.bf16.msra.mxu0 0
    %992 = vmatprep.subr.bf16.mxu0 0
    %993 = vmatpush1.bf16.msra.mxu0 0
    %994 = vmatprep.subr.bf16.mxu0 0
    %995 = vmatpush1.bf16.msra.mxu0 0
    %996 = vmatprep.subr.bf16.mxu0 0
    %997 = vmatpush1.bf16.msra.mxu0 0
    %998 = vmatprep.subr.bf16.mxu0 0
    %999 = vmatpush1.bf16.msra.mxu0 0
    %1000 = vmatprep.subr.bf16.mxu0 0
    %1001 = vmatpush1.bf16.msra.mxu0 0
    %1002 = vmatprep.subr.bf16.mxu0 0
    %1003 = vmatpush1.bf16.msra.mxu0 0
    %1004 = vmatprep.mubr.bf16.mxu0 0
    %1005 = vmatmul.mubr.bf16.gmra.mrb[0].mxu0 %v970
    %v1006 = vpop.f32.mrb[0].mxu0
    %v1007 = vadd.f32 0.0, %v1006
    %v1008 = vpop.f32.mrb[0].mxu0
    %v1009 = vpop.f32.mrb[0].mxu0
    %v1010 = vadd.f32 0.0, %v1009
    %v1011 = vpop.f32.mrb[0].mxu0
    %1012 = vdwg.mxu0
    %1013 = vrot.lane.b32.xlu0 %v650, 104
    %v1014 = vpop.permute.xlu0 %1013
    %1015 = vrot.lane.b32.xlu0 %v650, 72
    %v1016 = vpop.permute.xlu0 %1015
    %v1018 = vsel %vm137, %v1014, 0
    %v1021 = vsel %vm137, %v1016, 0
    %1023 = vmatprep.subr.bf16.mxu0 0
    %1024 = vmatpush1.bf16.xpose.msra.mxu0 %v1021
    %1025 = vmatprep.subr.bf16.mxu0 0
    %1026 = vmatpush1.bf16.xpose.msra.mxu0 0
    %1027 = vmatprep.subr.bf16.mxu0 0
    %1028 = vmatpush1.bf16.xpose.msra.mxu0 0
    %1029 = vmatprep.subr.bf16.mxu0 0
    %1030 = vmatpush1.bf16.xpose.msra.mxu0 0
    %1031 = vmatprep.subr.bf16.mxu0 0
    %1032 = vmatpush1.bf16.xpose.msra.mxu0 0
    %1033 = vmatprep.subr.bf16.mxu0 0
    %1034 = vmatpush1.bf16.xpose.msra.mxu0 0
    %1035 = vmatprep.subr.bf16.mxu0 0
    %1036 = vmatpush1.bf16.xpose.msra.mxu0 0
    %1037 = vmatprep.subr.bf16.mxu0 0
    %1038 = vmatpush1.bf16.xpose.msra.mxu0 0
    %1039 = vmatprep.subr.bf16.mxu0 0
    %1040 = vmatpush1.bf16.xpose.msra.mxu0 0
    %1041 = vmatprep.subr.bf16.mxu0 0
    %1042 = vmatpush1.bf16.xpose.msra.mxu0 0
    %1043 = vmatprep.subr.bf16.mxu0 0
    %1044 = vmatpush1.bf16.xpose.msra.mxu0 0
    %1045 = vmatprep.subr.bf16.mxu0 0
    %1046 = vmatpush1.bf16.xpose.msra.mxu0 0
    %1047 = vmatprep.subr.bf16.mxu0 0
    %1048 = vmatpush1.bf16.xpose.msra.mxu0 0
    %1049 = vmatprep.subr.bf16.mxu0 0
    %1050 = vmatpush1.bf16.xpose.msra.mxu0 0
    %1051 = vmatprep.subr.bf16.mxu0 0
    %1052 = vmatpush1.bf16.xpose.msra.mxu0 0
    %1053 = vmatprep.subr.bf16.mxu0 0
    %1054 = vmatpush1.bf16.xpose.msra.mxu0 0
    %1055 = vmatprep.mubr.bf16.mxu0 0
    %1056 = vmatmul.mubr.bf16.gmra.mrb[0].mxu0 %v1018
    %v1057 = vpop.f32.mrb[0].mxu0
    %v1058 = vadd.f32 0.0, %v1057
    %v1059 = vpop.f32.mrb[0].mxu0
    %v1060 = vpop.f32.mrb[0].mxu0
    %v1061 = vadd.f32 0.0, %v1060
    %v1062 = vpop.f32.mrb[0].mxu0
    %1063 = vdwg.mxu0
    %v1064 = vsel %vm185, %v1058, -inf
    %1065 = vmax.xlane.f32.xlu0 %v1064
    %v1066 = vpop.xlane.xlu0 %1065
    %v1067 = vsel %vm185, %v1061, -inf
    %1068 = vmax.xlane.f32.xlu0 %v1067
    %v1069 = vpop.xlane.xlu0 %1068
    %v1070 = vsub.f32 %v1058, %v1066
    %v1071 = vsub.f32 %v1061, %v1069
    %v1072 = vmul.f32 %v1070, 1.442695
    %v1073 = vpow.pop %v1072
    %v1074 = vmul.f32 %v1071, 1.442695
    %v1075 = vpow.pop %v1074
    %v1076 = vsel %vm185, %v1073, 0.0
    %1077 = vadd.xlane.f32.xlu0 %v1076
    %v1078 = vpop.xlane.xlu0 %1077
    %v1079 = vsel %vm185, %v1075, 0.0
    %1080 = vadd.xlane.f32.xlu0 %v1079
    %v1081 = vpop.xlane.xlu0 %1080
    %v1082 = vrcp.pop %v1078
    %v1083 = vrcp.pop %v1081
    %v1084 = vmul.f32 %v1073, %v1082
    %v1085 = vmul.f32 %v1075, %v1083
    %v1086 = vpack.c.bf16 %v1085, %v1084
    %1087 = vrot.lane.b32.xlu0 %v650, 40
    %v1088 = vpop.permute.xlu0 %1087
    %v1091 = vsel %vm185, %v1086, 0
    %1093 = vmatprep.subr.bf16.mxu0 0
    %1094 = vmatpush1.bf16.msra.mxu0 %v1088
    %1095 = vmatprep.subr.bf16.mxu0 0
    %1096 = vmatpush1.bf16.msra.mxu0 0
    %1097 = vmatprep.subr.bf16.mxu0 0
    %1098 = vmatpush1.bf16.msra.mxu0 0
    %1099 = vmatprep.subr.bf16.mxu0 0
    %1100 = vmatpush1.bf16.msra.mxu0 0
    %1101 = vmatprep.subr.bf16.mxu0 0
    %1102 = vmatpush1.bf16.msra.mxu0 0
    %1103 = vmatprep.subr.bf16.mxu0 0
    %1104 = vmatpush1.bf16.msra.mxu0 0
    %1105 = vmatprep.subr.bf16.mxu0 0
    %1106 = vmatpush1.bf16.msra.mxu0 0
    %1107 = vmatprep.subr.bf16.mxu0 0
    %1108 = vmatpush1.bf16.msra.mxu0 0
    %1109 = vmatprep.subr.bf16.mxu0 0
    %1110 = vmatpush1.bf16.msra.mxu0 0
    %1111 = vmatprep.subr.bf16.mxu0 0
    %1112 = vmatpush1.bf16.msra.mxu0 0
    %1113 = vmatprep.subr.bf16.mxu0 0
    %1114 = vmatpush1.bf16.msra.mxu0 0
    %1115 = vmatprep.subr.bf16.mxu0 0
    %1116 = vmatpush1.bf16.msra.mxu0 0
    %1117 = vmatprep.subr.bf16.mxu0 0
    %1118 = vmatpush1.bf16.msra.mxu0 0
    %1119 = vmatprep.subr.bf16.mxu0 0
    %1120 = vmatpush1.bf16.msra.mxu0 0
    %1121 = vmatprep.subr.bf16.mxu0 0
    %1122 = vmatpush1.bf16.msra.mxu0 0
    %1123 = vmatprep.subr.bf16.mxu0 0
    %1124 = vmatpush1.bf16.msra.mxu0 0
    %1125 = vmatprep.mubr.bf16.mxu0 0
    %1126 = vmatmul.mubr.bf16.gmra.mrb[0].mxu0 %v1091
    %v1127 = vpop.f32.mrb[0].mxu0
    %v1128 = vadd.f32 0.0, %v1127
    %v1129 = vpop.f32.mrb[0].mxu0
    %v1130 = vpop.f32.mrb[0].mxu0
    %v1131 = vadd.f32 0.0, %v1130
    %v1132 = vpop.f32.mrb[0].mxu0
    %1133 = vdwg.mxu0
    %1136 = vrot.lane.b32.xlu0 %v886, 8
    %v1137 = vpop.permute.xlu0 %1136
    %1138 = vrot.lane.b32.xlu0 %v889, 8
    %v1139 = vpop.permute.xlu0 %1138
    %1144 = vrot.lane.b32.xlu0 %v1007, 16
    %v1145 = vpop.permute.xlu0 %1144
    %1146 = vrot.lane.b32.xlu0 %v1010, 16
    %v1147 = vpop.permute.xlu0 %1146
    %1152 = vrot.lane.b32.xlu0 %v1128, 24
    %v1153 = vpop.permute.xlu0 %1152
    %1154 = vrot.lane.b32.xlu0 %v1131, 24
    %v1155 = vpop.permute.xlu0 %1154
    %v1158 = vsel %vm137, %v765, %v1137
    %v1159 = vsel %vm137, %v768, %v1139
    %v1160 = vsel %vm185, %v1158, %v1145
    %v1161 = vsel %vm185, %v1159, %v1147
    %v1162 = vsel %vm647, %v1160, %v1153
    %v1163 = vsel %vm647, %v1161, %v1155
    %v1164 = vpack.c.bf16 %v649, %v648
    %v1165 = vpack.c.bf16 %v1163, %v1162
    %v1166 = vpack.c.bf16 %v42, %v41
    %v1167 = vpack.c.bf16 %v44, %v43
    %v1168 = vlaneseq
    %v1169 = vshrl.u32 %v1168, 7
    %v1170 = vsub.s32 0, %v1169
    %v1171 = vrot.slane %v62, %v1170
    %v1173 = vsel %vm77, %v1164, 0
    %v1176 = vsel %vm77, %v1165, 0
    %1178 = vmatprep.subr.bf16.mxu0 0
    %1179 = vmatpush1.bf16.msra.mxu0 %v1166
    %1180 = vmatprep.subr.bf16.mxu0 0
    %1181 = vmatpush1.bf16.msra.mxu0 %v1167
    %1182 = vmatprep.subr.bf16.mxu0 0
    %1183 = vmatpush1.bf16.msra.mxu0 0
    %1184 = vmatprep.subr.bf16.mxu0 0
    %1185 = vmatpush1.bf16.msra.mxu0 0
    %1186 = vmatprep.subr.bf16.mxu0 0
    %1187 = vmatpush1.bf16.msra.mxu0 0
    %1188 = vmatprep.subr.bf16.mxu0 0
    %1189 = vmatpush1.bf16.msra.mxu0 0
    %1190 = vmatprep.subr.bf16.mxu0 0
    %1191 = vmatpush1.bf16.msra.mxu0 0
    %1192 = vmatprep.subr.bf16.mxu0 0
    %1193 = vmatpush1.bf16.msra.mxu0 0
    %1194 = vmatprep.subr.bf16.mxu0 0
    %1195 = vmatpush1.bf16.msra.mxu0 0
    %1196 = vmatprep.subr.bf16.mxu0 0
    %1197 = vmatpush1.bf16.msra.mxu0 0
    %1198 = vmatprep.subr.bf16.mxu0 0
    %1199 = vmatpush1.bf16.msra.mxu0 0
    %1200 = vmatprep.subr.bf16.mxu0 0
    %1201 = vmatpush1.bf16.msra.mxu0 0
    %1202 = vmatprep.subr.bf16.mxu0 0
    %1203 = vmatpush1.bf16.msra.mxu0 0
    %1204 = vmatprep.subr.bf16.mxu0 0
    %1205 = vmatpush1.bf16.msra.mxu0 0
    %1206 = vmatprep.subr.bf16.mxu0 0
    %1207 = vmatpush1.bf16.msra.mxu0 0
    %1208 = vmatprep.subr.bf16.mxu0 0
    %1209 = vmatpush1.bf16.msra.mxu0 0
    %1210 = vmatprep.mubr.bf16.mxu0 0
    %1211 = vmatmul.mubr.bf16.gmra.mrb[0].mxu0 %v1173
    %v1212 = vpop.f32.mrb[0].mxu0
    %v1213 = vadd.f32 %v1171, %v1212
    %v1214 = vpop.f32.mrb[0].mxu0
    %v1215 = vpop.f32.mrb[0].mxu0
    %v1216 = vadd.f32 %v1171, %v1215
    %v1217 = vpop.f32.mrb[0].mxu0
    %1218 = vmatprep.mubr.bf16.mxu0 0
    %1219 = vmatmul.mubr.bf16.gmra.mrb[0].mxu0 %v1176
    %v1220 = vpop.f32.mrb[0].mxu0
    %v1221 = vadd.f32 %v1171, %v1220
    %v1222 = vpop.f32.mrb[0].mxu0
    %v1223 = vpop.f32.mrb[0].mxu0
    %v1224 = vadd.f32 %v1171, %v1223
    %v1225 = vpop.f32.mrb[0].mxu0
    %1226 = vdwg.mxu0
    %v1227 = vadd.f32 %v33, %v1213
    %v1228 = vadd.f32 %v34, %v1216
    %v1229 = vadd.f32 %v35, %v1221
    %v1230 = vadd.f32 %v36, %v1224
    %v1231 = vsel %vm77, %v1227, 0.0
    %1232 = vadd.xlane.f32.xlu0 %v1231
    %v1233 = vpop.xlane.xlu0 %1232
    %v1234 = vsel %vm77, %v1228, 0.0
    %1235 = vadd.xlane.f32.xlu0 %v1234
    %v1236 = vpop.xlane.xlu0 %1235
    %v1237 = vsel %vm77, %v1229, 0.0
    %1238 = vadd.xlane.f32.xlu0 %v1237
    %v1239 = vpop.xlane.xlu0 %1238
    %v1240 = vsel %vm77, %v1230, 0.0
    %1241 = vadd.xlane.f32.xlu0 %v1240
    %v1242 = vpop.xlane.xlu0 %1241
    %v1243 = vrcp.pop 32.0
    %v1244 = vmul.f32 %v1233, %v1243
    %v1245 = vmul.f32 %v1236, %v1243
    %v1246 = vmul.f32 %v1239, %v1243
    %v1247 = vmul.f32 %v1242, %v1243
    %v1248 = vsub.f32 %v1227, %v1244
    %v1249 = vsub.f32 %v1228, %v1245
    %v1250 = vsub.f32 %v1229, %v1246
    %v1251 = vsub.f32 %v1230, %v1247
    %v1252 = vmul.f32 %v1248, %v1248
    %v1253 = vmul.f32 %v1249, %v1249
    %v1254 = vmul.f32 %v1250, %v1250
    %v1255 = vmul.f32 %v1251, %v1251
    %v1256 = vsel %vm77, %v1252, 0.0
    %1257 = vadd.xlane.f32.xlu0 %v1256
    %v1258 = vpop.xlane.xlu0 %1257
    %v1259 = vsel %vm77, %v1253, 0.0
    %1260 = vadd.xlane.f32.xlu0 %v1259
    %v1261 = vpop.xlane.xlu0 %1260
    %v1262 = vsel %vm77, %v1254, 0.0
    %1263 = vadd.xlane.f32.xlu0 %v1262
    %v1264 = vpop.xlane.xlu0 %1263
    %v1265 = vsel %vm77, %v1255, 0.0
    %1266 = vadd.xlane.f32.xlu0 %v1265
    %v1267 = vpop.xlane.xlu0 %1266
    %v1268 = vmul.f32 %v1258, %v1243
    %v1269 = vmul.f32 %v1261, %v1243
    %v1270 = vmul.f32 %v1264, %v1243
    %v1271 = vmul.f32 %v1267, %v1243
    %v1272 = vadd.f32 %v1268, 1e-05
    %v1273 = vadd.f32 %v1269, 1e-05
    %v1274 = vadd.f32 %v1270, 1e-05
    %v1275 = vadd.f32 %v1271, 1e-05
    %v1276 = vrsqrt.pop %v1272
    %v1277 = vrsqrt.pop %v1273
    %v1278 = vrsqrt.pop %v1274
    %v1279 = vrsqrt.pop %v1275
    %v1280 = vmul.f32 %v1248, %v1276
    %v1281 = vmul.f32 %v1249, %v1277
    %v1282 = vmul.f32 %v1250, %v1278
    %v1283 = vmul.f32 %v1251, %v1279
    %v1284 = vlaneseq
    %v1285 = vshrl.u32 %v1284, 7
    %v1286 = vsub.s32 0, %v1285
    %v1287 = vrot.slane %v63, %v1286
    %v1288 = vmul.f32 %v1280, %v1287
    %v1289 = vmul.f32 %v1281, %v1287
    %v1290 = vmul.f32 %v1282, %v1287
    %v1291 = vmul.f32 %v1283, %v1287
    %v1292 = vlaneseq
    %v1293 = vshrl.u32 %v1292, 7
    %v1294 = vsub.s32 0, %v1293
    %v1295 = vrot.slane %v64, %v1294
    %v1296 = vadd.f32 %v1288, %v1295
    %v1297 = vadd.f32 %v1289, %v1295
    %v1298 = vadd.f32 %v1290, %v1295
    %v1299 = vadd.f32 %v1291, %v1295
    %v1300 = vpack.c.bf16 %v1297, %v1296
    %v1301 = vpack.c.bf16 %v1299, %v1298
    %v1302 = vpack.c.bf16 %v46, %v45
    %v1303 = vpack.c.bf16 %v48, %v47
    %v1304 = vlaneseq
    %v1305 = vshrl.u32 %v1304, 7
    %v1306 = vsub.s32 0, %v1305
    %v1307 = vrot.slane %v65, %v1306
    %v1309 = vsel %vm77, %v1300, 0
    %v1312 = vsel %vm77, %v1301, 0
    %1314 = vmatprep.subr.bf16.mxu0 0
    %1315 = vmatpush1.bf16.msra.mxu0 %v1302
    %1316 = vmatprep.subr.bf16.mxu0 0
    %1317 = vmatpush1.bf16.msra.mxu0 %v1303
    %1318 = vmatprep.subr.bf16.mxu0 0
    %1319 = vmatpush1.bf16.msra.mxu0 0
    %1320 = vmatprep.subr.bf16.mxu0 0
    %1321 = vmatpush1.bf16.msra.mxu0 0
    %1322 = vmatprep.subr.bf16.mxu0 0
    %1323 = vmatpush1.bf16.msra.mxu0 0
    %1324 = vmatprep.subr.bf16.mxu0 0
    %1325 = vmatpush1.bf16.msra.mxu0 0
    %1326 = vmatprep.subr.bf16.mxu0 0
    %1327 = vmatpush1.bf16.msra.mxu0 0
    %1328 = vmatprep.subr.bf16.mxu0 0
    %1329 = vmatpush1.bf16.msra.mxu0 0
    %1330 = vmatprep.subr.bf16.mxu0 0
    %1331 = vmatpush1.bf16.msra.mxu0 0
    %1332 = vmatprep.subr.bf16.mxu0 0
    %1333 = vmatpush1.bf16.msra.mxu0 0
    %1334 = vmatprep.subr.bf16.mxu0 0
    %1335 = vmatpush1.bf16.msra.mxu0 0
    %1336 = vmatprep.subr.bf16.mxu0 0
    %1337 = vmatpush1.bf16.msra.mxu0 0
    %1338 = vmatprep.subr.bf16.mxu0 0
    %1339 = vmatpush1.bf16.msra.mxu0 0
    %1340 = vmatprep.subr.bf16.mxu0 0
    %1341 = vmatpush1.bf16.msra.mxu0 0
    %1342 = vmatprep.subr.bf16.mxu0 0
    %1343 = vmatpush1.bf16.msra.mxu0 0
    %1344 = vmatprep.subr.bf16.mxu0 0
    %1345 = vmatpush1.bf16.msra.mxu0 0
    %1346 = vmatprep.mubr.bf16.mxu0 0
    %1347 = vmatmul.mubr.bf16.gmra.mrb[0].mxu0 %v1309
    %v1348 = vpop.f32.mrb[0].mxu0
    %v1349 = vadd.f32 %v1307, %v1348
    %v1350 = vpop.f32.mrb[0].mxu0
    %v1351 = vpop.f32.mrb[0].mxu0
    %v1352 = vadd.f32 %v1307, %v1351
    %v1353 = vpop.f32.mrb[0].mxu0
    %1354 = vmatprep.mubr.bf16.mxu0 0
    %1355 = vmatmul.mubr.bf16.gmra.mrb[0].mxu0 %v1312
    %v1356 = vpop.f32.mrb[0].mxu0
    %v1357 = vadd.f32 %v1307, %v1356
    %v1358 = vpop.f32.mrb[0].mxu0
    %v1359 = vpop.f32.mrb[0].mxu0
    %v1360 = vadd.f32 %v1307, %v1359
    %v1361 = vpop.f32.mrb[0].mxu0
    %1362 = vdwg.mxu0
    %v1363 = vmax.f32 %v1349, 0.0
    %v1364 = vmax.f32 %v1352, 0.0
    %v1365 = vmax.f32 %v1357, 0.0
    %v1366 = vmax.f32 %v1360, 0.0
    %v1367 = vpack.c.bf16 %v1364, %v1363
    %v1368 = vpack.c.bf16 %v1366, %v1365
    %v1369 = vpack.c.bf16 %v50, %v49
    %v1370 = vpack.c.bf16 %v52, %v51
    %v1371 = vpack.c.bf16 %v54, %v53
    %v1372 = vpack.c.bf16 %v56, %v55
    %v1373 = vlaneseq
    %v1374 = vshrl.u32 %v1373, 7
    %v1375 = vsub.s32 0, %v1374
    %v1376 = vrot.slane %v66, %v1375
    %vm1377 = vcmask 523264
    %v1379 = vsel %vm1377, %v1367, 0
    %v1382 = vsel %vm1377, %v1368, 0
    %1384 = vmatprep.subr.bf16.mxu0 0
    %1385 = vmatpush1.bf16.msra.mxu0 %v1369
    %1386 = vmatprep.subr.bf16.mxu0 0
    %1387 = vmatpush1.bf16.msra.mxu0 %v1370
    %1388 = vmatprep.subr.bf16.mxu0 0
    %1389 = vmatpush1.bf16.msra.mxu0 %v1371
    %1390 = vmatprep.subr.bf16.mxu0 0
    %1391 = vmatpush1.bf16.msra.mxu0 %v1372
    %1392 = vmatprep.subr.bf16.mxu0 0
    %1393 = vmatpush1.bf16.msra.mxu0 0
    %1394 = vmatprep.subr.bf16.mxu0 0
    %1395 = vmatpush1.bf16.msra.mxu0 0
    %1396 = vmatprep.subr.bf16.mxu0 0
    %1397 = vmatpush1.bf16.msra.mxu0 0
    %1398 = vmatprep.subr.bf16.mxu0 0
    %1399 = vmatpush1.bf16.msra.mxu0 0
    %1400 = vmatprep.subr.bf16.mxu0 0
    %1401 = vmatpush1.bf16.msra.mxu0 0
    %1402 = vmatprep.subr.bf16.mxu0 0
    %1403 = vmatpush1.bf16.msra.mxu0 0
    %1404 = vmatprep.subr.bf16.mxu0 0
    %1405 = vmatpush1.bf16.msra.mxu0 0
    %1406 = vmatprep.subr.bf16.mxu0 0
    %1407 = vmatpush1.bf16.msra.mxu0 0
    %1408 = vmatprep.subr.bf16.mxu0 0
    %1409 = vmatpush1.bf16.msra.mxu0 0
    %1410 = vmatprep.subr.bf16.mxu0 0
    %1411 = vmatpush1.bf16.msra.mxu0 0
    %1412 = vmatprep.subr.bf16.mxu0 0
    %1413 = vmatpush1.bf16.msra.mxu0 0
    %1414 = vmatprep.subr.bf16.mxu0 0
    %1415 = vmatpush1.bf16.msra.mxu0 0
    %1416 = vmatprep.mubr.bf16.mxu0 0
    %1417 = vmatmul.mubr.bf16.gmra.mrb[0].mxu0 %v1379
    %v1418 = vpop.f32.mrb[0].mxu0
    %v1419 = vadd.f32 %v1376, %v1418
    %v1420 = vpop.f32.mrb[0].mxu0
    %v1421 = vpop.f32.mrb[0].mxu0
    %v1422 = vadd.f32 %v1376, %v1421
    %v1423 = vpop.f32.mrb[0].mxu0
    %1424 = vmatprep.mubr.bf16.mxu0 0
    %1425 = vmatmul.mubr.bf16.gmra.mrb[0].mxu0 %v1382
    %v1426 = vpop.f32.mrb[0].mxu0
    %v1427 = vadd.f32 %v1376, %v1426
    %v1428 = vpop.f32.mrb[0].mxu0
    %v1429 = vpop.f32.mrb[0].mxu0
    %v1430 = vadd.f32 %v1376, %v1429
    %v1431 = vpop.f32.mrb[0].mxu0
    %1432 = vdwg.mxu0
    %v1433 = vadd.f32 %v1296, %v1419
    %v1434 = vadd.f32 %v1297, %v1422
    %v1435 = vadd.f32 %v1298, %v1427
    %v1436 = vadd.f32 %v1299, %v1430
    %v1437 = vsel %vm77, %v1433, 0.0
    %1438 = vadd.xlane.f32.xlu0 %v1437
    %v1439 = vpop.xlane.xlu0 %1438
    %v1440 = vsel %vm77, %v1434, 0.0
    %1441 = vadd.xlane.f32.xlu0 %v1440
    %v1442 = vpop.xlane.xlu0 %1441
    %v1443 = vsel %vm77, %v1435, 0.0
    %1444 = vadd.xlane.f32.xlu0 %v1443
    %v1445 = vpop.xlane.xlu0 %1444
    %v1446 = vsel %vm77, %v1436, 0.0
    %1447 = vadd.xlane.f32.xlu0 %v1446
    %v1448 = vpop.xlane.xlu0 %1447
    %v1449 = vmul.f32 %v1439, %v1243
    %v1450 = vmul.f32 %v1442, %v1243
    %v1451 = vmul.f32 %v1445, %v1243
    %v1452 = vmul.f32 %v1448, %v1243
    %v1453 = vsub.f32 %v1433, %v1449
    %v1454 = vsub.f32 %v1434, %v1450
    %v1455 = vsub.f32 %v1435, %v1451
    %v1456 = vsub.f32 %v1436, %v1452
    %v1457 = vmul.f32 %v1453, %v1453
    %v1458 = vmul.f32 %v1454, %v1454
    %v1459 = vmul.f32 %v1455, %v1455
    %v1460 = vmul.f32 %v1456, %v1456
    %v1461 = vsel %vm77, %v1457, 0.0
    %1462 = vadd.xlane.f32.xlu0 %v1461
    %v1463 = vpop.xlane.xlu0 %1462
    %v1464 = vsel %vm77, %v1458, 0.0
    %1465 = vadd.xlane.f32.xlu0 %v1464
    %v1466 = vpop.xlane.xlu0 %1465
    %v1467 = vsel %vm77, %v1459, 0.0
    %1468 = vadd.xlane.f32.xlu0 %v1467
    %v1469 = vpop.xlane.xlu0 %1468
    %v1470 = vsel %vm77, %v1460, 0.0
    %1471 = vadd.xlane.f32.xlu0 %v1470
    %v1472 = vpop.xlane.xlu0 %1471
    %v1473 = vmul.f32 %v1463, %v1243
    %v1474 = vmul.f32 %v1466, %v1243
    %v1475 = vmul.f32 %v1469, %v1243
    %v1476 = vmul.f32 %v1472, %v1243
    %v1477 = vadd.f32 %v1473, 1e-05
    %v1478 = vadd.f32 %v1474, 1e-05
    %v1479 = vadd.f32 %v1475, 1e-05
    %v1480 = vadd.f32 %v1476, 1e-05
    %v1481 = vrsqrt.pop %v1477
    %v1482 = vrsqrt.pop %v1478
    %v1483 = vrsqrt.pop %v1479
    %v1484 = vrsqrt.pop %v1480
    %v1485 = vmul.f32 %v1453, %v1481
    %v1486 = vmul.f32 %v1454, %v1482
    %v1487 = vmul.f32 %v1455, %v1483
    %v1488 = vmul.f32 %v1456, %v1484
    %v1489 = vlaneseq
    %v1490 = vshrl.u32 %v1489, 7
    %v1491 = vsub.s32 0, %v1490
    %v1492 = vrot.slane %v67, %v1491
    %v1493 = vmul.f32 %v1485, %v1492
    %v1494 = vmul.f32 %v1486, %v1492
    %v1495 = vmul.f32 %v1487, %v1492
    %v1496 = vmul.f32 %v1488, %v1492
    %v1497 = vlaneseq
    %v1498 = vshrl.u32 %v1497, 7
    %v1499 = vsub.s32 0, %v1498
    %v1500 = vrot.slane %v68, %v1499
    %v1501 = vadd.f32 %v1493, %v1500
    %v1502 = vadd.f32 %v1494, %v1500
    %v1503 = vadd.f32 %v1495, %v1500
    %v1504 = vadd.f32 %v1496, %v1500
    %v1505 = vpack.c.bf16 %v1502, %v1501
    %v1506 = vpack.c.bf16 %v1504, %v1503
    %v1507 = vpack.c.bf16 %v58, %v57
    %v1508 = vpack.c.bf16 %v60, %v59
    %v1510 = vsel %vm77, %v1505, 0
    %v1513 = vsel %vm77, %v1506, 0
    %1515 = vmatprep.subr.bf16.mxu0 0
    %1516 = vmatpush1.bf16.msra.mxu0 %v1507
    %1517 = vmatprep.subr.bf16.mxu0 0
    %1518 = vmatpush1.bf16.msra.mxu0 %v1508
    %1519 = vmatprep.subr.bf16.mxu0 0
    %1520 = vmatpush1.bf16.msra.mxu0 0
    %1521 = vmatprep.subr.bf16.mxu0 0
    %1522 = vmatpush1.bf16.msra.mxu0 0
    %1523 = vmatprep.subr.bf16.mxu0 0
    %1524 = vmatpush1.bf16.msra.mxu0 0
    %1525 = vmatprep.subr.bf16.mxu0 0
    %1526 = vmatpush1.bf16.msra.mxu0 0
    %1527 = vmatprep.subr.bf16.mxu0 0
    %1528 = vmatpush1.bf16.msra.mxu0 0
    %1529 = vmatprep.subr.bf16.mxu0 0
    %1530 = vmatpush1.bf16.msra.mxu0 0
    %1531 = vmatprep.subr.bf16.mxu0 0
    %1532 = vmatpush1.bf16.msra.mxu0 0
    %1533 = vmatprep.subr.bf16.mxu0 0
    %1534 = vmatpush1.bf16.msra.mxu0 0
    %1535 = vmatprep.subr.bf16.mxu0 0
    %1536 = vmatpush1.bf16.msra.mxu0 0
    %1537 = vmatprep.subr.bf16.mxu0 0
    %1538 = vmatpush1.bf16.msra.mxu0 0
    %1539 = vmatprep.subr.bf16.mxu0 0
    %1540 = vmatpush1.bf16.msra.mxu0 0
    %1541 = vmatprep.subr.bf16.mxu0 0
    %1542 = vmatpush1.bf16.msra.mxu0 0
    %1543 = vmatprep.subr.bf16.mxu0 0
    %1544 = vmatpush1.bf16.msra.mxu0 0
    %1545 = vmatprep.subr.bf16.mxu0 0
    %1546 = vmatpush1.bf16.msra.mxu0 0
    %1547 = vmatprep.mubr.bf16.mxu0 0
    %1548 = vmatmul.mubr.bf16.gmra.mrb[0].mxu0 %v1510
    %v1549 = vpop.f32.mrb[0].mxu0
    %v1550 = vadd.f32 0.0, %v1549
    %v1551 = vpop.f32.mrb[0].mxu0
    %v1552 = vpop.f32.mrb[0].mxu0
    %v1553 = vadd.f32 0.0, %v1552
    %v1554 = vpop.f32.mrb[0].mxu0
    %1555 = vmatprep.mubr.bf16.mxu0 0
    %1556 = vmatmul.mubr.bf16.gmra.mrb[0].mxu0 %v1513
    %v1557 = vpop.f32.mrb[0].mxu0
    %v1558 = vadd.f32 0.0, %v1557
    %v1559 = vpop.f32.mrb[0].mxu0
    %v1560 = vpop.f32.mrb[0].mxu0
    %v1561 = vadd.f32 0.0, %v1560
    %v1562 = vpop.f32.mrb[0].mxu0
    %1563 = vdwg.mxu0
    %v1564 = vsel %vm137, %v1550, -inf
    %1565 = vmax.xlane.f32.xlu0 %v1564
    %v1566 = vpop.xlane.xlu0 %1565
    %v1567 = vsel %vm137, %v1553, -inf
    %1568 = vmax.xlane.f32.xlu0 %v1567
    %v1569 = vpop.xlane.xlu0 %1568
    %v1570 = vsel %vm137, %v1558, -inf
    %1571 = vmax.xlane.f32.xlu0 %v1570
    %v1572 = vpop.xlane.xlu0 %1571
    %v1573 = vsel %vm137, %v1561, -inf
    %1574 = vmax.xlane.f32.xlu0 %v1573
    %v1575 = vpop.xlane.xlu0 %1574
    %v1576 = vsub.f32 %v1550, %v1566
    %v1577 = vsub.f32 %v1553, %v1569
    %v1578 = vsub.f32 %v1558, %v1572
    %v1579 = vsub.f32 %v1561, %v1575
    %v1580 = vmul.f32 %v1576, 1.442695
    %v1581 = vpow.pop %v1580
    %v1582 = vmul.f32 %v1577, 1.442695
    %v1583 = vpow.pop %v1582
    %v1584 = vmul.f32 %v1578, 1.442695
    %v1585 = vpow.pop %v1584
    %v1586 = vmul.f32 %v1579, 1.442695
    %v1587 = vpow.pop %v1586
    %v1588 = vsel %vm137, %v1581, 0.0
    %1589 = vadd.xlane.f32.xlu0 %v1588
    %v1590 = vpop.xlane.xlu0 %1589
    %v1591 = vsel %vm137, %v1583, 0.0
    %1592 = vadd.xlane.f32.xlu0 %v1591
    %v1593 = vpop.xlane.xlu0 %1592
    %v1594 = vsel %vm137, %v1585, 0.0
    %1595 = vadd.xlane.f32.xlu0 %v1594
    %v1596 = vpop.xlane.xlu0 %1595
    %v1597 = vsel %vm137, %v1587, 0.0
    %1598 = vadd.xlane.f32.xlu0 %v1597
    %v1599 = vpop.xlane.xlu0 %1598
    %v1600 = vrcp.pop %v1590
    %v1601 = vmul.f32 %v1581, %v1600
    %v1602 = vrcp.pop %v1593
    %v1603 = vmul.f32 %v1583, %v1602
    %v1604 = vrcp.pop %v1596
    %v1605 = vmul.f32 %v1585, %v1604
    %v1606 = vrcp.pop %v1599
    %v1607 = vmul.f32 %v1587, %v1606
    %1608 = vst.msk [vmem:[%s2] sm:$0xff] %vm137, %v1601
    %1609 = vst.msk [vmem:[%s2 + $0x8] sm:$0xff] %vm137, %v1603
    %1610 = vst.msk [vmem:[%s2 + $0x10] sm:$0xff] %vm137, %v1605
    %1611 = vst.msk [vmem:[%s2 + $0x18] sm:$0xff] %vm137, %v1607
    %v1612 = vpack.c.bf16 %v1603, %v1601
    %1613 = vxpose.xlu0.c.b16.start [1/8] %v1612, 128
    %1614 = vxpose.xlu0.c.b16.cont [2/8] 0, 128
    %1615 = vxpose.xlu0.c.b16.cont [3/8] 0, 128
    %1616 = vxpose.xlu0.c.b16.cont [4/8] 0, 128
    %1617 = vxpose.xlu0.c.b16.cont [5/8] 0, 128
    %1618 = vxpose.xlu0.c.b16.cont [6/8] 0, 128
    %1619 = vxpose.xlu0.c.b16.cont [7/8] 0, 128
    %1620 = vxpose.xlu0.c.b16.end [8/8] 0, 128
    %v1621 = vpop.trf.xlu0
    %v1622 = vpop.trf.xlu0
    %v1623 = vpop.trf.xlu0
    %v1624 = vpop.trf.xlu0
    %v1625 = vpop.trf.xlu0
    %v1626 = vpop.trf.xlu0
    %v1627 = vpop.trf.xlu0
    %v1628 = vpop.trf.xlu0
    %v1630 = vsel %vm185, %v1621, 0
    %1632 = vmatprep.subr.bf16.mxu0 0
    %1633 = vmatpush1.bf16.msra.mxu0 %v1505
    %1634 = vmatprep.subr.bf16.mxu0 0
    %1635 = vmatpush1.bf16.msra.mxu0 0
    %1636 = vmatprep.subr.bf16.mxu0 0
    %1637 = vmatpush1.bf16.msra.mxu0 0
    %1638 = vmatprep.subr.bf16.mxu0 0
    %1639 = vmatpush1.bf16.msra.mxu0 0
    %1640 = vmatprep.subr.bf16.mxu0 0
    %1641 = vmatpush1.bf16.msra.mxu0 0
    %1642 = vmatprep.subr.bf16.mxu0 0
    %1643 = vmatpush1.bf16.msra.mxu0 0
    %1644 = vmatprep.subr.bf16.mxu0 0
    %1645 = vmatpush1.bf16.msra.mxu0 0
    %1646 = vmatprep.subr.bf16.mxu0 0
    %1647 = vmatpush1.bf16.msra.mxu0 0
    %1648 = vmatprep.subr.bf16.mxu0 0
    %1649 = vmatpush1.bf16.msra.mxu0 0
    %1650 = vmatprep.subr.bf16.mxu0 0
    %1651 = vmatpush1.bf16.msra.mxu0 0
    %1652 = vmatprep.subr.bf16.mxu0 0
    %1653 = vmatpush1.bf16.msra.mxu0 0
    %1654 = vmatprep.subr.bf16.mxu0 0
    %1655 = vmatpush1.bf16.msra.mxu0 0
    %1656 = vmatprep.subr.bf16.mxu0 0
    %1657 = vmatpush1.bf16.msra.mxu0 0
    %1658 = vmatprep.subr.bf16.mxu0 0
    %1659 = vmatpush1.bf16.msra.mxu0 0
    %1660 = vmatprep.subr.bf16.mxu0 0
    %1661 = vmatpush1.bf16.msra.mxu0 0
    %1662 = vmatprep.subr.bf16.mxu0 0
    %1663 = vmatpush1.bf16.msra.mxu0 0
    %1664 = vmatprep.mubr.bf16.mxu0 0
    %1665 = vmatmul.mubr.bf16.gmra.mrb[0].mxu0 %v1630
    %v1666 = vpop.f32.mrb[0].mxu0
    %v1667 = vadd.f32 0.0, %v1666
    %v1668 = vpop.f32.mrb[0].mxu0
    %v1669 = vpop.f32.mrb[0].mxu0
    %v1670 = vpop.f32.mrb[0].mxu0
    %1671 = vdwg.mxu0
    %v1672 = vpack.c.bf16 %v1607, %v1605
    %1673 = vxpose.xlu0.c.b16.start [1/8] %v1672, 128
    %1674 = vxpose.xlu0.c.b16.cont [2/8] 0, 128
    %1675 = vxpose.xlu0.c.b16.cont [3/8] 0, 128
    %1676 = vxpose.xlu0.c.b16.cont [4/8] 0, 128
    %1677 = vxpose.xlu0.c.b16.cont [5/8] 0, 128
    %1678 = vxpose.xlu0.c.b16.cont [6/8] 0, 128
    %1679 = vxpose.xlu0.c.b16.cont [7/8] 0, 128
    %1680 = vxpose.xlu0.c.b16.end [8/8] 0, 128
    %v1681 = vpop.trf.xlu0
    %v1682 = vpop.trf.xlu0
    %v1683 = vpop.trf.xlu0
    %v1684 = vpop.trf.xlu0
    %v1685 = vpop.trf.xlu0
    %v1686 = vpop.trf.xlu0
    %v1687 = vpop.trf.xlu0
    %v1688 = vpop.trf.xlu0
    %v1690 = vsel %vm185, %v1681, 0
    %1692 = vmatprep.subr.bf16.mxu0 0
    %1693 = vmatpush1.bf16.msra.mxu0 %v1506
    %1694 = vmatprep.subr.bf16.mxu0 0
    %1695 = vmatpush1.bf16.msra.mxu0 0
    %1696 = vmatprep.subr.bf16.mxu0 0
    %1697 = vmatpush1.bf16.msra.mxu0 0
    %1698 = vmatprep.subr.bf16.mxu0 0
    %1699 = vmatpush1.bf16.msra.mxu0 0
    %1700 = vmatprep.subr.bf16.mxu0 0
    %1701 = vmatpush1.bf16.msra.mxu0 0
    %1702 = vmatprep.subr.bf16.mxu0 0
    %1703 = vmatpush1.bf16.msra.mxu0 0
    %1704 = vmatprep.subr.bf16.mxu0 0
    %1705 = vmatpush1.bf16.msra.mxu0 0
    %1706 = vmatprep.subr.bf16.mxu0 0
    %1707 = vmatpush1.bf16.msra.mxu0 0
    %1708 = vmatprep.subr.bf16.mxu0 0
    %1709 = vmatpush1.bf16.msra.mxu0 0
    %1710 = vmatprep.subr.bf16.mxu0 0
    %1711 = vmatpush1.bf16.msra.mxu0 0
    %1712 = vmatprep.subr.bf16.mxu0 0
    %1713 = vmatpush1.bf16.msra.mxu0 0
    %1714 = vmatprep.subr.bf16.mxu0 0
    %1715 = vmatpush1.bf16.msra.mxu0 0
    %1716 = vmatprep.subr.bf16.mxu0 0
    %1717 = vmatpush1.bf16.msra.mxu0 0
    %1718 = vmatprep.subr.bf16.mxu0 0
    %1719 = vmatpush1.bf16.msra.mxu0 0
    %1720 = vmatprep.subr.bf16.mxu0 0
    %1721 = vmatpush1.bf16.msra.mxu0 0
    %1722 = vmatprep.subr.bf16.mxu0 0
    %1723 = vmatpush1.bf16.msra.mxu0 0
    %1724 = vmatprep.mubr.bf16.mxu0 0
    %1725 = vmatmul.mubr.bf16.gmra.mrb[0].mxu0 %v1690
    %v1726 = vpop.f32.mrb[0].mxu0
    %v1727 = vadd.f32 0.0, %v1726
    %v1728 = vpop.f32.mrb[0].mxu0
    %v1729 = vpop.f32.mrb[0].mxu0
    %v1730 = vpop.f32.mrb[0].mxu0
    %1731 = vdwg.mxu0
    %v1732 = vld [vmem:[#allocation2 + $0xc8] sm:$0xff]
    %v1733 = vld [vmem:[#allocation2 + $0xd0] sm:$0xff]
    %v1734 = vld [vmem:[#allocation2 + $0xd8] sm:$0xff]
    %v1735 = vld [vmem:[#allocation2 + $0xe0] sm:$0xff]
    %v1736 = vld [vmem:[#allocation2 + $0xe8] sm:$0xff]
    %v1737 = vld [vmem:[#allocation2 + $0xf0] sm:$0xff]
    %v1738 = vld [vmem:[#allocation2 + $0xf8] sm:$0xff]
    %v1739 = vld [vmem:[#allocation2 + $0x100] sm:$0xff]
    %v1740 = vld [vmem:[#allocation2 + $0x108] sm:$0xff]
    %v1741 = vld [vmem:[#allocation2 + $0x110] sm:$0xff]
    %v1742 = vld [vmem:[#allocation2 + $0x118] sm:$0xff]
    %v1743 = vld [vmem:[#allocation2 + $0x120] sm:$0xff]
    %v1744 = vld [vmem:[#allocation2 + $0x128] sm:$0xff]
    %v1745 = vld [vmem:[#allocation2 + $0x130] sm:$0xff]
    %v1746 = vld [vmem:[#allocation2 + $0x138] sm:$0xff]
    %v1747 = vld [vmem:[#allocation2 + $0x140] sm:$0xff]
    %v1748 = vld [vmem:[#allocation2 + $0x148] sm:$0xff]
    %v1749 = vld [vmem:[#allocation2 + $0x150] sm:$0xff]
    %v1750 = vld [vmem:[#allocation2 + $0x158] sm:$0xff]
    %v1751 = vld [vmem:[#allocation2 + $0x160] sm:$0xff]
    %v1752 = vld [vmem:[#allocation2 + $0x168] sm:$0xff]
    %v1753 = vld [vmem:[#allocation2 + $0x170] sm:$0xff]
    %v1754 = vld [vmem:[#allocation2 + $0x178] sm:$0xff]
    %v1755 = vld [vmem:[#allocation2 + $0x180] sm:$0xff]
    %v1756 = vld [vmem:[#allocation2 + $0x188] sm:$0x1]
    %v1757 = vld [vmem:[#allocation2 + $0x189] sm:$0x1]
    %v1758 = vld [vmem:[#allocation2 + $0x18a] sm:$0x1]
    %v1759 = vld [vmem:[#allocation2 + $0x18b] sm:$0x1]
    %v1760 = vld [vmem:[#allocation2 + $0x18c] sm:$0x1]
    %v1761 = vld [vmem:[#allocation2 + $0x18d] sm:$0x1]
    %v1762 = vld [vmem:[#allocation2 + $0x18e] sm:$0x1]
    %v1763 = vld [vmem:[#allocation2 + $0x18f] sm:$0x1]
    %v1764 = vpack.c.bf16 %v1727, %v1667
    %v1765 = vpack.c.bf16 %v1733, %v1732
    %v1766 = vpack.c.bf16 %v1735, %v1734
    %v1767 = vlaneseq
    %v1768 = vshrl.u32 %v1767, 7
    %v1769 = vsub.s32 0, %v1768
    %v1770 = vrot.slane %v1756, %v1769
    %v1772 = vsel %vm77, %v1764, 0
    %1774 = vmatprep.subr.bf16.mxu0 0
    %1775 = vmatpush1.bf16.msra.mxu0 %v1765
    %1776 = vmatprep.subr.bf16.mxu0 0
    %1777 = vmatpush1.bf16.msra.mxu0 %v1766
    %1778 = vmatprep.subr.bf16.mxu0 0
    %1779 = vmatpush1.bf16.msra.mxu0 0
    %1780 = vmatprep.subr.bf16.mxu0 0
    %1781 = vmatpush1.bf16.msra.mxu0 0
    %1782 = vmatprep.subr.bf16.mxu0 0
    %1783 = vmatpush1.bf16.msra.mxu0 0
    %1784 = vmatprep.subr.bf16.mxu0 0
    %1785 = vmatpush1.bf16.msra.mxu0 0
    %1786 = vmatprep.subr.bf16.mxu0 0
    %1787 = vmatpush1.bf16.msra.mxu0 0
    %1788 = vmatprep.subr.bf16.mxu0 0
    %1789 = vmatpush1.bf16.msra.mxu0 0
    %1790 = vmatprep.subr.bf16.mxu0 0
    %1791 = vmatpush1.bf16.msra.mxu0 0
    %1792 = vmatprep.subr.bf16.mxu0 0
    %1793 = vmatpush1.bf16.msra.mxu0 0
    %1794 = vmatprep.subr.bf16.mxu0 0
    %1795 = vmatpush1.bf16.msra.mxu0 0
    %1796 = vmatprep.subr.bf16.mxu0 0
    %1797 = vmatpush1.bf16.msra.mxu0 0
    %1798 = vmatprep.subr.bf16.mxu0 0
    %1799 = vmatpush1.bf16.msra.mxu0 0
    %1800 = vmatprep.subr.bf16.mxu0 0
    %1801 = vmatpush1.bf16.msra.mxu0 0
    %1802 = vmatprep.subr.bf16.mxu0 0
    %1803 = vmatpush1.bf16.msra.mxu0 0
    %1804 = vmatprep.subr.bf16.mxu0 0
    %1805 = vmatpush1.bf16.msra.mxu0 0
    %1806 = vmatprep.mubr.bf16.mxu0 0
    %1807 = vmatmul.mubr.bf16.gmra.mrb[0].mxu0 %v1772
    %v1808 = vpop.f32.mrb[0].mxu0
    %v1809 = vadd.f32 %v1770, %v1808
    %v1810 = vpop.f32.mrb[0].mxu0
    %v1811 = vpop.f32.mrb[0].mxu0
    %v1812 = vadd.f32 %v1770, %v1811
    %v1813 = vpop.f32.mrb[0].mxu0
    %1814 = vdwg.mxu0
    %v1815 = vpack.c.bf16 %v1809, %v1809
    %1817 = vrot.lane.b32.xlu0 %v1815, 96
    %v1818 = vpop.permute.xlu0 %1817
    %v1820 = vsel %vm137, %v1815, 0
    %v1823 = vsel %vm137, %v1818, 0
    %1825 = vmatprep.subr.bf16.mxu0 0
    %1826 = vmatpush1.bf16.xpose.msra.mxu0 %v1823
    %1827 = vmatprep.subr.bf16.mxu0 0
    %1828 = vmatpush1.bf16.xpose.msra.mxu0 0
    %1829 = vmatprep.subr.bf16.mxu0 0
    %1830 = vmatpush1.bf16.xpose.msra.mxu0 0
    %1831 = vmatprep.subr.bf16.mxu0 0
    %1832 = vmatpush1.bf16.xpose.msra.mxu0 0
    %1833 = vmatprep.subr.bf16.mxu0 0
    %1834 = vmatpush1.bf16.xpose.msra.mxu0 0
    %1835 = vmatprep.subr.bf16.mxu0 0
    %1836 = vmatpush1.bf16.xpose.msra.mxu0 0
    %1837 = vmatprep.subr.bf16.mxu0 0
    %1838 = vmatpush1.bf16.xpose.msra.mxu0 0
    %1839 = vmatprep.subr.bf16.mxu0 0
    %1840 = vmatpush1.bf16.xpose.msra.mxu0 0
    %1841 = vmatprep.subr.bf16.mxu0 0
    %1842 = vmatpush1.bf16.xpose.msra.mxu0 0
    %1843 = vmatprep.subr.bf16.mxu0 0
    %1844 = vmatpush1.bf16.xpose.msra.mxu0 0
    %1845 = vmatprep.subr.bf16.mxu0 0
    %1846 = vmatpush1.bf16.xpose.msra.mxu0 0
    %1847 = vmatprep.subr.bf16.mxu0 0
    %1848 = vmatpush1.bf16.xpose.msra.mxu0 0
    %1849 = vmatprep.subr.bf16.mxu0 0
    %1850 = vmatpush1.bf16.xpose.msra.mxu0 0
    %1851 = vmatprep.subr.bf16.mxu0 0
    %1852 = vmatpush1.bf16.xpose.msra.mxu0 0
    %1853 = vmatprep.subr.bf16.mxu0 0
    %1854 = vmatpush1.bf16.xpose.msra.mxu0 0
    %1855 = vmatprep.subr.bf16.mxu0 0
    %1856 = vmatpush1.bf16.xpose.msra.mxu0 0
    %1857 = vmatprep.mubr.bf16.mxu0 0
    %1858 = vmatmul.mubr.bf16.gmra.mrb[0].mxu0 %v1820
    %v1859 = vpop.f32.mrb[0].mxu0
    %v1860 = vadd.f32 0.0, %v1859
    %v1861 = vpop.f32.mrb[0].mxu0
    %v1862 = vpop.f32.mrb[0].mxu0
    %v1863 = vpop.f32.mrb[0].mxu0
    %1864 = vdwg.mxu0
    %v1865 = vsel %vm137, %v1860, -inf
    %1866 = vmax.xlane.f32.xlu0 %v1865
    %v1867 = vpop.xlane.xlu0 %1866
    %v1868 = vsub.f32 %v1860, %v1867
    %v1869 = vmul.f32 %v1868, 1.442695
    %v1870 = vpow.pop %v1869
    %v1871 = vsel %vm137, %v1870, 0.0
    %1872 = vadd.xlane.f32.xlu0 %v1871
    %v1873 = vpop.xlane.xlu0 %1872
    %v1874 = vrcp.pop %v1873
    %v1875 = vmul.f32 %v1870, %v1874
    %v1876 = vpack.c.bf16 %v1875, %v1875
    %1877 = vrot.lane.b32.xlu0 %v1815, 64
    %v1878 = vpop.permute.xlu0 %1877
    %v1880 = vsel %vm137, %v1876, 0
    %vm1882 = vcmask 1043456
    %v1884 = vsel %vm1882, %v1878, 0
    %1886 = vmatprep.subr.bf16.mxu0 0
    %1887 = vmatpush1.bf16.msra.mxu0 %v1884
    %1888 = vmatprep.subr.bf16.mxu0 0
    %1889 = vmatpush1.bf16.msra.mxu0 0
    %1890 = vmatprep.subr.bf16.mxu0 0
    %1891 = vmatpush1.bf16.msra.mxu0 0
    %1892 = vmatprep.subr.bf16.mxu0 0
    %1893 = vmatpush1.bf16.msra.mxu0 0
    %1894 = vmatprep.subr.bf16.mxu0 0
    %1895 = vmatpush1.bf16.msra.mxu0 0
    %1896 = vmatprep.subr.bf16.mxu0 0
    %1897 = vmatpush1.bf16.msra.mxu0 0
    %1898 = vmatprep.subr.bf16.mxu0 0
    %1899 = vmatpush1.bf16.msra.mxu0 0
    %1900 = vmatprep.subr.bf16.mxu0 0
    %1901 = vmatpush1.bf16.msra.mxu0 0
    %1902 = vmatprep.subr.bf16.mxu0 0
    %1903 = vmatpush1.bf16.msra.mxu0 0
    %1904 = vmatprep.subr.bf16.mxu0 0
    %1905 = vmatpush1.bf16.msra.mxu0 0
    %1906 = vmatprep.subr.bf16.mxu0 0
    %1907 = vmatpush1.bf16.msra.mxu0 0
    %1908 = vmatprep.subr.bf16.mxu0 0
    %1909 = vmatpush1.bf16.msra.mxu0 0
    %1910 = vmatprep.subr.bf16.mxu0 0
    %1911 = vmatpush1.bf16.msra.mxu0 0
    %1912 = vmatprep.subr.bf16.mxu0 0
    %1913 = vmatpush1.bf16.msra.mxu0 0
    %1914 = vmatprep.subr.bf16.mxu0 0
    %1915 = vmatpush1.bf16.msra.mxu0 0
    %1916 = vmatprep.subr.bf16.mxu0 0
    %1917 = vmatpush1.bf16.msra.mxu0 0
    %1918 = vmatprep.mubr.bf16.mxu0 0
    %1919 = vmatmul.mubr.bf16.gmra.mrb[0].mxu0 %v1880
    %v1920 = vpop.f32.mrb[0].mxu0
    %v1921 = vadd.f32 0.0, %v1920
    %v1922 = vpop.f32.mrb[0].mxu0
    %v1923 = vpop.f32.mrb[0].mxu0
    %v1924 = vpop.f32.mrb[0].mxu0
    %1925 = vdwg.mxu0
    %1926 = vrot.lane.b32.xlu0 %v1815, 120
    %v1927 = vpop.permute.xlu0 %1926
    %1928 = vrot.lane.b32.xlu0 %v1815, 88
    %v1929 = vpop.permute.xlu0 %1928
    %v1931 = vsel %vm137, %v1927, 0
    %v1934 = vsel %vm137, %v1929, 0
    %1936 = vmatprep.subr.bf16.mxu0 0
    %1937 = vmatpush1.bf16.xpose.msra.mxu0 %v1934
    %1938 = vmatprep.subr.bf16.mxu0 0
    %1939 = vmatpush1.bf16.xpose.msra.mxu0 0
    %1940 = vmatprep.subr.bf16.mxu0 0
    %1941 = vmatpush1.bf16.xpose.msra.mxu0 0
    %1942 = vmatprep.subr.bf16.mxu0 0
    %1943 = vmatpush1.bf16.xpose.msra.mxu0 0
    %1944 = vmatprep.subr.bf16.mxu0 0
    %1945 = vmatpush1.bf16.xpose.msra.mxu0 0
    %1946 = vmatprep.subr.bf16.mxu0 0
    %1947 = vmatpush1.bf16.xpose.msra.mxu0 0
    %1948 = vmatprep.subr.bf16.mxu0 0
    %1949 = vmatpush1.bf16.xpose.msra.mxu0 0
    %1950 = vmatprep.subr.bf16.mxu0 0
    %1951 = vmatpush1.bf16.xpose.msra.mxu0 0
    %1952 = vmatprep.subr.bf16.mxu0 0
    %1953 = vmatpush1.bf16.xpose.msra.mxu0 0
    %1954 = vmatprep.subr.bf16.mxu0 0
    %1955 = vmatpush1.bf16.xpose.msra.mxu0 0
    %1956 = vmatprep.subr.bf16.mxu0 0
    %1957 = vmatpush1.bf16.xpose.msra.mxu0 0
    %1958 = vmatprep.subr.bf16.mxu0 0
    %1959 = vmatpush1.bf16.xpose.msra.mxu0 0
    %1960 = vmatprep.subr.bf16.mxu0 0
    %1961 = vmatpush1.bf16.xpose.msra.mxu0 0
    %1962 = vmatprep.subr.bf16.mxu0 0
    %1963 = vmatpush1.bf16.xpose.msra.mxu0 0
    %1964 = vmatprep.subr.bf16.mxu0 0
    %1965 = vmatpush1.bf16.xpose.msra.mxu0 0
    %1966 = vmatprep.subr.bf16.mxu0 0
    %1967 = vmatpush1.bf16.xpose.msra.mxu0 0
    %1968 = vmatprep.mubr.bf16.mxu0 0
    %1969 = vmatmul.mubr.bf16.gmra.mrb[0].mxu0 %v1931
    %v1970 = vpop.f32.mrb[0].mxu0
    %v1971 = vadd.f32 0.0, %v1970
    %v1972 = vpop.f32.mrb[0].mxu0
    %v1973 = vpop.f32.mrb[0].mxu0
    %v1974 = vpop.f32.mrb[0].mxu0
    %1975 = vdwg.mxu0
    %v1976 = vsel %vm137, %v1971, -inf
    %1977 = vmax.xlane.f32.xlu0 %v1976
    %v1978 = vpop.xlane.xlu0 %1977
    %v1979 = vsub.f32 %v1971, %v1978
    %v1980 = vmul.f32 %v1979, 1.442695
    %v1981 = vpow.pop %v1980
    %v1982 = vsel %vm137, %v1981, 0.0
    %1983 = vadd.xlane.f32.xlu0 %v1982
    %v1984 = vpop.xlane.xlu0 %1983
    %v1985 = vrcp.pop %v1984
    %v1986 = vmul.f32 %v1981, %v1985
    %v1987 = vpack.c.bf16 %v1986, %v1986
    %1988 = vrot.lane.b32.xlu0 %v1815, 56
    %v1989 = vpop.permute.xlu0 %1988
    %v1991 = vsel %vm137, %v1987, 0
    %v1994 = vsel %vm1882, %v1989, 0
    %1996 = vmatprep.subr.bf16.mxu0 0
    %1997 = vmatpush1.bf16.msra.mxu0 %v1994
    %1998 = vmatprep.subr.bf16.mxu0 0
    %1999 = vmatpush1.bf16.msra.mxu0 0
    %2000 = vmatprep.subr.bf16.mxu0 0
    %2001 = vmatpush1.bf16.msra.mxu0 0
    %2002 = vmatprep.subr.bf16.mxu0 0
    %2003 = vmatpush1.bf16.msra.mxu0 0
    %2004 = vmatprep.subr.bf16.mxu0 0
    %2005 = vmatpush1.bf16.msra.mxu0 0
    %2006 = vmatprep.subr.bf16.mxu0 0
    %2007 = vmatpush1.bf16.msra.mxu0 0
    %2008 = vmatprep.subr.bf16.mxu0 0
    %2009 = vmatpush1.bf16.msra.mxu0 0
    %2010 = vmatprep.subr.bf16.mxu0 0
    %2011 = vmatpush1.bf16.msra.mxu0 0
    %2012 = vmatprep.subr.bf16.mxu0 0
    %2013 = vmatpush1.bf16.msra.mxu0 0
    %2014 = vmatprep.subr.bf16.mxu0 0
    %2015 = vmatpush1.bf16.msra.mxu0 0
    %2016 = vmatprep.subr.bf16.mxu0 0
    %2017 = vmatpush1.bf16.msra.mxu0 0
    %2018 = vmatprep.subr.bf16.mxu0 0
    %2019 = vmatpush1.bf16.msra.mxu0 0
    %2020 = vmatprep.subr.bf16.mxu0 0
    %2021 = vmatpush1.bf16.msra.mxu0 0
    %2022 = vmatprep.subr.bf16.mxu0 0
    %2023 = vmatpush1.bf16.msra.mxu0 0
    %2024 = vmatprep.subr.bf16.mxu0 0
    %2025 = vmatpush1.bf16.msra.mxu0 0
    %2026 = vmatprep.subr.bf16.mxu0 0
    %2027 = vmatpush1.bf16.msra.mxu0 0
    %2028 = vmatprep.mubr.bf16.mxu0 0
    %2029 = vmatmul.mubr.bf16.gmra.mrb[0].mxu0 %v1991
    %v2030 = vpop.f32.mrb[0].mxu0
    %v2031 = vadd.f32 0.0, %v2030
    %v2032 = vpop.f32.mrb[0].mxu0
    %v2033 = vpop.f32.mrb[0].mxu0
    %v2034 = vpop.f32.mrb[0].mxu0
    %2035 = vdwg.mxu0
    %2036 = vrot.lane.b32.xlu0 %v1815, 112
    %v2037 = vpop.permute.xlu0 %2036
    %2038 = vrot.lane.b32.xlu0 %v1815, 80
    %v2039 = vpop.permute.xlu0 %2038
    %v2041 = vsel %vm137, %v2037, 0
    %v2044 = vsel %vm137, %v2039, 0
    %2046 = vmatprep.subr.bf16.mxu0 0
    %2047 = vmatpush1.bf16.xpose.msra.mxu0 %v2044
    %2048 = vmatprep.subr.bf16.mxu0 0
    %2049 = vmatpush1.bf16.xpose.msra.mxu0 0
    %2050 = vmatprep.subr.bf16.mxu0 0
    %2051 = vmatpush1.bf16.xpose.msra.mxu0 0
    %2052 = vmatprep.subr.bf16.mxu0 0
    %2053 = vmatpush1.bf16.xpose.msra.mxu0 0
    %2054 = vmatprep.subr.bf16.mxu0 0
    %2055 = vmatpush1.bf16.xpose.msra.mxu0 0
    %2056 = vmatprep.subr.bf16.mxu0 0
    %2057 = vmatpush1.bf16.xpose.msra.mxu0 0
    %2058 = vmatprep.subr.bf16.mxu0 0
    %2059 = vmatpush1.bf16.xpose.msra.mxu0 0
    %2060 = vmatprep.subr.bf16.mxu0 0
    %2061 = vmatpush1.bf16.xpose.msra.mxu0 0
    %2062 = vmatprep.subr.bf16.mxu0 0
    %2063 = vmatpush1.bf16.xpose.msra.mxu0 0
    %2064 = vmatprep.subr.bf16.mxu0 0
    %2065 = vmatpush1.bf16.xpose.msra.mxu0 0
    %2066 = vmatprep.subr.bf16.mxu0 0
    %2067 = vmatpush1.bf16.xpose.msra.mxu0 0
    %2068 = vmatprep.subr.bf16.mxu0 0
    %2069 = vmatpush1.bf16.xpose.msra.mxu0 0
    %2070 = vmatprep.subr.bf16.mxu0 0
    %2071 = vmatpush1.bf16.xpose.msra.mxu0 0
    %2072 = vmatprep.subr.bf16.mxu0 0
    %2073 = vmatpush1.bf16.xpose.msra.mxu0 0
    %2074 = vmatprep.subr.bf16.mxu0 0
    %2075 = vmatpush1.bf16.xpose.msra.mxu0 0
    %2076 = vmatprep.subr.bf16.mxu0 0
    %2077 = vmatpush1.bf16.xpose.msra.mxu0 0
    %2078 = vmatprep.mubr.bf16.mxu0 0
    %2079 = vmatmul.mubr.bf16.gmra.mrb[0].mxu0 %v2041
    %v2080 = vpop.f32.mrb[0].mxu0
    %v2081 = vadd.f32 0.0, %v2080
    %v2082 = vpop.f32.mrb[0].mxu0
    %v2083 = vpop.f32.mrb[0].mxu0
    %v2084 = vpop.f32.mrb[0].mxu0
    %2085 = vdwg.mxu0
    %v2086 = vsel %vm137, %v2081, -inf
    %2087 = vmax.xlane.f32.xlu0 %v2086
    %v2088 = vpop.xlane.xlu0 %2087
    %v2089 = vsub.f32 %v2081, %v2088
    %v2090 = vmul.f32 %v2089, 1.442695
    %v2091 = vpow.pop %v2090
    %v2092 = vsel %vm137, %v2091, 0.0
    %2093 = vadd.xlane.f32.xlu0 %v2092
    %v2094 = vpop.xlane.xlu0 %2093
    %v2095 = vrcp.pop %v2094
    %v2096 = vmul.f32 %v2091, %v2095
    %v2097 = vpack.c.bf16 %v2096, %v2096
    %2098 = vrot.lane.b32.xlu0 %v1815, 48
    %v2099 = vpop.permute.xlu0 %2098
    %v2101 = vsel %vm137, %v2097, 0
    %v2104 = vsel %vm1882, %v2099, 0
    %2106 = vmatprep.subr.bf16.mxu0 0
    %2107 = vmatpush1.bf16.msra.mxu0 %v2104
    %2108 = vmatprep.subr.bf16.mxu0 0
    %2109 = vmatpush1.bf16.msra.mxu0 0
    %2110 = vmatprep.subr.bf16.mxu0 0
    %2111 = vmatpush1.bf16.msra.mxu0 0
    %2112 = vmatprep.subr.bf16.mxu0 0
    %2113 = vmatpush1.bf16.msra.mxu0 0
    %2114 = vmatprep.subr.bf16.mxu0 0
    %2115 = vmatpush1.bf16.msra.mxu0 0
    %2116 = vmatprep.subr.bf16.mxu0 0
    %2117 = vmatpush1.bf16.msra.mxu0 0
    %2118 = vmatprep.subr.bf16.mxu0 0
    %2119 = vmatpush1.bf16.msra.mxu0 0
    %2120 = vmatprep.subr.bf16.mxu0 0
    %2121 = vmatpush1.bf16.msra.mxu0 0
    %2122 = vmatprep.subr.bf16.mxu0 0
    %2123 = vmatpush1.bf16.msra.mxu0 0
    %2124 = vmatprep.subr.bf16.mxu0 0
    %2125 = vmatpush1.bf16.msra.mxu0 0
    %2126 = vmatprep.subr.bf16.mxu0 0
    %2127 = vmatpush1.bf16.msra.mxu0 0
    %2128 = vmatprep.subr.bf16.mxu0 0
    %2129 = vmatpush1.bf16.msra.mxu0 0
    %2130 = vmatprep.subr.bf16.mxu0 0
    %2131 = vmatpush1.bf16.msra.mxu0 0
    %2132 = vmatprep.subr.bf16.mxu0 0
    %2133 = vmatpush1.bf16.msra.mxu0 0
    %2134 = vmatprep.subr.bf16.mxu0 0
    %2135 = vmatpush1.bf16.msra.mxu0 0
    %2136 = vmatprep.subr.bf16.mxu0 0
    %2137 = vmatpush1.bf16.msra.mxu0 0
    %2138 = vmatprep.mubr.bf16.mxu0 0
    %2139 = vmatmul.mubr.bf16.gmra.mrb[0].mxu0 %v2101
    %v2140 = vpop.f32.mrb[0].mxu0
    %v2141 = vadd.f32 0.0, %v2140
    %v2142 = vpop.f32.mrb[0].mxu0
    %v2143 = vpop.f32.mrb[0].mxu0
    %v2144 = vpop.f32.mrb[0].mxu0
    %2145 = vdwg.mxu0
    %2146 = vrot.lane.b32.xlu0 %v1815, 104
    %v2147 = vpop.permute.xlu0 %2146
    %2148 = vrot.lane.b32.xlu0 %v1815, 72
    %v2149 = vpop.permute.xlu0 %2148
    %v2151 = vsel %vm137, %v2147, 0
    %v2154 = vsel %vm137, %v2149, 0
    %2156 = vmatprep.subr.bf16.mxu0 0
    %2157 = vmatpush1.bf16.xpose.msra.mxu0 %v2154
    %2158 = vmatprep.subr.bf16.mxu0 0
    %2159 = vmatpush1.bf16.xpose.msra.mxu0 0
    %2160 = vmatprep.subr.bf16.mxu0 0
    %2161 = vmatpush1.bf16.xpose.msra.mxu0 0
    %2162 = vmatprep.subr.bf16.mxu0 0
    %2163 = vmatpush1.bf16.xpose.msra.mxu0 0
    %2164 = vmatprep.subr.bf16.mxu0 0
    %2165 = vmatpush1.bf16.xpose.msra.mxu0 0
    %2166 = vmatprep.subr.bf16.mxu0 0
    %2167 = vmatpush1.bf16.xpose.msra.mxu0 0
    %2168 = vmatprep.subr.bf16.mxu0 0
    %2169 = vmatpush1.bf16.xpose.msra.mxu0 0
    %2170 = vmatprep.subr.bf16.mxu0 0
    %2171 = vmatpush1.bf16.xpose.msra.mxu0 0
    %2172 = vmatprep.subr.bf16.mxu0 0
    %2173 = vmatpush1.bf16.xpose.msra.mxu0 0
    %2174 = vmatprep.subr.bf16.mxu0 0
    %2175 = vmatpush1.bf16.xpose.msra.mxu0 0
    %2176 = vmatprep.subr.bf16.mxu0 0
    %2177 = vmatpush1.bf16.xpose.msra.mxu0 0
    %2178 = vmatprep.subr.bf16.mxu0 0
    %2179 = vmatpush1.bf16.xpose.msra.mxu0 0
    %2180 = vmatprep.subr.bf16.mxu0 0
    %2181 = vmatpush1.bf16.xpose.msra.mxu0 0
    %2182 = vmatprep.subr.bf16.mxu0 0
    %2183 = vmatpush1.bf16.xpose.msra.mxu0 0
    %2184 = vmatprep.subr.bf16.mxu0 0
    %2185 = vmatpush1.bf16.xpose.msra.mxu0 0
    %2186 = vmatprep.subr.bf16.mxu0 0
    %2187 = vmatpush1.bf16.xpose.msra.mxu0 0
    %2188 = vmatprep.mubr.bf16.mxu0 0
    %2189 = vmatmul.mubr.bf16.gmra.mrb[0].mxu0 %v2151
    %v2190 = vpop.f32.mrb[0].mxu0
    %v2191 = vadd.f32 0.0, %v2190
    %v2192 = vpop.f32.mrb[0].mxu0
    %v2193 = vpop.f32.mrb[0].mxu0
    %v2194 = vpop.f32.mrb[0].mxu0
    %2195 = vdwg.mxu0
    %v2196 = vsel %vm137, %v2191, -inf
    %2197 = vmax.xlane.f32.xlu0 %v2196
    %v2198 = vpop.xlane.xlu0 %2197
    %v2199 = vsub.f32 %v2191, %v2198
    %v2200 = vmul.f32 %v2199, 1.442695
    %v2201 = vpow.pop %v2200
    %v2202 = vsel %vm137, %v2201, 0.0
    %2203 = vadd.xlane.f32.xlu0 %v2202
    %v2204 = vpop.xlane.xlu0 %2203
    %v2205 = vrcp.pop %v2204
    %v2206 = vmul.f32 %v2201, %v2205
    %v2207 = vpack.c.bf16 %v2206, %v2206
    %2208 = vrot.lane.b32.xlu0 %v1815, 40
    %v2209 = vpop.permute.xlu0 %2208
    %v2211 = vsel %vm137, %v2207, 0
    %v2214 = vsel %vm1882, %v2209, 0
    %2216 = vmatprep.subr.bf16.mxu0 0
    %2217 = vmatpush1.bf16.msra.mxu0 %v2214
    %2218 = vmatprep.subr.bf16.mxu0 0
    %2219 = vmatpush1.bf16.msra.mxu0 0
    %2220 = vmatprep.subr.bf16.mxu0 0
    %2221 = vmatpush1.bf16.msra.mxu0 0
    %2222 = vmatprep.subr.bf16.mxu0 0
    %2223 = vmatpush1.bf16.msra.mxu0 0
    %2224 = vmatprep.subr.bf16.mxu0 0
    %2225 = vmatpush1.bf16.msra.mxu0 0
    %2226 = vmatprep.subr.bf16.mxu0 0
    %2227 = vmatpush1.bf16.msra.mxu0 0
    %2228 = vmatprep.subr.bf16.mxu0 0
    %2229 = vmatpush1.bf16.msra.mxu0 0
    %2230 = vmatprep.subr.bf16.mxu0 0
    %2231 = vmatpush1.bf16.msra.mxu0 0
    %2232 = vmatprep.subr.bf16.mxu0 0
    %2233 = vmatpush1.bf16.msra.mxu0 0
    %2234 = vmatprep.subr.bf16.mxu0 0
    %2235 = vmatpush1.bf16.msra.mxu0 0
    %2236 = vmatprep.subr.bf16.mxu0 0
    %2237 = vmatpush1.bf16.msra.mxu0 0
    %2238 = vmatprep.subr.bf16.mxu0 0
    %2239 = vmatpush1.bf16.msra.mxu0 0
    %2240 = vmatprep.subr.bf16.mxu0 0
    %2241 = vmatpush1.bf16.msra.mxu0 0
    %2242 = vmatprep.subr.bf16.mxu0 0
    %2243 = vmatpush1.bf16.msra.mxu0 0
    %2244 = vmatprep.subr.bf16.mxu0 0
    %2245 = vmatpush1.bf16.msra.mxu0 0
    %2246 = vmatprep.subr.bf16.mxu0 0
    %2247 = vmatpush1.bf16.msra.mxu0 0
    %2248 = vmatprep.mubr.bf16.mxu0 0
    %2249 = vmatmul.mubr.bf16.gmra.mrb[0].mxu0 %v2211
    %v2250 = vpop.f32.mrb[0].mxu0
    %v2251 = vadd.f32 0.0, %v2250
    %v2252 = vpop.f32.mrb[0].mxu0
    %v2253 = vpop.f32.mrb[0].mxu0
    %v2254 = vpop.f32.mrb[0].mxu0
    %2255 = vdwg.mxu0
    %2257 = vrot.lane.b32.xlu0 %v2031, 8
    %v2258 = vpop.permute.xlu0 %2257
    %2261 = vrot.lane.b32.xlu0 %v2141, 16
    %v2262 = vpop.permute.xlu0 %2261
    %2265 = vrot.lane.b32.xlu0 %v2251, 24
    %v2266 = vpop.permute.xlu0 %2265
    %v2268 = vsel %vm137, %v1921, %v2258
    %v2269 = vsel %vm185, %v2268, %v2262
    %v2270 = vsel %vm647, %v2269, %v2266
    %v2271 = vpack.c.bf16 %v1812, %v1812
    %2273 = vrot.lane.b32.xlu0 %v2271, 96
    %v2274 = vpop.permute.xlu0 %2273
    %v2276 = vsel %vm137, %v2271, 0
    %v2279 = vsel %vm137, %v2274, 0
    %2281 = vmatprep.subr.bf16.mxu0 0
    %2282 = vmatpush1.bf16.xpose.msra.mxu0 %v2279
    %2283 = vmatprep.subr.bf16.mxu0 0
    %2284 = vmatpush1.bf16.xpose.msra.mxu0 0
    %2285 = vmatprep.subr.bf16.mxu0 0
    %2286 = vmatpush1.bf16.xpose.msra.mxu0 0
    %2287 = vmatprep.subr.bf16.mxu0 0
    %2288 = vmatpush1.bf16.xpose.msra.mxu0 0
    %2289 = vmatprep.subr.bf16.mxu0 0
    %2290 = vmatpush1.bf16.xpose.msra.mxu0 0
    %2291 = vmatprep.subr.bf16.mxu0 0
    %2292 = vmatpush1.bf16.xpose.msra.mxu0 0
    %2293 = vmatprep.subr.bf16.mxu0 0
    %2294 = vmatpush1.bf16.xpose.msra.mxu0 0
    %2295 = vmatprep.subr.bf16.mxu0 0
    %2296 = vmatpush1.bf16.xpose.msra.mxu0 0
    %2297 = vmatprep.subr.bf16.mxu0 0
    %2298 = vmatpush1.bf16.xpose.msra.mxu0 0
    %2299 = vmatprep.subr.bf16.mxu0 0
    %2300 = vmatpush1.bf16.xpose.msra.mxu0 0
    %2301 = vmatprep.subr.bf16.mxu0 0
    %2302 = vmatpush1.bf16.xpose.msra.mxu0 0
    %2303 = vmatprep.subr.bf16.mxu0 0
    %2304 = vmatpush1.bf16.xpose.msra.mxu0 0
    %2305 = vmatprep.subr.bf16.mxu0 0
    %2306 = vmatpush1.bf16.xpose.msra.mxu0 0
    %2307 = vmatprep.subr.bf16.mxu0 0
    %2308 = vmatpush1.bf16.xpose.msra.mxu0 0
    %2309 = vmatprep.subr.bf16.mxu0 0
    %2310 = vmatpush1.bf16.xpose.msra.mxu0 0
    %2311 = vmatprep.subr.bf16.mxu0 0
    %2312 = vmatpush1.bf16.xpose.msra.mxu0 0
    %2313 = vmatprep.mubr.bf16.mxu0 0
    %2314 = vmatmul.mubr.bf16.gmra.mrb[0].mxu0 %v2276
    %v2315 = vpop.f32.mrb[0].mxu0
    %v2316 = vadd.f32 0.0, %v2315
    %v2317 = vpop.f32.mrb[0].mxu0
    %v2318 = vpop.f32.mrb[0].mxu0
    %v2319 = vpop.f32.mrb[0].mxu0
    %2320 = vdwg.mxu0
    %v2321 = vsel %vm137, %v2316, -inf
    %2322 = vmax.xlane.f32.xlu0 %v2321
    %v2323 = vpop.xlane.xlu0 %2322
    %v2324 = vsub.f32 %v2316, %v2323
    %v2325 = vmul.f32 %v2324, 1.442695
    %v2326 = vpow.pop %v2325
    %v2327 = vsel %vm137, %v2326, 0.0
    %2328 = vadd.xlane.f32.xlu0 %v2327
    %v2329 = vpop.xlane.xlu0 %2328
    %v2330 = vrcp.pop %v2329
    %v2331 = vmul.f32 %v2326, %v2330
    %v2332 = vpack.c.bf16 %v2331, %v2331
    %2333 = vrot.lane.b32.xlu0 %v2271, 64
    %v2334 = vpop.permute.xlu0 %2333
    %v2336 = vsel %vm137, %v2332, 0
    %v2339 = vsel %vm1882, %v2334, 0
    %2341 = vmatprep.subr.bf16.mxu0 0
    %2342 = vmatpush1.bf16.msra.mxu0 %v2339
    %2343 = vmatprep.subr.bf16.mxu0 0
    %2344 = vmatpush1.bf16.msra.mxu0 0
    %2345 = vmatprep.subr.bf16.mxu0 0
    %2346 = vmatpush1.bf16.msra.mxu0 0
    %2347 = vmatprep.subr.bf16.mxu0 0
    %2348 = vmatpush1.bf16.msra.mxu0 0
    %2349 = vmatprep.subr.bf16.mxu0 0
    %2350 = vmatpush1.bf16.msra.mxu0 0
    %2351 = vmatprep.subr.bf16.mxu0 0
    %2352 = vmatpush1.bf16.msra.mxu0 0
    %2353 = vmatprep.subr.bf16.mxu0 0
    %2354 = vmatpush1.bf16.msra.mxu0 0
    %2355 = vmatprep.subr.bf16.mxu0 0
    %2356 = vmatpush1.bf16.msra.mxu0 0
    %2357 = vmatprep.subr.bf16.mxu0 0
    %2358 = vmatpush1.bf16.msra.mxu0 0
    %2359 = vmatprep.subr.bf16.mxu0 0
    %2360 = vmatpush1.bf16.msra.mxu0 0
    %2361 = vmatprep.subr.bf16.mxu0 0
    %2362 = vmatpush1.bf16.msra.mxu0 0
    %2363 = vmatprep.subr.bf16.mxu0 0
    %2364 = vmatpush1.bf16.msra.mxu0 0
    %2365 = vmatprep.subr.bf16.mxu0 0
    %2366 = vmatpush1.bf16.msra.mxu0 0
    %2367 = vmatprep.subr.bf16.mxu0 0
    %2368 = vmatpush1.bf16.msra.mxu0 0
    %2369 = vmatprep.subr.bf16.mxu0 0
    %2370 = vmatpush1.bf16.msra.mxu0 0
    %2371 = vmatprep.subr.bf16.mxu0 0
    %2372 = vmatpush1.bf16.msra.mxu0 0
    %2373 = vmatprep.mubr.bf16.mxu0 0
    %2374 = vmatmul.mubr.bf16.gmra.mrb[0].mxu0 %v2336
    %v2375 = vpop.f32.mrb[0].mxu0
    %v2376 = vadd.f32 0.0, %v2375
    %v2377 = vpop.f32.mrb[0].mxu0
    %v2378 = vpop.f32.mrb[0].mxu0
    %v2379 = vpop.f32.mrb[0].mxu0
    %2380 = vdwg.mxu0
    %2381 = vrot.lane.b32.xlu0 %v2271, 120
    %v2382 = vpop.permute.xlu0 %2381
    %2383 = vrot.lane.b32.xlu0 %v2271, 88
    %v2384 = vpop.permute.xlu0 %2383
    %v2386 = vsel %vm137, %v2382, 0
    %v2389 = vsel %vm137, %v2384, 0
    %2391 = vmatprep.subr.bf16.mxu0 0
    %2392 = vmatpush1.bf16.xpose.msra.mxu0 %v2389
    %2393 = vmatprep.subr.bf16.mxu0 0
    %2394 = vmatpush1.bf16.xpose.msra.mxu0 0
    %2395 = vmatprep.subr.bf16.mxu0 0
    %2396 = vmatpush1.bf16.xpose.msra.mxu0 0
    %2397 = vmatprep.subr.bf16.mxu0 0
    %2398 = vmatpush1.bf16.xpose.msra.mxu0 0
    %2399 = vmatprep.subr.bf16.mxu0 0
    %2400 = vmatpush1.bf16.xpose.msra.mxu0 0
    %2401 = vmatprep.subr.bf16.mxu0 0
    %2402 = vmatpush1.bf16.xpose.msra.mxu0 0
    %2403 = vmatprep.subr.bf16.mxu0 0
    %2404 = vmatpush1.bf16.xpose.msra.mxu0 0
    %2405 = vmatprep.subr.bf16.mxu0 0
    %2406 = vmatpush1.bf16.xpose.msra.mxu0 0
    %2407 = vmatprep.subr.bf16.mxu0 0
    %2408 = vmatpush1.bf16.xpose.msra.mxu0 0
    %2409 = vmatprep.subr.bf16.mxu0 0
    %2410 = vmatpush1.bf16.xpose.msra.mxu0 0
    %2411 = vmatprep.subr.bf16.mxu0 0
    %2412 = vmatpush1.bf16.xpose.msra.mxu0 0
    %2413 = vmatprep.subr.bf16.mxu0 0
    %2414 = vmatpush1.bf16.xpose.msra.mxu0 0
    %2415 = vmatprep.subr.bf16.mxu0 0
    %2416 = vmatpush1.bf16.xpose.msra.mxu0 0
    %2417 = vmatprep.subr.bf16.mxu0 0
    %2418 = vmatpush1.bf16.xpose.msra.mxu0 0
    %2419 = vmatprep.subr.bf16.mxu0 0
    %2420 = vmatpush1.bf16.xpose.msra.mxu0 0
    %2421 = vmatprep.subr.bf16.mxu0 0
    %2422 = vmatpush1.bf16.xpose.msra.mxu0 0
    %2423 = vmatprep.mubr.bf16.mxu0 0
    %2424 = vmatmul.mubr.bf16.gmra.mrb[0].mxu0 %v2386
    %v2425 = vpop.f32.mrb[0].mxu0
    %v2426 = vadd.f32 0.0, %v2425
    %v2427 = vpop.f32.mrb[0].mxu0
    %v2428 = vpop.f32.mrb[0].mxu0
    %v2429 = vpop.f32.mrb[0].mxu0
    %2430 = vdwg.mxu0
    %v2431 = vsel %vm137, %v2426, -inf
    %2432 = vmax.xlane.f32.xlu0 %v2431
    %v2433 = vpop.xlane.xlu0 %2432
    %v2434 = vsub.f32 %v2426, %v2433
    %v2435 = vmul.f32 %v2434, 1.442695
    %v2436 = vpow.pop %v2435
    %v2437 = vsel %vm137, %v2436, 0.0
    %2438 = vadd.xlane.f32.xlu0 %v2437
    %v2439 = vpop.xlane.xlu0 %2438
    %v2440 = vrcp.pop %v2439
    %v2441 = vmul.f32 %v2436, %v2440
    %v2442 = vpack.c.bf16 %v2441, %v2441
    %2443 = vrot.lane.b32.xlu0 %v2271, 56
    %v2444 = vpop.permute.xlu0 %2443
    %v2446 = vsel %vm137, %v2442, 0
    %v2449 = vsel %vm1882, %v2444, 0
    %2451 = vmatprep.subr.bf16.mxu0 0
    %2452 = vmatpush1.bf16.msra.mxu0 %v2449
    %2453 = vmatprep.subr.bf16.mxu0 0
    %2454 = vmatpush1.bf16.msra.mxu0 0
    %2455 = vmatprep.subr.bf16.mxu0 0
    %2456 = vmatpush1.bf16.msra.mxu0 0
    %2457 = vmatprep.subr.bf16.mxu0 0
    %2458 = vmatpush1.bf16.msra.mxu0 0
    %2459 = vmatprep.subr.bf16.mxu0 0
    %2460 = vmatpush1.bf16.msra.mxu0 0
    %2461 = vmatprep.subr.bf16.mxu0 0
    %2462 = vmatpush1.bf16.msra.mxu0 0
    %2463 = vmatprep.subr.bf16.mxu0 0
    %2464 = vmatpush1.bf16.msra.mxu0 0
    %2465 = vmatprep.subr.bf16.mxu0 0
    %2466 = vmatpush1.bf16.msra.mxu0 0
    %2467 = vmatprep.subr.bf16.mxu0 0
    %2468 = vmatpush1.bf16.msra.mxu0 0
    %2469 = vmatprep.subr.bf16.mxu0 0
    %2470 = vmatpush1.bf16.msra.mxu0 0
    %2471 = vmatprep.subr.bf16.mxu0 0
    %2472 = vmatpush1.bf16.msra.mxu0 0
    %2473 = vmatprep.subr.bf16.mxu0 0
    %2474 = vmatpush1.bf16.msra.mxu0 0
    %2475 = vmatprep.subr.bf16.mxu0 0
    %2476 = vmatpush1.bf16.msra.mxu0 0
    %2477 = vmatprep.subr.bf16.mxu0 0
    %2478 = vmatpush1.bf16.msra.mxu0 0
    %2479 = vmatprep.subr.bf16.mxu0 0
    %2480 = vmatpush1.bf16.msra.mxu0 0
    %2481 = vmatprep.subr.bf16.mxu0 0
    %2482 = vmatpush1.bf16.msra.mxu0 0
    %2483 = vmatprep.mubr.bf16.mxu0 0
    %2484 = vmatmul.mubr.bf16.gmra.mrb[0].mxu0 %v2446
    %v2485 = vpop.f32.mrb[0].mxu0
    %v2486 = vadd.f32 0.0, %v2485
    %v2487 = vpop.f32.mrb[0].mxu0
    %v2488 = vpop.f32.mrb[0].mxu0
    %v2489 = vpop.f32.mrb[0].mxu0
    %2490 = vdwg.mxu0
    %2491 = vrot.lane.b32.xlu0 %v2271, 112
    %v2492 = vpop.permute.xlu0 %2491
    %2493 = vrot.lane.b32.xlu0 %v2271, 80
    %v2494 = vpop.permute.xlu0 %2493
    %v2496 = vsel %vm137, %v2492, 0
    %v2499 = vsel %vm137, %v2494, 0
    %2501 = vmatprep.subr.bf16.mxu0 0
    %2502 = vmatpush1.bf16.xpose.msra.mxu0 %v2499
    %2503 = vmatprep.subr.bf16.mxu0 0
    %2504 = vmatpush1.bf16.xpose.msra.mxu0 0
    %2505 = vmatprep.subr.bf16.mxu0 0
    %2506 = vmatpush1.bf16.xpose.msra.mxu0 0
    %2507 = vmatprep.subr.bf16.mxu0 0
    %2508 = vmatpush1.bf16.xpose.msra.mxu0 0
    %2509 = vmatprep.subr.bf16.mxu0 0
    %2510 = vmatpush1.bf16.xpose.msra.mxu0 0
    %2511 = vmatprep.subr.bf16.mxu0 0
    %2512 = vmatpush1.bf16.xpose.msra.mxu0 0
    %2513 = vmatprep.subr.bf16.mxu0 0
    %2514 = vmatpush1.bf16.xpose.msra.mxu0 0
    %2515 = vmatprep.subr.bf16.mxu0 0
    %2516 = vmatpush1.bf16.xpose.msra.mxu0 0
    %2517 = vmatprep.subr.bf16.mxu0 0
    %2518 = vmatpush1.bf16.xpose.msra.mxu0 0
    %2519 = vmatprep.subr.bf16.mxu0 0
    %2520 = vmatpush1.bf16.xpose.msra.mxu0 0
    %2521 = vmatprep.subr.bf16.mxu0 0
    %2522 = vmatpush1.bf16.xpose.msra.mxu0 0
    %2523 = vmatprep.subr.bf16.mxu0 0
    %2524 = vmatpush1.bf16.xpose.msra.mxu0 0
    %2525 = vmatprep.subr.bf16.mxu0 0
    %2526 = vmatpush1.bf16.xpose.msra.mxu0 0
    %2527 = vmatprep.subr.bf16.mxu0 0
    %2528 = vmatpush1.bf16.xpose.msra.mxu0 0
    %2529 = vmatprep.subr.bf16.mxu0 0
    %2530 = vmatpush1.bf16.xpose.msra.mxu0 0
    %2531 = vmatprep.subr.bf16.mxu0 0
    %2532 = vmatpush1.bf16.xpose.msra.mxu0 0
    %2533 = vmatprep.mubr.bf16.mxu0 0
    %2534 = vmatmul.mubr.bf16.gmra.mrb[0].mxu0 %v2496
    %v2535 = vpop.f32.mrb[0].mxu0
    %v2536 = vadd.f32 0.0, %v2535
    %v2537 = vpop.f32.mrb[0].mxu0
    %v2538 = vpop.f32.mrb[0].mxu0
    %v2539 = vpop.f32.mrb[0].mxu0
    %2540 = vdwg.mxu0
    %v2541 = vsel %vm137, %v2536, -inf
    %2542 = vmax.xlane.f32.xlu0 %v2541
    %v2543 = vpop.xlane.xlu0 %2542
    %v2544 = vsub.f32 %v2536, %v2543
    %v2545 = vmul.f32 %v2544, 1.442695
    %v2546 = vpow.pop %v2545
    %v2547 = vsel %vm137, %v2546, 0.0
    %2548 = vadd.xlane.f32.xlu0 %v2547
    %v2549 = vpop.xlane.xlu0 %2548
    %v2550 = vrcp.pop %v2549
    %v2551 = vmul.f32 %v2546, %v2550
    %v2552 = vpack.c.bf16 %v2551, %v2551
    %2553 = vrot.lane.b32.xlu0 %v2271, 48
    %v2554 = vpop.permute.xlu0 %2553
    %v2556 = vsel %vm137, %v2552, 0
    %v2559 = vsel %vm1882, %v2554, 0
    %2561 = vmatprep.subr.bf16.mxu0 0
    %2562 = vmatpush1.bf16.msra.mxu0 %v2559
    %2563 = vmatprep.subr.bf16.mxu0 0
    %2564 = vmatpush1.bf16.msra.mxu0 0
    %2565 = vmatprep.subr.bf16.mxu0 0
    %2566 = vmatpush1.bf16.msra.mxu0 0
    %2567 = vmatprep.subr.bf16.mxu0 0
    %2568 = vmatpush1.bf16.msra.mxu0 0
    %2569 = vmatprep.subr.bf16.mxu0 0
    %2570 = vmatpush1.bf16.msra.mxu0 0
    %2571 = vmatprep.subr.bf16.mxu0 0
    %2572 = vmatpush1.bf16.msra.mxu0 0
    %2573 = vmatprep.subr.bf16.mxu0 0
    %2574 = vmatpush1.bf16.msra.mxu0 0
    %2575 = vmatprep.subr.bf16.mxu0 0
    %2576 = vmatpush1.bf16.msra.mxu0 0
    %2577 = vmatprep.subr.bf16.mxu0 0
    %2578 = vmatpush1.bf16.msra.mxu0 0
    %2579 = vmatprep.subr.bf16.mxu0 0
    %2580 = vmatpush1.bf16.msra.mxu0 0
    %2581 = vmatprep.subr.bf16.mxu0 0
    %2582 = vmatpush1.bf16.msra.mxu0 0
    %2583 = vmatprep.subr.bf16.mxu0 0
    %2584 = vmatpush1.bf16.msra.mxu0 0
    %2585 = vmatprep.subr.bf16.mxu0 0
    %2586 = vmatpush1.bf16.msra.mxu0 0
    %2587 = vmatprep.subr.bf16.mxu0 0
    %2588 = vmatpush1.bf16.msra.mxu0 0
    %2589 = vmatprep.subr.bf16.mxu0 0
    %2590 = vmatpush1.bf16.msra.mxu0 0
    %2591 = vmatprep.subr.bf16.mxu0 0
    %2592 = vmatpush1.bf16.msra.mxu0 0
    %2593 = vmatprep.mubr.bf16.mxu0 0
    %2594 = vmatmul.mubr.bf16.gmra.mrb[0].mxu0 %v2556
    %v2595 = vpop.f32.mrb[0].mxu0
    %v2596 = vadd.f32 0.0, %v2595
    %v2597 = vpop.f32.mrb[0].mxu0
    %v2598 = vpop.f32.mrb[0].mxu0
    %v2599 = vpop.f32.mrb[0].mxu0
    %2600 = vdwg.mxu0
    %2601 = vrot.lane.b32.xlu0 %v2271, 104
    %v2602 = vpop.permute.xlu0 %2601
    %2603 = vrot.lane.b32.xlu0 %v2271, 72
    %v2604 = vpop.permute.xlu0 %2603
    %v2606 = vsel %vm137, %v2602, 0
    %v2609 = vsel %vm137, %v2604, 0
    %2611 = vmatprep.subr.bf16.mxu0 0
    %2612 = vmatpush1.bf16.xpose.msra.mxu0 %v2609
    %2613 = vmatprep.subr.bf16.mxu0 0
    %2614 = vmatpush1.bf16.xpose.msra.mxu0 0
    %2615 = vmatprep.subr.bf16.mxu0 0
    %2616 = vmatpush1.bf16.xpose.msra.mxu0 0
    %2617 = vmatprep.subr.bf16.mxu0 0
    %2618 = vmatpush1.bf16.xpose.msra.mxu0 0
    %2619 = vmatprep.subr.bf16.mxu0 0
    %2620 = vmatpush1.bf16.xpose.msra.mxu0 0
    %2621 = vmatprep.subr.bf16.mxu0 0
    %2622 = vmatpush1.bf16.xpose.msra.mxu0 0
    %2623 = vmatprep.subr.bf16.mxu0 0
    %2624 = vmatpush1.bf16.xpose.msra.mxu0 0
    %2625 = vmatprep.subr.bf16.mxu0 0
    %2626 = vmatpush1.bf16.xpose.msra.mxu0 0
    %2627 = vmatprep.subr.bf16.mxu0 0
    %2628 = vmatpush1.bf16.xpose.msra.mxu0 0
    %2629 = vmatprep.subr.bf16.mxu0 0
    %2630 = vmatpush1.bf16.xpose.msra.mxu0 0
    %2631 = vmatprep.subr.bf16.mxu0 0
    %2632 = vmatpush1.bf16.xpose.msra.mxu0 0
    %2633 = vmatprep.subr.bf16.mxu0 0
    %2634 = vmatpush1.bf16.xpose.msra.mxu0 0
    %2635 = vmatprep.subr.bf16.mxu0 0
    %2636 = vmatpush1.bf16.xpose.msra.mxu0 0
    %2637 = vmatprep.subr.bf16.mxu0 0
    %2638 = vmatpush1.bf16.xpose.msra.mxu0 0
    %2639 = vmatprep.subr.bf16.mxu0 0
    %2640 = vmatpush1.bf16.xpose.msra.mxu0 0
    %2641 = vmatprep.subr.bf16.mxu0 0
    %2642 = vmatpush1.bf16.xpose.msra.mxu0 0
    %2643 = vmatprep.mubr.bf16.mxu0 0
    %2644 = vmatmul.mubr.bf16.gmra.mrb[0].mxu0 %v2606
    %v2645 = vpop.f32.mrb[0].mxu0
    %v2646 = vadd.f32 0.0, %v2645
    %v2647 = vpop.f32.mrb[0].mxu0
    %v2648 = vpop.f32.mrb[0].mxu0
    %v2649 = vpop.f32.mrb[0].mxu0
    %2650 = vdwg.mxu0
    %v2651 = vsel %vm137, %v2646, -inf
    %2652 = vmax.xlane.f32.xlu0 %v2651
    %v2653 = vpop.xlane.xlu0 %2652
    %v2654 = vsub.f32 %v2646, %v2653
    %v2655 = vmul.f32 %v2654, 1.442695
    %v2656 = vpow.pop %v2655
    %v2657 = vsel %vm137, %v2656, 0.0
    %2658 = vadd.xlane.f32.xlu0 %v2657
    %v2659 = vpop.xlane.xlu0 %2658
    %v2660 = vrcp.pop %v2659
    %v2661 = vmul.f32 %v2656, %v2660
    %v2662 = vpack.c.bf16 %v2661, %v2661
    %2663 = vrot.lane.b32.xlu0 %v2271, 40
    %v2664 = vpop.permute.xlu0 %2663
    %v2666 = vsel %vm137, %v2662, 0
    %v2669 = vsel %vm1882, %v2664, 0
    %2671 = vmatprep.subr.bf16.mxu0 0
    %2672 = vmatpush1.bf16.msra.mxu0 %v2669
    %2673 = vmatprep.subr.bf16.mxu0 0
    %2674 = vmatpush1.bf16.msra.mxu0 0
    %2675 = vmatprep.subr.bf16.mxu0 0
    %2676 = vmatpush1.bf16.msra.mxu0 0
    %2677 = vmatprep.subr.bf16.mxu0 0
    %2678 = vmatpush1.bf16.msra.mxu0 0
    %2679 = vmatprep.subr.bf16.mxu0 0
    %2680 = vmatpush1.bf16.msra.mxu0 0
    %2681 = vmatprep.subr.bf16.mxu0 0
    %2682 = vmatpush1.bf16.msra.mxu0 0
    %2683 = vmatprep.subr.bf16.mxu0 0
    %2684 = vmatpush1.bf16.msra.mxu0 0
    %2685 = vmatprep.subr.bf16.mxu0 0
    %2686 = vmatpush1.bf16.msra.mxu0 0
    %2687 = vmatprep.subr.bf16.mxu0 0
    %2688 = vmatpush1.bf16.msra.mxu0 0
    %2689 = vmatprep.subr.bf16.mxu0 0
    %2690 = vmatpush1.bf16.msra.mxu0 0
    %2691 = vmatprep.subr.bf16.mxu0 0
    %2692 = vmatpush1.bf16.msra.mxu0 0
    %2693 = vmatprep.subr.bf16.mxu0 0
    %2694 = vmatpush1.bf16.msra.mxu0 0
    %2695 = vmatprep.subr.bf16.mxu0 0
    %2696 = vmatpush1.bf16.msra.mxu0 0
    %2697 = vmatprep.subr.bf16.mxu0 0
    %2698 = vmatpush1.bf16.msra.mxu0 0
    %2699 = vmatprep.subr.bf16.mxu0 0
    %2700 = vmatpush1.bf16.msra.mxu0 0
    %2701 = vmatprep.subr.bf16.mxu0 0
    %2702 = vmatpush1.bf16.msra.mxu0 0
    %2703 = vmatprep.mubr.bf16.mxu0 0
    %2704 = vmatmul.mubr.bf16.gmra.mrb[0].mxu0 %v2666
    %v2705 = vpop.f32.mrb[0].mxu0
    %v2706 = vadd.f32 0.0, %v2705
    %v2707 = vpop.f32.mrb[0].mxu0
    %v2708 = vpop.f32.mrb[0].mxu0
    %v2709 = vpop.f32.mrb[0].mxu0
    %2710 = vdwg.mxu0
    %2712 = vrot.lane.b32.xlu0 %v2486, 8
    %v2713 = vpop.permute.xlu0 %2712
    %2716 = vrot.lane.b32.xlu0 %v2596, 16
    %v2717 = vpop.permute.xlu0 %2716
    %2720 = vrot.lane.b32.xlu0 %v2706, 24
    %v2721 = vpop.permute.xlu0 %2720
    %v2723 = vsel %vm137, %v2376, %v2713
    %v2724 = vsel %vm185, %v2723, %v2717
    %v2725 = vsel %vm647, %v2724, %v2721
    %v2726 = vpack.c.bf16 %v2725, %v2270
    %v2727 = vpack.c.bf16 %v1737, %v1736
    %v2728 = vpack.c.bf16 %v1739, %v1738
    %v2729 = vlaneseq
    %v2730 = vshrl.u32 %v2729, 7
    %v2731 = vsub.s32 0, %v2730
    %v2732 = vrot.slane %v1757, %v2731
    %v2734 = vsel %vm77, %v2726, 0
    %2736 = vmatprep.subr.bf16.mxu0 0
    %2737 = vmatpush1.bf16.msra.mxu0 %v2727
    %2738 = vmatprep.subr.bf16.mxu0 0
    %2739 = vmatpush1.bf16.msra.mxu0 %v2728
    %2740 = vmatprep.subr.bf16.mxu0 0
    %2741 = vmatpush1.bf16.msra.mxu0 0
    %2742 = vmatprep.subr.bf16.mxu0 0
    %2743 = vmatpush1.bf16.msra.mxu0 0
    %2744 = vmatprep.subr.bf16.mxu0 0
    %2745 = vmatpush1.bf16.msra.mxu0 0
    %2746 = vmatprep.subr.bf16.mxu0 0
    %2747 = vmatpush1.bf16.msra.mxu0 0
    %2748 = vmatprep.subr.bf16.mxu0 0
    %2749 = vmatpush1.bf16.msra.mxu0 0
    %2750 = vmatprep.subr.bf16.mxu0 0
    %2751 = vmatpush1.bf16.msra.mxu0 0
    %2752 = vmatprep.subr.bf16.mxu0 0
    %2753 = vmatpush1.bf16.msra.mxu0 0
    %2754 = vmatprep.subr.bf16.mxu0 0
    %2755 = vmatpush1.bf16.msra.mxu0 0
    %2756 = vmatprep.subr.bf16.mxu0 0
    %2757 = vmatpush1.bf16.msra.mxu0 0
    %2758 = vmatprep.subr.bf16.mxu0 0
    %2759 = vmatpush1.bf16.msra.mxu0 0
    %2760 = vmatprep.subr.bf16.mxu0 0
    %2761 = vmatpush1.bf16.msra.mxu0 0
    %2762 = vmatprep.subr.bf16.mxu0 0
    %2763 = vmatpush1.bf16.msra.mxu0 0
    %2764 = vmatprep.subr.bf16.mxu0 0
    %2765 = vmatpush1.bf16.msra.mxu0 0
    %2766 = vmatprep.subr.bf16.mxu0 0
    %2767 = vmatpush1.bf16.msra.mxu0 0
    %2768 = vmatprep.mubr.bf16.mxu0 0
    %2769 = vmatmul.mubr.bf16.gmra.mrb[0].mxu0 %v2734
    %v2770 = vpop.f32.mrb[0].mxu0
    %v2771 = vadd.f32 %v2732, %v2770
    %v2772 = vpop.f32.mrb[0].mxu0
    %v2773 = vpop.f32.mrb[0].mxu0
    %v2774 = vadd.f32 %v2732, %v2773
    %v2775 = vpop.f32.mrb[0].mxu0
    %2776 = vdwg.mxu0
    %v2777 = vadd.f32 %v1667, %v2771
    %v2778 = vadd.f32 %v1727, %v2774
    %v2779 = vsel %vm77, %v2777, 0.0
    %2780 = vadd.xlane.f32.xlu0 %v2779
    %v2781 = vpop.xlane.xlu0 %2780
    %v2782 = vsel %vm77, %v2778, 0.0
    %2783 = vadd.xlane.f32.xlu0 %v2782
    %v2784 = vpop.xlane.xlu0 %2783
    %v2785 = vmul.f32 %v2781, %v1243
    %v2786 = vmul.f32 %v2784, %v1243
    %v2787 = vsub.f32 %v2777, %v2785
    %v2788 = vsub.f32 %v2778, %v2786
    %v2789 = vmul.f32 %v2787, %v2787
    %v2790 = vmul.f32 %v2788, %v2788
    %v2791 = vsel %vm77, %v2789, 0.0
    %2792 = vadd.xlane.f32.xlu0 %v2791
    %v2793 = vpop.xlane.xlu0 %2792
    %v2794 = vsel %vm77, %v2790, 0.0
    %2795 = vadd.xlane.f32.xlu0 %v2794
    %v2796 = vpop.xlane.xlu0 %2795
    %v2797 = vmul.f32 %v2793, %v1243
    %v2798 = vmul.f32 %v2796, %v1243
    %v2799 = vadd.f32 %v2797, 1e-05
    %v2800 = vadd.f32 %v2798, 1e-05
    %v2801 = vrsqrt.pop %v2799
    %v2802 = vrsqrt.pop %v2800
    %v2803 = vmul.f32 %v2787, %v2801
    %v2804 = vmul.f32 %v2788, %v2802
    %v2805 = vlaneseq
    %v2806 = vshrl.u32 %v2805, 7
    %v2807 = vsub.s32 0, %v2806
    %v2808 = vrot.slane %v1758, %v2807
    %v2809 = vmul.f32 %v2803, %v2808
    %v2810 = vmul.f32 %v2804, %v2808
    %v2811 = vlaneseq
    %v2812 = vshrl.u32 %v2811, 7
    %v2813 = vsub.s32 0, %v2812
    %v2814 = vrot.slane %v1759, %v2813
    %v2815 = vadd.f32 %v2809, %v2814
    %v2816 = vadd.f32 %v2810, %v2814
    %v2817 = vpack.c.bf16 %v2816, %v2815
    %v2818 = vpack.c.bf16 %v1741, %v1740
    %v2819 = vpack.c.bf16 %v1743, %v1742
    %v2820 = vlaneseq
    %v2821 = vshrl.u32 %v2820, 7
    %v2822 = vsub.s32 0, %v2821
    %v2823 = vrot.slane %v1760, %v2822
    %v2825 = vsel %vm77, %v2817, 0
    %2827 = vmatprep.subr.bf16.mxu0 0
    %2828 = vmatpush1.bf16.msra.mxu0 %v2818
    %2829 = vmatprep.subr.bf16.mxu0 0
    %2830 = vmatpush1.bf16.msra.mxu0 %v2819
    %2831 = vmatprep.subr.bf16.mxu0 0
    %2832 = vmatpush1.bf16.msra.mxu0 0
    %2833 = vmatprep.subr.bf16.mxu0 0
    %2834 = vmatpush1.bf16.msra.mxu0 0
    %2835 = vmatprep.subr.bf16.mxu0 0
    %2836 = vmatpush1.bf16.msra.mxu0 0
    %2837 = vmatprep.subr.bf16.mxu0 0
    %2838 = vmatpush1.bf16.msra.mxu0 0
    %2839 = vmatprep.subr.bf16.mxu0 0
    %2840 = vmatpush1.bf16.msra.mxu0 0
    %2841 = vmatprep.subr.bf16.mxu0 0
    %2842 = vmatpush1.bf16.msra.mxu0 0
    %2843 = vmatprep.subr.bf16.mxu0 0
    %2844 = vmatpush1.bf16.msra.mxu0 0
    %2845 = vmatprep.subr.bf16.mxu0 0
    %2846 = vmatpush1.bf16.msra.mxu0 0
    %2847 = vmatprep.subr.bf16.mxu0 0
    %2848 = vmatpush1.bf16.msra.mxu0 0
    %2849 = vmatprep.subr.bf16.mxu0 0
    %2850 = vmatpush1.bf16.msra.mxu0 0
    %2851 = vmatprep.subr.bf16.mxu0 0
    %2852 = vmatpush1.bf16.msra.mxu0 0
    %2853 = vmatprep.subr.bf16.mxu0 0
    %2854 = vmatpush1.bf16.msra.mxu0 0
    %2855 = vmatprep.subr.bf16.mxu0 0
    %2856 = vmatpush1.bf16.msra.mxu0 0
    %2857 = vmatprep.subr.bf16.mxu0 0
    %2858 = vmatpush1.bf16.msra.mxu0 0
    %2859 = vmatprep.mubr.bf16.mxu0 0
    %2860 = vmatmul.mubr.bf16.gmra.mrb[0].mxu0 %v2825
    %v2861 = vpop.f32.mrb[0].mxu0
    %v2862 = vadd.f32 %v2823, %v2861
    %v2863 = vpop.f32.mrb[0].mxu0
    %v2864 = vpop.f32.mrb[0].mxu0
    %v2865 = vadd.f32 %v2823, %v2864
    %v2866 = vpop.f32.mrb[0].mxu0
    %2867 = vdwg.mxu0
    %v2868 = vmax.f32 %v2862, 0.0
    %v2869 = vmax.f32 %v2865, 0.0
    %v2870 = vpack.c.bf16 %v2869, %v2868
    %v2871 = vpack.c.bf16 %v1745, %v1744
    %v2872 = vpack.c.bf16 %v1747, %v1746
    %v2873 = vpack.c.bf16 %v1749, %v1748
    %v2874 = vpack.c.bf16 %v1751, %v1750
    %v2875 = vlaneseq
    %v2876 = vshrl.u32 %v2875, 7
    %v2877 = vsub.s32 0, %v2876
    %v2878 = vrot.slane %v1761, %v2877
    %v2880 = vsel %vm1377, %v2870, 0
    %2882 = vmatprep.subr.bf16.mxu0 0
    %2883 = vmatpush1.bf16.msra.mxu0 %v2871
    %2884 = vmatprep.subr.bf16.mxu0 0
    %2885 = vmatpush1.bf16.msra.mxu0 %v2872
    %2886 = vmatprep.subr.bf16.mxu0 0
    %2887 = vmatpush1.bf16.msra.mxu0 %v2873
    %2888 = vmatprep.subr.bf16.mxu0 0
    %2889 = vmatpush1.bf16.msra.mxu0 %v2874
    %2890 = vmatprep.subr.bf16.mxu0 0
    %2891 = vmatpush1.bf16.msra.mxu0 0
    %2892 = vmatprep.subr.bf16.mxu0 0
    %2893 = vmatpush1.bf16.msra.mxu0 0
    %2894 = vmatprep.subr.bf16.mxu0 0
    %2895 = vmatpush1.bf16.msra.mxu0 0
    %2896 = vmatprep.subr.bf16.mxu0 0
    %2897 = vmatpush1.bf16.msra.mxu0 0
    %2898 = vmatprep.subr.bf16.mxu0 0
    %2899 = vmatpush1.bf16.msra.mxu0 0
    %2900 = vmatprep.subr.bf16.mxu0 0
    %2901 = vmatpush1.bf16.msra.mxu0 0
    %2902 = vmatprep.subr.bf16.mxu0 0
    %2903 = vmatpush1.bf16.msra.mxu0 0
    %2904 = vmatprep.subr.bf16.mxu0 0
    %2905 = vmatpush1.bf16.msra.mxu0 0
    %2906 = vmatprep.subr.bf16.mxu0 0
    %2907 = vmatpush1.bf16.msra.mxu0 0
    %2908 = vmatprep.subr.bf16.mxu0 0
    %2909 = vmatpush1.bf16.msra.mxu0 0
    %2910 = vmatprep.subr.bf16.mxu0 0
    %2911 = vmatpush1.bf16.msra.mxu0 0
    %2912 = vmatprep.subr.bf16.mxu0 0
    %2913 = vmatpush1.bf16.msra.mxu0 0
    %2914 = vmatprep.mubr.bf16.mxu0 0
    %2915 = vmatmul.mubr.bf16.gmra.mrb[0].mxu0 %v2880
    %v2916 = vpop.f32.mrb[0].mxu0
    %v2917 = vadd.f32 %v2878, %v2916
    %v2918 = vpop.f32.mrb[0].mxu0
    %v2919 = vpop.f32.mrb[0].mxu0
    %v2920 = vadd.f32 %v2878, %v2919
    %v2921 = vpop.f32.mrb[0].mxu0
    %2922 = vdwg.mxu0
    %v2923 = vadd.f32 %v2815, %v2917
    %v2924 = vadd.f32 %v2816, %v2920
    %v2925 = vsel %vm77, %v2923, 0.0
    %2926 = vadd.xlane.f32.xlu0 %v2925
    %v2927 = vpop.xlane.xlu0 %2926
    %v2928 = vsel %vm77, %v2924, 0.0
    %2929 = vadd.xlane.f32.xlu0 %v2928
    %v2930 = vpop.xlane.xlu0 %2929
    %v2931 = vmul.f32 %v2927, %v1243
    %v2932 = vmul.f32 %v2930, %v1243
    %v2933 = vsub.f32 %v2923, %v2931
    %v2934 = vsub.f32 %v2924, %v2932
    %v2935 = vmul.f32 %v2933, %v2933
    %v2936 = vmul.f32 %v2934, %v2934
    %v2937 = vsel %vm77, %v2935, 0.0
    %2938 = vadd.xlane.f32.xlu0 %v2937
    %v2939 = vpop.xlane.xlu0 %2938
    %v2940 = vsel %vm77, %v2936, 0.0
    %2941 = vadd.xlane.f32.xlu0 %v2940
    %v2942 = vpop.xlane.xlu0 %2941
    %v2943 = vmul.f32 %v2939, %v1243
    %v2944 = vmul.f32 %v2942, %v1243
    %v2945 = vadd.f32 %v2943, 1e-05
    %v2946 = vadd.f32 %v2944, 1e-05
    %v2947 = vrsqrt.pop %v2945
    %v2948 = vrsqrt.pop %v2946
    %v2949 = vmul.f32 %v2933, %v2947
    %v2950 = vmul.f32 %v2934, %v2948
    %v2951 = vlaneseq
    %v2952 = vshrl.u32 %v2951, 7
    %v2953 = vsub.s32 0, %v2952
    %v2954 = vrot.slane %v1762, %v2953
    %v2955 = vmul.f32 %v2949, %v2954
    %v2956 = vmul.f32 %v2950, %v2954
    %v2957 = vlaneseq
    %v2958 = vshrl.u32 %v2957, 7
    %v2959 = vsub.s32 0, %v2958
    %v2960 = vrot.slane %v1763, %v2959
    %v2961 = vadd.f32 %v2955, %v2960
    %v2962 = vadd.f32 %v2956, %v2960
    %v2963 = vpack.c.bf16 %v2962, %v2961
    %v2964 = vpack.c.bf16 %v1753, %v1752
    %v2965 = vpack.c.bf16 %v1755, %v1754
    %v2967 = vsel %vm77, %v2963, 0
    %2969 = vmatprep.subr.bf16.mxu0 0
    %2970 = vmatpush1.bf16.msra.mxu0 %v2964
    %2971 = vmatprep.subr.bf16.mxu0 0
    %2972 = vmatpush1.bf16.msra.mxu0 %v2965
    %2973 = vmatprep.subr.bf16.mxu0 0
    %2974 = vmatpush1.bf16.msra.mxu0 0
    %2975 = vmatprep.subr.bf16.mxu0 0
    %2976 = vmatpush1.bf16.msra.mxu0 0
    %2977 = vmatprep.subr.bf16.mxu0 0
    %2978 = vmatpush1.bf16.msra.mxu0 0
    %2979 = vmatprep.subr.bf16.mxu0 0
    %2980 = vmatpush1.bf16.msra.mxu0 0
    %2981 = vmatprep.subr.bf16.mxu0 0
    %2982 = vmatpush1.bf16.msra.mxu0 0
    %2983 = vmatprep.subr.bf16.mxu0 0
    %2984 = vmatpush1.bf16.msra.mxu0 0
    %2985 = vmatprep.subr.bf16.mxu0 0
    %2986 = vmatpush1.bf16.msra.mxu0 0
    %2987 = vmatprep.subr.bf16.mxu0 0
    %2988 = vmatpush1.bf16.msra.mxu0 0
    %2989 = vmatprep.subr.bf16.mxu0 0
    %2990 = vmatpush1.bf16.msra.mxu0 0
    %2991 = vmatprep.subr.bf16.mxu0 0
    %2992 = vmatpush1.bf16.msra.mxu0 0
    %2993 = vmatprep.subr.bf16.mxu0 0
    %2994 = vmatpush1.bf16.msra.mxu0 0
    %2995 = vmatprep.subr.bf16.mxu0 0
    %2996 = vmatpush1.bf16.msra.mxu0 0
    %2997 = vmatprep.subr.bf16.mxu0 0
    %2998 = vmatpush1.bf16.msra.mxu0 0
    %2999 = vmatprep.subr.bf16.mxu0 0
    %3000 = vmatpush1.bf16.msra.mxu0 0
    %3001 = vmatprep.mubr.bf16.mxu0 0
    %3002 = vmatmul.mubr.bf16.gmra.mrb[0].mxu0 %v2967
    %v3003 = vpop.f32.mrb[0].mxu0
    %v3004 = vadd.f32 0.0, %v3003
    %v3005 = vpop.f32.mrb[0].mxu0
    %v3006 = vpop.f32.mrb[0].mxu0
    %v3007 = vadd.f32 0.0, %v3006
    %v3008 = vpop.f32.mrb[0].mxu0
    %3009 = vdwg.mxu0
    %vm3010 = vcmask 31744
    %v3011 = vsel %vm3010, %v3004, -inf
    %3012 = vmax.xlane.f32.xlu0 %v3011
    %v3013 = vpop.xlane.xlu0 %3012
    %v3014 = vsel %vm3010, %v3007, -inf
    %3015 = vmax.xlane.f32.xlu0 %v3014
    %v3016 = vpop.xlane.xlu0 %3015
    %v3017 = vsub.f32 %v3004, %v3013
    %v3018 = vsub.f32 %v3007, %v3016
    %v3019 = vmul.f32 %v3017, 1.442695
    %v3020 = vpow.pop %v3019
    %v3021 = vmul.f32 %v3018, 1.442695
    %v3022 = vpow.pop %v3021
    %v3023 = vsel %vm3010, %v3020, 0.0
    %3024 = vadd.xlane.f32.xlu0 %v3023
    %v3025 = vpop.xlane.xlu0 %3024
    %v3026 = vsel %vm3010, %v3022, 0.0
    %3027 = vadd.xlane.f32.xlu0 %v3026
    %v3028 = vpop.xlane.xlu0 %3027
    %v3029 = vrcp.pop %v3025
    %v3030 = vmul.f32 %v3020, %v3029
    %v3031 = vrcp.pop %v3028
    %v3032 = vmul.f32 %v3022, %v3031
    %3033 = vst.msk [vmem:[%s2 + $0x20] sm:$0xff] %vm3010, %v3030
    %3034 = vst.msk [vmem:[%s2 + $0x28] sm:$0xff] %vm3010, %v3032
    %v3035 = vpack.c.bf16 %v3030, %v3030
    %v3036 = vpack.c.bf16 %v2961, %v2961
    %3037 = vxpose.xlu0.c.b16.start [1/8] %v3035, 128
    %3038 = vxpose.xlu0.c.b16.cont [2/8] 0, 128
    %3039 = vxpose.xlu0.c.b16.cont [3/8] 0, 128
    %3040 = vxpose.xlu0.c.b16.cont [4/8] 0, 128
    %3041 = vxpose.xlu0.c.b16.cont [5/8] 0, 128
    %3042 = vxpose.xlu0.c.b16.cont [6/8] 0, 128
    %3043 = vxpose.xlu0.c.b16.cont [7/8] 0, 128
    %3044 = vxpose.xlu0.c.b16.end [8/8] 0, 128
    %v3045 = vpop.trf.xlu0
    %v3046 = vpop.trf.xlu0
    %v3047 = vpop.trf.xlu0
    %v3048 = vpop.trf.xlu0
    %v3049 = vpop.trf.xlu0
    %v3050 = vpop.trf.xlu0
    %v3051 = vpop.trf.xlu0
    %v3052 = vpop.trf.xlu0
    %v3054 = vsel %vm137, %v3045, 0
    %v3057 = vsel %vm1882, %v3036, 0
    %3059 = vmatprep.subr.bf16.mxu0 0
    %3060 = vmatpush1.bf16.msra.mxu0 %v3057
    %3061 = vmatprep.subr.bf16.mxu0 0
    %3062 = vmatpush1.bf16.msra.mxu0 0
    %3063 = vmatprep.subr.bf16.mxu0 0
    %3064 = vmatpush1.bf16.msra.mxu0 0
    %3065 = vmatprep.subr.bf16.mxu0 0
    %3066 = vmatpush1.bf16.msra.mxu0 0
    %3067 = vmatprep.subr.bf16.mxu0 0
    %3068 = vmatpush1.bf16.msra.mxu0 0
    %3069 = vmatprep.subr.bf16.mxu0 0
    %3070 = vmatpush1.bf16.msra.mxu0 0
    %3071 = vmatprep.subr.bf16.mxu0 0
    %3072 = vmatpush1.bf16.msra.mxu0 0
    %3073 = vmatprep.subr.bf16.mxu0 0
    %3074 = vmatpush1.bf16.msra.mxu0 0
    %3075 = vmatprep.subr.bf16.mxu0 0
    %3076 = vmatpush1.bf16.msra.mxu0 0
    %3077 = vmatprep.subr.bf16.mxu0 0
    %3078 = vmatpush1.bf16.msra.mxu0 0
    %3079 = vmatprep.subr.bf16.mxu0 0
    %3080 = vmatpush1.bf16.msra.mxu0 0
    %3081 = vmatprep.subr.bf16.mxu0 0
    %3082 = vmatpush1.bf16.msra.mxu0 0
    %3083 = vmatprep.subr.bf16.mxu0 0
    %3084 = vmatpush1.bf16.msra.mxu0 0
    %3085 = vmatprep.subr.bf16.mxu0 0
    %3086 = vmatpush1.bf16.msra.mxu0 0
    %3087 = vmatprep.subr.bf16.mxu0 0
    %3088 = vmatpush1.bf16.msra.mxu0 0
    %3089 = vmatprep.subr.bf16.mxu0 0
    %3090 = vmatpush1.bf16.msra.mxu0 0
    %3091 = vmatprep.mubr.bf16.mxu0 0
    %3092 = vmatmul.mubr.bf16.gmra.mrb[0].mxu0 %v3054
    %v3093 = vpop.f32.mrb[0].mxu0
    %v3094 = vadd.f32 0.0, %v3093
    %v3095 = vpop.f32.mrb[0].mxu0
    %v3096 = vpop.f32.mrb[0].mxu0
    %v3097 = vpop.f32.mrb[0].mxu0
    %3098 = vdwg.mxu0
    %v3099 = vpack.c.bf16 %v3032, %v3032
    %v3100 = vpack.c.bf16 %v2962, %v2962
    %3101 = vxpose.xlu0.c.b16.start [1/8] %v3099, 128
    %3102 = vxpose.xlu0.c.b16.cont [2/8] 0, 128
    %3103 = vxpose.xlu0.c.b16.cont [3/8] 0, 128
    %3104 = vxpose.xlu0.c.b16.cont [4/8] 0, 128
    %3105 = vxpose.xlu0.c.b16.cont [5/8] 0, 128
    %3106 = vxpose.xlu0.c.b16.cont [6/8] 0, 128
    %3107 = vxpose.xlu0.c.b16.cont [7/8] 0, 128
    %3108 = vxpose.xlu0.c.b16.end [8/8] 0, 128
    %v3109 = vpop.trf.xlu0
    %v3110 = vpop.trf.xlu0
    %v3111 = vpop.trf.xlu0
    %v3112 = vpop.trf.xlu0
    %v3113 = vpop.trf.xlu0
    %v3114 = vpop.trf.xlu0
    %v3115 = vpop.trf.xlu0
    %v3116 = vpop.trf.xlu0
    %v3118 = vsel %vm137, %v3109, 0
    %v3121 = vsel %vm1882, %v3100, 0
    %3123 = vmatprep.subr.bf16.mxu0 0
    %3124 = vmatpush1.bf16.msra.mxu0 %v3121
    %3125 = vmatprep.subr.bf16.mxu0 0
    %3126 = vmatpush1.bf16.msra.mxu0 0
    %3127 = vmatprep.subr.bf16.mxu0 0
    %3128 = vmatpush1.bf16.msra.mxu0 0
    %3129 = vmatprep.subr.bf16.mxu0 0
    %3130 = vmatpush1.bf16.msra.mxu0 0
    %3131 = vmatprep.subr.bf16.mxu0 0
    %3132 = vmatpush1.bf16.msra.mxu0 0
    %3133 = vmatprep.subr.bf16.mxu0 0
    %3134 = vmatpush1.bf16.msra.mxu0 0
    %3135 = vmatprep.subr.bf16.mxu0 0
    %3136 = vmatpush1.bf16.msra.mxu0 0
    %3137 = vmatprep.subr.bf16.mxu0 0
    %3138 = vmatpush1.bf16.msra.mxu0 0
    %3139 = vmatprep.subr.bf16.mxu0 0
    %3140 = vmatpush1.bf16.msra.mxu0 0
    %3141 = vmatprep.subr.bf16.mxu0 0
    %3142 = vmatpush1.bf16.msra.mxu0 0
    %3143 = vmatprep.subr.bf16.mxu0 0
    %3144 = vmatpush1.bf16.msra.mxu0 0
    %3145 = vmatprep.subr.bf16.mxu0 0
    %3146 = vmatpush1.bf16.msra.mxu0 0
    %3147 = vmatprep.subr.bf16.mxu0 0
    %3148 = vmatpush1.bf16.msra.mxu0 0
    %3149 = vmatprep.subr.bf16.mxu0 0
    %3150 = vmatpush1.bf16.msra.mxu0 0
    %3151 = vmatprep.subr.bf16.mxu0 0
    %3152 = vmatpush1.bf16.msra.mxu0 0
    %3153 = vmatprep.subr.bf16.mxu0 0
    %3154 = vmatpush1.bf16.msra.mxu0 0
    %3155 = vmatprep.mubr.bf16.mxu0 0
    %3156 = vmatmul.mubr.bf16.gmra.mrb[0].mxu0 %v3118
    %v3157 = vpop.f32.mrb[0].mxu0
    %v3158 = vadd.f32 0.0, %v3157
    %v3159 = vpop.f32.mrb[0].mxu0
    %v3160 = vpop.f32.mrb[0].mxu0
    %v3161 = vpop.f32.mrb[0].mxu0
    %3162 = vdwg.mxu0
    %v3164 = vrot.slane %v3158, 4
    %v3166 = vsel %vm1882, %v3094, %v3164
    %v3167 = vld [vmem:[#allocation2 + $0x190] sm:$0xff]
    %v3168 = vld [vmem:[#allocation2 + $0x198] sm:$0xff]
    %v3169 = vld [vmem:[#allocation2 + $0x1a0] sm:$0xff]
    %v3170 = vld [vmem:[#allocation2 + $0x1a8] sm:$0xff]
    %v3171 = vld [vmem:[#allocation2 + $0x1b0] sm:$0xff]
    %v3172 = vld [vmem:[#allocation2 + $0x1b8] sm:$0xff]
    %v3173 = vld [vmem:[#allocation2 + $0x1c0] sm:$0xff]
    %v3174 = vld [vmem:[#allocation2 + $0x1c8] sm:$0xff]
    %v3175 = vld [vmem:[#allocation2 + $0x1d0] sm:$0xff]
    %v3176 = vld [vmem:[#allocation2 + $0x1d8] sm:$0xff]
    %v3177 = vld [vmem:[#allocation2 + $0x1e0] sm:$0xff]
    %v3178 = vld [vmem:[#allocation2 + $0x1e8] sm:$0xff]
    %v3179 = vld [vmem:[#allocation2 + $0x1f0] sm:$0xff]
    %v3180 = vld [vmem:[#allocation2 + $0x1f8] sm:$0xff]
    %v3181 = vld [vmem:[#allocation2 + $0x200] sm:$0xff]
    %v3182 = vld [vmem:[#allocation2 + $0x208] sm:$0xff]
    %v3183 = vld [vmem:[#allocation2 + $0x210] sm:$0xff]
    %v3184 = vld [vmem:[#allocation2 + $0x218] sm:$0xff]
    %v3185 = vld [vmem:[#allocation2 + $0x220] sm:$0xff]
    %v3186 = vld [vmem:[#allocation2 + $0x228] sm:$0xff]
    %v3187 = vld [vmem:[#allocation2 + $0x230] sm:$0x1]
    %v3188 = vld [vmem:[#allocation2 + $0x231] sm:$0x1]
    %v3189 = vld [vmem:[#allocation2 + $0x232] sm:$0x1]
    %v3190 = vld [vmem:[#allocation2 + $0x233] sm:$0x1]
    %v3191 = vpack.c.bf16 %v3166, %v3166
    %v3192 = vpack.c.bf16 %v3168, %v3167
    %v3193 = vpack.c.bf16 %v3170, %v3169
    %v3194 = vlaneseq
    %v3195 = vshrl.u32 %v3194, 7
    %v3196 = vsub.s32 0, %v3195
    %v3197 = vrot.slane %v3187, %v3196
    %v3199 = vsel %vm77, %v3191, 0
    %3201 = vmatprep.subr.bf16.mxu0 0
    %3202 = vmatpush1.bf16.msra.mxu0 %v3192
    %3203 = vmatprep.subr.bf16.mxu0 0
    %3204 = vmatpush1.bf16.msra.mxu0 %v3193
    %3205 = vmatprep.subr.bf16.mxu0 0
    %3206 = vmatpush1.bf16.msra.mxu0 0
    %3207 = vmatprep.subr.bf16.mxu0 0
    %3208 = vmatpush1.bf16.msra.mxu0 0
    %3209 = vmatprep.subr.bf16.mxu0 0
    %3210 = vmatpush1.bf16.msra.mxu0 0
    %3211 = vmatprep.subr.bf16.mxu0 0
    %3212 = vmatpush1.bf16.msra.mxu0 0
    %3213 = vmatprep.subr.bf16.mxu0 0
    %3214 = vmatpush1.bf16.msra.mxu0 0
    %3215 = vmatprep.subr.bf16.mxu0 0
    %3216 = vmatpush1.bf16.msra.mxu0 0
    %3217 = vmatprep.subr.bf16.mxu0 0
    %3218 = vmatpush1.bf16.msra.mxu0 0
    %3219 = vmatprep.subr.bf16.mxu0 0
    %3220 = vmatpush1.bf16.msra.mxu0 0
    %3221 = vmatprep.subr.bf16.mxu0 0
    %3222 = vmatpush1.bf16.msra.mxu0 0
    %3223 = vmatprep.subr.bf16.mxu0 0
    %3224 = vmatpush1.bf16.msra.mxu0 0
    %3225 = vmatprep.subr.bf16.mxu0 0
    %3226 = vmatpush1.bf16.msra.mxu0 0
    %3227 = vmatprep.subr.bf16.mxu0 0
    %3228 = vmatpush1.bf16.msra.mxu0 0
    %3229 = vmatprep.subr.bf16.mxu0 0
    %3230 = vmatpush1.bf16.msra.mxu0 0
    %3231 = vmatprep.subr.bf16.mxu0 0
    %3232 = vmatpush1.bf16.msra.mxu0 0
    %3233 = vmatprep.mubr.bf16.mxu0 0
    %3234 = vmatmul.mubr.bf16.gmra.mrb[0].mxu0 %v3199
    %v3235 = vpop.f32.mrb[0].mxu0
    %v3236 = vadd.f32 %v3197, %v3235
    %v3237 = vpop.f32.mrb[0].mxu0
    %v3238 = vpop.f32.mrb[0].mxu0
    %v3239 = vpop.f32.mrb[0].mxu0
    %3240 = vdwg.mxu0
    %vm3241 = vcmp.ge.f32.partialorder %v3236, 0.0
    %v3242 = vmul.f32 %v3236, 0.01
    %v3243 = vsel %vm3241, %v3236, %v3242
    %v3245 = vrot.slane %v3243, 1
    %3246 = vrot.lane.b32.xlu0 %v3245, 8
    %v3247 = vpop.permute.xlu0 %3246
    %v3249 = vrot.slane %v3243, 2
    %3250 = vrot.lane.b32.xlu0 %v3249, 16
    %v3251 = vpop.permute.xlu0 %3250
    %v3253 = vrot.slane %v3243, 3
    %3254 = vrot.lane.b32.xlu0 %v3253, 24
    %v3255 = vpop.permute.xlu0 %3254
    %v3257 = vsel %vm137, %v3243, %v3247
    %v3258 = vsel %vm185, %v3257, %v3251
    %v3259 = vsel %vm647, %v3258, %v3255
    %v3261 = vrot.slane %v3259, 3
    %vm3263 = vcmask 1040384
    %v3264 = vsel %vm3263, %v3259, %v3261
    %v3265 = vpack.c.bf16 %v3264, %v3264
    %v3266 = vpack.c.bf16 %v3172, %v3171
    %v3267 = vpack.c.bf16 %v3174, %v3173
    %v3268 = vlaneseq
    %v3269 = vshrl.u32 %v3268, 7
    %v3270 = vsub.s32 0, %v3269
    %v3271 = vrot.slane %v3188, %v3270
    %v3273 = vsel %vm77, %v3265, 0
    %3275 = vmatprep.subr.bf16.mxu0 0
    %3276 = vmatpush1.bf16.msra.mxu0 %v3266
    %3277 = vmatprep.subr.bf16.mxu0 0
    %3278 = vmatpush1.bf16.msra.mxu0 %v3267
    %3279 = vmatprep.subr.bf16.mxu0 0
    %3280 = vmatpush1.bf16.msra.mxu0 0
    %3281 = vmatprep.subr.bf16.mxu0 0
    %3282 = vmatpush1.bf16.msra.mxu0 0
    %3283 = vmatprep.subr.bf16.mxu0 0
    %3284 = vmatpush1.bf16.msra.mxu0 0
    %3285 = vmatprep.subr.bf16.mxu0 0
    %3286 = vmatpush1.bf16.msra.mxu0 0
    %3287 = vmatprep.subr.bf16.mxu0 0
    %3288 = vmatpush1.bf16.msra.mxu0 0
    %3289 = vmatprep.subr.bf16.mxu0 0
    %3290 = vmatpush1.bf16.msra.mxu0 0
    %3291 = vmatprep.subr.bf16.mxu0 0
    %3292 = vmatpush1.bf16.msra.mxu0 0
    %3293 = vmatprep.subr.bf16.mxu0 0
    %3294 = vmatpush1.bf16.msra.mxu0 0
    %3295 = vmatprep.subr.bf16.mxu0 0
    %3296 = vmatpush1.bf16.msra.mxu0 0
    %3297 = vmatprep.subr.bf16.mxu0 0
    %3298 = vmatpush1.bf16.msra.mxu0 0
    %3299 = vmatprep.subr.bf16.mxu0 0
    %3300 = vmatpush1.bf16.msra.mxu0 0
    %3301 = vmatprep.subr.bf16.mxu0 0
    %3302 = vmatpush1.bf16.msra.mxu0 0
    %3303 = vmatprep.subr.bf16.mxu0 0
    %3304 = vmatpush1.bf16.msra.mxu0 0
    %3305 = vmatprep.subr.bf16.mxu0 0
    %3306 = vmatpush1.bf16.msra.mxu0 0
    %3307 = vmatprep.mubr.bf16.mxu0 0
    %3308 = vmatmul.mubr.bf16.gmra.mrb[0].mxu0 %v3273
    %v3309 = vpop.f32.mrb[0].mxu0
    %v3310 = vadd.f32 %v3271, %v3309
    %v3311 = vpop.f32.mrb[0].mxu0
    %v3312 = vpop.f32.mrb[0].mxu0
    %v3313 = vpop.f32.mrb[0].mxu0
    %3314 = vdwg.mxu0
    %vm3315 = vcmp.ge.f32.partialorder %v3310, 0.0
    %v3316 = vmul.f32 %v3310, 0.01
    %v3317 = vsel %vm3315, %v3310, %v3316
    %v3318 = vpack.c.bf16 %v3317, %v3317
    %v3319 = vpack.c.bf16 %v3176, %v3175
    %v3320 = vpack.c.bf16 %v3178, %v3177
    %v3321 = vpack.c.bf16 %v3180, %v3179
    %v3322 = vpack.c.bf16 %v3182, %v3181
    %v3323 = vlaneseq
    %v3324 = vshrl.u32 %v3323, 7
    %v3325 = vsub.s32 0, %v3324
    %v3326 = vrot.slane %v3189, %v3325
    %v3328 = vsel %vm1377, %v3318, 0
    %3330 = vmatprep.subr.bf16.mxu0 0
    %3331 = vmatpush1.bf16.msra.mxu0 %v3319
    %3332 = vmatprep.subr.bf16.mxu0 0
    %3333 = vmatpush1.bf16.msra.mxu0 %v3320
    %3334 = vmatprep.subr.bf16.mxu0 0
    %3335 = vmatpush1.bf16.msra.mxu0 %v3321
    %3336 = vmatprep.subr.bf16.mxu0 0
    %3337 = vmatpush1.bf16.msra.mxu0 %v3322
    %3338 = vmatprep.subr.bf16.mxu0 0
    %3339 = vmatpush1.bf16.msra.mxu0 0
    %3340 = vmatprep.subr.bf16.mxu0 0
    %3341 = vmatpush1.bf16.msra.mxu0 0
    %3342 = vmatprep.subr.bf16.mxu0 0
    %3343 = vmatpush1.bf16.msra.mxu0 0
    %3344 = vmatprep.subr.bf16.mxu0 0
    %3345 = vmatpush1.bf16.msra.mxu0 0
    %3346 = vmatprep.subr.bf16.mxu0 0
    %3347 = vmatpush1.bf16.msra.mxu0 0
    %3348 = vmatprep.subr.bf16.mxu0 0
    %3349 = vmatpush1.bf16.msra.mxu0 0
    %3350 = vmatprep.subr.bf16.mxu0 0
    %3351 = vmatpush1.bf16.msra.mxu0 0
    %3352 = vmatprep.subr.bf16.mxu0 0
    %3353 = vmatpush1.bf16.msra.mxu0 0
    %3354 = vmatprep.subr.bf16.mxu0 0
    %3355 = vmatpush1.bf16.msra.mxu0 0
    %3356 = vmatprep.subr.bf16.mxu0 0
    %3357 = vmatpush1.bf16.msra.mxu0 0
    %3358 = vmatprep.subr.bf16.mxu0 0
    %3359 = vmatpush1.bf16.msra.mxu0 0
    %3360 = vmatprep.subr.bf16.mxu0 0
    %3361 = vmatpush1.bf16.msra.mxu0 0
    %3362 = vmatprep.mubr.bf16.mxu0 0
    %3363 = vmatmul.mubr.bf16.gmra.mrb[0].mxu0 %v3328
    %v3364 = vpop.f32.mrb[0].mxu0
    %v3365 = vadd.f32 %v3326, %v3364
    %v3366 = vpop.f32.mrb[0].mxu0
    %v3367 = vpop.f32.mrb[0].mxu0
    %v3368 = vpop.f32.mrb[0].mxu0
    %3369 = vdwg.mxu0
    %vm3370 = vcmp.ge.f32.partialorder %v3365, 0.0
    %v3371 = vmul.f32 %v3365, 0.01
    %v3372 = vsel %vm3370, %v3365, %v3371
    %v3373 = vpack.c.bf16 %v3372, %v3372
    %v3374 = vpack.c.bf16 %v3184, %v3183
    %v3375 = vpack.c.bf16 %v3186, %v3185
    %v3376 = vlaneseq
    %v3377 = vshrl.u32 %v3376, 7
    %v3378 = vsub.s32 0, %v3377
    %v3379 = vrot.slane %v3190, %v3378
    %v3381 = vsel %vm77, %v3373, 0
    %3383 = vmatprep.subr.bf16.mxu0 0
    %3384 = vmatpush1.bf16.msra.mxu0 %v3374
    %3385 = vmatprep.subr.bf16.mxu0 0
    %3386 = vmatpush1.bf16.msra.mxu0 %v3375
    %3387 = vmatprep.subr.bf16.mxu0 0
    %3388 = vmatpush1.bf16.msra.mxu0 0
    %3389 = vmatprep.subr.bf16.mxu0 0
    %3390 = vmatpush1.bf16.msra.mxu0 0
    %3391 = vmatprep.subr.bf16.mxu0 0
    %3392 = vmatpush1.bf16.msra.mxu0 0
    %3393 = vmatprep.subr.bf16.mxu0 0
    %3394 = vmatpush1.bf16.msra.mxu0 0
    %3395 = vmatprep.subr.bf16.mxu0 0
    %3396 = vmatpush1.bf16.msra.mxu0 0
    %3397 = vmatprep.subr.bf16.mxu0 0
    %3398 = vmatpush1.bf16.msra.mxu0 0
    %3399 = vmatprep.subr.bf16.mxu0 0
    %3400 = vmatpush1.bf16.msra.mxu0 0
    %3401 = vmatprep.subr.bf16.mxu0 0
    %3402 = vmatpush1.bf16.msra.mxu0 0
    %3403 = vmatprep.subr.bf16.mxu0 0
    %3404 = vmatpush1.bf16.msra.mxu0 0
    %3405 = vmatprep.subr.bf16.mxu0 0
    %3406 = vmatpush1.bf16.msra.mxu0 0
    %3407 = vmatprep.subr.bf16.mxu0 0
    %3408 = vmatpush1.bf16.msra.mxu0 0
    %3409 = vmatprep.subr.bf16.mxu0 0
    %3410 = vmatpush1.bf16.msra.mxu0 0
    %3411 = vmatprep.subr.bf16.mxu0 0
    %3412 = vmatpush1.bf16.msra.mxu0 0
    %3413 = vmatprep.subr.bf16.mxu0 0
    %3414 = vmatpush1.bf16.msra.mxu0 0
    %3415 = vmatprep.mubr.bf16.mxu0 0
    %3416 = vmatmul.mubr.bf16.gmra.mrb[0].mxu0 %v3381
    %v3417 = vpop.f32.mrb[0].mxu0
    %v3418 = vadd.f32 %v3379, %v3417
    %v3419 = vpop.f32.mrb[0].mxu0
    %v3420 = vpop.f32.mrb[0].mxu0
    %v3421 = vpop.f32.mrb[0].mxu0
    %3422 = vdwg.mxu0
    %vm3423 = vcmask 9216
    %3424 = vst.msk [vmem:[%s2 + $0x30] sm:$0x3] %vm3423, %v3418
    // Predicated region
    $region14: #{thc_forward.1} parent=1 // pred_check
      _
    $region15: #{thc_forward.1} parent=1 // pred_check_branch
      %3426 = sbr.rel (0) target = $region17
    $region16: #{thc_forward.1} parent=1 // pred_region
      _
    $region17: #{thc_forward.1} parent=1 // pred_fallthru
      _
    // Predicated region
    $region18: #{thc_forward.1} parent=1 // pred_check
      _
    $region19: #{thc_forward.1} parent=1 // pred_check_branch
      %3428 = sbr.rel (0) target = $region21
    $region20: #{thc_forward.1} parent=1 // pred_region
      _
    $region21: #{thc_forward.1} parent=1 // pred_fallthru
      _
    %3429 = vsyncpa [#allocation3], 1

</llo_original>
